<compile_context>
chip_gen: v5e
topology: v5e:2x2
jax: 0.10.0
libtpu: 0.0.40
codegen_flags: <defaults>
</compile_context>

<pallas_src>
from functools import partial

import jax
import jax.numpy as jnp
import numpy as np
from jax.experimental import pallas as pl
from jax.experimental.pallas import tpu as pltpu

FEATURE_NUM = 256


# ------------------------------ Pallas kernels -------------------------------
def actor_kernel_multi(xs_ref, ws_ref, bs_ref, w1_ref, w2_ref, b2_ref,
                       out_ref, acc_ref):
    """grid=(nsteps,) reduction over blocks of the merged (B, K*F) slab."""
    k = pl.program_id(0)

    @pl.when(k == 0)
    def _init():
        acc_ref[...] = jnp.zeros_like(acc_ref)

    # relu(x_scalar * w + b), lane-dense over the whole G*F block, then one
    # long MXU contraction (B, G*F) @ (G*F, F) with f32 accumulation.
    slab = jnp.maximum(xs_ref[...] * ws_ref[...] + bs_ref[...], 0.0)
    acc_ref[...] += jnp.dot(slab.astype(w1_ref.dtype), w1_ref[...],
                            preferred_element_type=jnp.float32)

    @pl.when(k == pl.num_programs(0) - 1)
    def _finalize():
        # b1 is folded into b2 (no nonlinearity between the two Linears);
        # the small head matmul stays in f32.
        out_ref[...] = (jnp.dot(acc_ref[...], w2_ref[...],
                                preferred_element_type=jnp.float32)
                        + b2_ref[...]).astype(out_ref.dtype)


def actor_kernel_single(xs_ref, ws_ref, bs_ref, w1_ref, w2_ref, b2_ref,
                        out_ref):
    """grid=(1,): no accumulator scratch, no pl.when gating."""
    slab = jnp.maximum(xs_ref[...] * ws_ref[...] + bs_ref[...], 0.0)
    hidden = jnp.dot(slab.astype(w1_ref.dtype), w1_ref[...],
                     preferred_element_type=jnp.float32)
    out_ref[...] = (jnp.dot(hidden, w2_ref[...],
                            preferred_element_type=jnp.float32)
                    + b2_ref[...]).astype(out_ref.dtype)


def actor_kernel_partial(xs_ref, ws_ref, bs_ref, w1_ref, part_ref):
    """v7x 2-TensorCore split: each core emits a partial (B, F) hidden."""
    slab = jnp.maximum(xs_ref[...] * ws_ref[...] + bs_ref[...], 0.0)
    part_ref[0] = jnp.dot(slab.astype(w1_ref.dtype), w1_ref[...],
                          preferred_element_type=jnp.float32)


def _cost(B, KF, F, A_pad, include_head=True):
    flops = 2 * B * KF * F + 3 * B * KF
    bytes_accessed = KF * F * 2 + B * KF * 4 + 2 * KF * 4
    if include_head:
        flops += 2 * B * F * A_pad
        bytes_accessed += F * A_pad * 4 + B * A_pad * 4
    else:
        bytes_accessed += 2 * B * F * 4
    return pl.CostEstimate(flops=int(flops), transcendentals=0,
                           bytes_accessed=int(bytes_accessed))


# --------------------- one-time parameter preprocessing ----------------------
def prepare_actor_params(params, a1_dim, a2_dim, S):
    """Cache everything that depends only on the parameters (NOT on x)."""
    F = FEATURE_NUM
    A = a1_dim * a2_dim
    A_pad = 128 * max(1, (A + 127) // 128)

    # chunk -> (channel, position) of the driving scalar, matching
    # torch.cat([s1, s2, conv3.view, conv4.view, conv5.view, s6, s7], dim=1)
    ch = [0, 1] + [2] * S + [3] * S + [4] * a1_dim + [5, 6]
    pos = [S - 1, S - 1] + list(range(S)) + list(range(S)) \
        + list(range(a1_dim)) + [S - 1, S - 1]
    K = len(ch)

    ws = jnp.stack(
        [params["fc1_w"], params["fc2_w"]]
        + [params["conv3_w"]] * S + [params["conv4_w"]] * S
        + [params["conv5_w"]] * a1_dim
        + [params["fc6_w"], params["fc7_w"]]).reshape(1, K * F)
    bs = jnp.stack(
        [params["fc1_b"], params["fc2_b"]]
        + [params["conv3_b"]] * S + [params["conv4_b"]] * S
        + [params["conv5_b"]] * a1_dim
        + [params["fc6_b"], params["fc7_b"]]).reshape(1, K * F)

    # Permute the columns of Linear(6656, F) so row i*F + j of the flattened
    # (K*F, F) weight multiplies feature j of chunk i's relu output.
    W1t = params["W1"].T                               # (6656, F)
    slices = [W1t[0:F], W1t[F:2 * F]]
    base = 2 * F
    for l in range(S):                                 # conv3: col index c*S + l
        slices.append(W1t[base + l: base + F * S: S])
    base += F * S
    for l in range(S):                                 # conv4
        slices.append(W1t[base + l: base + F * S: S])
    base += F * S
    for l in range(a1_dim):                            # conv5: col c*a1_dim + l
        slices.append(W1t[base + l: base + F * a1_dim: a1_dim])
    base += F * a1_dim
    slices.append(W1t[base: base + F])                 # fc6
    slices.append(W1t[base + F: base + 2 * F])         # fc7
    W1flat = jnp.concatenate(slices, axis=0).astype(jnp.bfloat16)  # (K*F, F)

    # Output head stays f32; fold b1 into the output bias (valid because
    # fc_logits = Sequential(Linear, Linear) with no ReLU in between); zero-pad
    # A -> A_pad so the epilogue store is a full-lane unmasked vst.  Padded
    # columns of W2p / b2_fold are exactly zero (invariant: wrapper slices them off).
    W2p = jnp.zeros((F, A_pad), jnp.float32).at[:, :A].set(params["W2"].T)
    b2p = jnp.zeros((1, A_pad), jnp.float32).at[0, :A].set(params["b2"])
    b2_fold = params["b1"].reshape(1, F) @ W2p + b2p   # (1, A_pad)

    prepped = {
        "ch_idx": jnp.asarray(ch, jnp.int32),
        "pos_idx": jnp.asarray(pos, jnp.int32),
        "ws": ws, "bs": bs,
        "W1": W1flat, "W2": W2p, "b2_fold": b2_fold,
    }
    return {k: v.block_until_ready() for k, v in prepped.items()}


# ------------------------------- per-call path --------------------------------
@partial(jax.jit, static_argnames=("a1_dim", "a2_dim", "nsteps", "core_split"))
def actor_forward(x, prepped, a1_dim, a2_dim, nsteps=1, core_split=False):
    """x: (B, 7, S) float32 -> logits (B, a1_dim*a2_dim) float32."""
    B = x.shape[0]
    F = FEATURE_NUM
    A = a1_dim * a2_dim
    KF = prepped["W1"].shape[0]            # K * F rows of the merged Linear
    A_pad = prepped["W2"].shape[1]
    K = KF // F

    # Gather the K driving scalars and broadcast each across its F lanes: the
    # per-branch relu(x*w+b) becomes one lane-dense elementwise op in-kernel.
    xs = x[:, prepped["ch_idx"], prepped["pos_idx"]]                  # (B, K)
    xs_flat = jnp.broadcast_to(xs[:, :, None], (B, K, F)).reshape(B, KF)

    if core_split:
        # v7x only: shard the W1 stream across the two TensorCores; each core
        # produces a partial (B, F) hidden; combine + tiny f32 head in XLA.
        GF = KF // 2
        parts = pl.pallas_call(
            actor_kernel_partial,
            out_shape=jax.ShapeDtypeStruct((2, B, F), jnp.float32),
            grid=(2,),
            in_specs=[
                pl.BlockSpec((B, GF), lambda k: (0, k)),     # xs slab half
                pl.BlockSpec((1, GF), lambda k: (0, k)),     # small weights
                pl.BlockSpec((1, GF), lambda k: (0, k)),     # small biases
                pl.BlockSpec((GF, F), lambda k: (k, 0)),     # W1 half (bf16)
            ],
            out_specs=pl.BlockSpec((1, B, F), lambda k: (k, 0, 0)),
            compiler_params=pltpu.CompilerParams(
                dimension_semantics=("parallel",)),
            cost_estimate=_cost(B, KF, F, A_pad, include_head=False),
        )(xs_flat, prepped["ws"], prepped["bs"], prepped["W1"])
        hidden = parts[0] + parts[1]
        out = hidden @ prepped["W2"] + prepped["b2_fold"]
        return out[:, :A]

    assert K % nsteps == 0, f"nsteps={nsteps} must divide K={K}"
    GF = KF // nsteps
    kernel = actor_kernel_single if nsteps == 1 else actor_kernel_multi
    scratch = [] if nsteps == 1 else [pltpu.VMEM((B, F), jnp.float32)]

    out = pl.pallas_call(
        kernel,
        out_shape=jax.ShapeDtypeStruct((B, A_pad), jnp.float32),
        grid=(nsteps,),
        in_specs=[
            pl.BlockSpec((B, GF), lambda k: (0, k)),         # xs slab block
            pl.BlockSpec((1, GF), lambda k: (0, k)),         # small weights
            pl.BlockSpec((1, GF), lambda k: (0, k)),         # small biases
            pl.BlockSpec((GF, F), lambda k: (k, 0)),         # W1 block (bf16)
            pl.BlockSpec((F, A_pad), lambda k: (0, 0)),      # W2 (resident f32)
            pl.BlockSpec((1, A_pad), lambda k: (0, 0)),      # folded bias
        ],
        out_specs=pl.BlockSpec((B, A_pad), lambda k: (0, 0)),
        scratch_shapes=scratch,
        compiler_params=pltpu.CompilerParams(
            dimension_semantics=("arbitrary",)),
        cost_estimate=_cost(B, KF, F, A_pad, include_head=True),
    )(xs_flat, prepped["ws"], prepped["bs"], prepped["W1"],
      prepped["W2"], prepped["b2_fold"])
    return out[:, :A]


def default_plan():
    """Pick grid depth / core split per TPU generation (perf only)."""
    kind = ""
    try:
        kind = jax.devices()[0].device_kind.lower()
    except Exception:
        pass
    if "v7" in kind:
        # 2 TensorCores per chip: split the W1 stream across them.
        return {"nsteps": 2, "core_split": True}
    if "v5e" in kind or "v5 lite" in kind or "v5lite" in kind:
        # Slower HBM: 2 pipelined steps so MXU work hides under the W1 DMA.
        return {"nsteps": 2, "core_split": False}
    # v6e / default: single step, no per-step overhead, no accumulator scratch.
    return {"nsteps": 1, "core_split": False}


# --------------------------- reference (plain JAX) ---------------------------
def actor_ref(x, params, a1_dim, a2_dim):
    B = x.shape[0]
    relu = lambda v: jnp.maximum(v, 0.0)

    def fc(v, w, b):          # v: (B, 1)
        return relu(v * w[None, :] + b[None, :])

    def conv(v, w, b):        # v: (B, L), kernel-size-1 Conv1d then flatten
        out = relu(v[:, None, :] * w[None, :, None] + b[None, :, None])
        return out.reshape(B, -1)

    s1 = fc(x[:, 0, -1:], params["fc1_w"], params["fc1_b"])
    s2 = fc(x[:, 1, -1:], params["fc2_w"], params["fc2_b"])
    s3 = conv(x[:, 2, :], params["conv3_w"], params["conv3_b"])
    s4 = conv(x[:, 3, :], params["conv4_w"], params["conv4_b"])
    s5 = conv(x[:, 4, :a1_dim], params["conv5_w"], params["conv5_b"])
    s6 = fc(x[:, 5, -1:], params["fc6_w"], params["fc6_b"])
    s7 = fc(x[:, 6, -1:], params["fc7_w"], params["fc7_b"])
    merge = jnp.concatenate([s1, s2, s3, s4, s5, s6, s7], axis=1)  # (B, 6656)
    hidden = merge @ params["W1"].T + params["b1"][None, :]
    logits = hidden @ params["W2"].T + params["b2"][None, :]
    return logits


# ------------------------------ parameter init -------------------------------
def init_params(key, a1_dim, a2_dim, S):
    F = FEATURE_NUM
    in_dim = 4 * F + 2 * F * S + F * a1_dim   # = 6656 for S=8, a1_dim=6
    A = a1_dim * a2_dim
    ks = iter(jax.random.split(key, 32))

    def unif(shape, fan_in):
        bound = 1.0 / float(np.sqrt(fan_in))
        return jax.random.uniform(next(ks), shape, jnp.float32, -bound, bound)

    p = {}
    for name in ["fc1", "fc2", "conv3", "conv4", "conv5", "fc6", "fc7"]:
        p[f"{name}_w"] = unif((F,), 1)   # Linear(1,F) / Conv1d(1,F,1) weight
        p[f"{name}_b"] = unif((F,), 1)
    p["W1"] = unif((F, in_dim), in_dim)  # fc_logits[0]: Linear(6656, 256)
    p["b1"] = unif((F,), in_dim)
    p["W2"] = unif((A, F), F)            # fc_logits[1]: Linear(256, a1*a2)
    p["b2"] = unif((A,), F)
    return p


if __name__ == "__main__":
    B, C, S = 2, 7, 8            # state = (batch, 7, 8) as in get_action
    a1_dim, a2_dim = 6, 4        # 5120 + 256*a1_dim = 6656  =>  a1_dim = 6

    key = jax.random.PRNGKey(0)
    kx, kp = jax.random.split(key)
    x = jax.random.normal(kx, (B, C, S), dtype=jnp.float32)
    params = init_params(kp, a1_dim, a2_dim, S)

    # One-time parameter preprocessing (cached across calls).
    prepped = prepare_actor_params(params, a1_dim, a2_dim, S)

    plan = default_plan()
    logits = actor_forward(x, prepped, a1_dim, a2_dim, **plan)
    logits = jax.block_until_ready(logits)

    ref = actor_ref(x, params, a1_dim, a2_dim)
    assert logits.shape == (B, a1_dim * a2_dim)
    np.testing.assert_allclose(np.asarray(logits), np.asarray(ref),
                               rtol=5e-3, atol=5e-3)
    print("KERNEL_OK")
</pallas_src>

<mosaic_0001>
module attributes {stable_mosaic.version = 11 : i64} {
  func.func @actor_kernel_single(%arg0: i32, %arg1: memref<2x6656xf32, #tpu.memory_space<vmem>>, %arg2: memref<1x6656xf32, #tpu.memory_space<vmem>>, %arg3: memref<1x6656xf32, #tpu.memory_space<vmem>>, %arg4: memref<6656x256xbf16, #tpu.memory_space<vmem>>, %arg5: memref<256x128xf32, #tpu.memory_space<vmem>>, %arg6: memref<1x128xf32, #tpu.memory_space<vmem>>, %arg7: memref<2x128xf32, #tpu.memory_space<vmem>>) attributes {dimension_semantics = [#tpu.dimension_semantics<arbitrary>], iteration_bounds = array<i64: 1>, scalar_prefetch = 0 : i64, scratch_operands = 0 : i64, tpu.core_type = #tpu.core_type<tc>, window_params = [{transform_indices = @transform_0, window_bounds = array<i64: 2, 6656>}, {transform_indices = @transform_1, window_bounds = array<i64: 1, 6656>}, {transform_indices = @transform_2, window_bounds = array<i64: 1, 6656>}, {transform_indices = @transform_3, window_bounds = array<i64: 6656, 256>}, {pipeline_mode = #tpu.pipeline_mode<synchronous>, transform_indices = @transform_4, window_bounds = array<i64: 256, 128>}, {pipeline_mode = #tpu.pipeline_mode<synchronous>, transform_indices = @transform_5, window_bounds = array<i64: 1, 128>}, {pipeline_mode = #tpu.pipeline_mode<synchronous>, transform_indices = @transform_6, window_bounds = array<i64: 2, 128>}]} {
    %c0 = arith.constant 0 : index
    %c0_0 = arith.constant 0 : index
    %0 = vector.load %arg1[%c0, %c0_0] : memref<2x6656xf32, #tpu.memory_space<vmem>>, vector<2x6656xf32>
    %c0_1 = arith.constant 0 : index
    %c0_2 = arith.constant 0 : index
    %1 = vector.load %arg2[%c0_1, %c0_2] : memref<1x6656xf32, #tpu.memory_space<vmem>>, vector<1x6656xf32>
    %2 = vector.broadcast %1 : vector<1x6656xf32> to vector<2x6656xf32>
    %3 = arith.mulf %0, %2 : vector<2x6656xf32>
    %c0_3 = arith.constant 0 : index
    %c0_4 = arith.constant 0 : index
    %4 = vector.load %arg3[%c0_3, %c0_4] : memref<1x6656xf32, #tpu.memory_space<vmem>>, vector<1x6656xf32>
    %5 = vector.broadcast %4 : vector<1x6656xf32> to vector<2x6656xf32>
    %6 = arith.addf %3, %5 : vector<2x6656xf32>
    %cst = arith.constant 0.000000e+00 : f32
    %7 = vector.broadcast %cst : f32 to vector<2x6656xf32>
    %8 = arith.maximumf %6, %7 : vector<2x6656xf32>
    %9 = arith.truncf %8 : vector<2x6656xf32> to vector<2x6656xbf16>
    %c0_5 = arith.constant 0 : index
    %c0_6 = arith.constant 0 : index
    %10 = vector.load %arg4[%c0_5, %c0_6] : memref<6656x256xbf16, #tpu.memory_space<vmem>>, vector<6656x256xbf16>
    %cst_7 = arith.constant dense<0.000000e+00> : vector<2x256xf32>
    %11 = tpu.matmul %9, %10, %cst_7 {dimension_numbers = #tpu.dot_dimension_numbers<[1], [0], [0], [1], [0, 0, 1, 1], [], []>} : vector<2x6656xbf16>, vector<6656x256xbf16>, vector<2x256xf32> -> vector<2x256xf32>
    %c0_8 = arith.constant 0 : index
    %c0_9 = arith.constant 0 : index
    %12 = vector.load %arg5[%c0_8, %c0_9] : memref<256x128xf32, #tpu.memory_space<vmem>>, vector<256x128xf32>
    %cst_10 = arith.constant dense<0.000000e+00> : vector<2x128xf32>
    %13 = tpu.matmul %11, %12, %cst_10 {dimension_numbers = #tpu.dot_dimension_numbers<[1], [0], [0], [1], [0, 0, 1, 1], [], []>} : vector<2x256xf32>, vector<256x128xf32>, vector<2x128xf32> -> vector<2x128xf32>
    %c0_11 = arith.constant 0 : index
    %c0_12 = arith.constant 0 : index
    %14 = vector.load %arg6[%c0_11, %c0_12] : memref<1x128xf32, #tpu.memory_space<vmem>>, vector<1x128xf32>
    %15 = vector.broadcast %14 : vector<1x128xf32> to vector<2x128xf32>
    %16 = arith.addf %13, %15 : vector<2x128xf32>
    %c0_13 = arith.constant 0 : index
    %c0_14 = arith.constant 0 : index
    %17 = vector.load %arg7[%c0_13, %c0_14] : memref<2x128xf32, #tpu.memory_space<vmem>>, vector<2x128xf32>
    tpu.vector_store %arg7[%c0_13, %c0_14], %16 {strides = array<i32>} : memref<2x128xf32, #tpu.memory_space<vmem>>, vector<2x128xf32>,
    return
  }
  func.func @transform_0(%arg0: i32) -> (i32, i32) {
    %c0_i32 = arith.constant 0 : i32
    %c0_i32_0 = arith.constant 0 : i32
    return %c0_i32, %arg0 : i32, i32
  }
  func.func @transform_1(%arg0: i32) -> (i32, i32) {
    %c0_i32 = arith.constant 0 : i32
    %c0_i32_0 = arith.constant 0 : i32
    return %c0_i32, %arg0 : i32, i32
  }
  func.func @transform_2(%arg0: i32) -> (i32, i32) {
    %c0_i32 = arith.constant 0 : i32
    %c0_i32_0 = arith.constant 0 : i32
    return %c0_i32, %arg0 : i32, i32
  }
  func.func @transform_3(%arg0: i32) -> (i32, i32) {
    %c0_i32 = arith.constant 0 : i32
    %c0_i32_0 = arith.constant 0 : i32
    return %arg0, %c0_i32 : i32, i32
  }
  func.func @transform_4(%arg0: i32) -> (i32, i32) {
    %c0_i32 = arith.constant 0 : i32
    %c0_i32_0 = arith.constant 0 : i32
    %c0_i32_1 = arith.constant 0 : i32
    return %c0_i32, %c0_i32_0 : i32, i32
  }
  func.func @transform_5(%arg0: i32) -> (i32, i32) {
    %c0_i32 = arith.constant 0 : i32
    %c0_i32_0 = arith.constant 0 : i32
    %c0_i32_1 = arith.constant 0 : i32
    return %c0_i32, %c0_i32_0 : i32, i32
  }
  func.func @transform_6(%arg0: i32) -> (i32, i32) {
    %c0_i32 = arith.constant 0 : i32
    %c0_i32_0 = arith.constant 0 : i32
    %c0_i32_1 = arith.constant 0 : i32
    return %c0_i32, %c0_i32_0 : i32, i32
  }
}

</mosaic_0001>

<llo_original>
// kernel: actor_forward.1
$region0: #{actor_forward.1}
  #allocation0 [shape = 'u32[]', space=smem, size = 0x4, offset = 0x4, fixed_abs, tag = 'smem constant byte address 0x4 - core index']
  #allocation1 [shape = 'u32[72,128]{1,0:T(1,128)}', space=vmem, size = 0x9000, scoped, tag = 'internal scratch']
  %s0 = inlined_call_operand.vmem [shape: f32[2,6656], index: 0, kind: input, shape index: {}]
  %s1 = inlined_call_operand.hbm [shape: f32[1,6656], index: 1, kind: input, shape index: {}]
  %s2 = inlined_call_operand.hbm [shape: f32[1,6656], index: 2, kind: input, shape index: {}]
  %s3 = inlined_call_operand.hbm [shape: bf16[6656,256], index: 3, kind: input, shape index: {}]
  %s4 = inlined_call_operand.hbm [shape: f32[256,128], index: 4, kind: input, shape index: {}]
  %s5 = inlined_call_operand.hbm [shape: f32[1,128], index: 5, kind: input, shape index: {}]
  %s6 = inlined_call_operand.hbm [shape: f32[2,128], index: 6, kind: output, shape index: {}]
  %s7 = sld [smem:[#allocation0]]
  $region54: #{actor_forward.1} parent=0
    _
  %s9 = ssub.s32 1, %s7
  %s10 = scalar_select 0, %s9, %s7
  $region1: #{actor_forward.1} parent=0
    #allocation2 [shape = 'u8[26624]{0}', space=vmem, size = 0x6800, scoped, tag = 'input window, operand 1, single buffered']
    #allocation3 [shape = 's32[1]{0}', space=sflag, size = 0x4, scoped, tag = 'scoped memory for actor_forward.1']
    #allocation4 [shape = 's32[1]{0}', space=sflag, size = 0x4, scoped, tag = 'scoped memory for actor_forward.1']
    #allocation5 [shape = 'u8[26624]{0}', space=vmem, size = 0x6800, scoped, tag = 'input window, operand 2, single buffered']
    #allocation6 [shape = 's32[1]{0}', space=sflag, size = 0x4, scoped, tag = 'scoped memory for actor_forward.1']
    #allocation7 [shape = 'u8[3407872]{0}', space=vmem, size = 0x340000, scoped, tag = 'input window, operand 3, single buffered']
    #allocation8 [shape = 'u8[131072]{0}', space=vmem, size = 0x20000, scoped, tag = 'input window, operand 4, single buffered']
    #allocation9 [shape = 's32[1]{0}', space=sflag, size = 0x4, scoped, tag = 'scoped memory for actor_forward.1']
    #allocation10 [shape = 'u8[512]{0}', space=vmem, size = 0x400, scoped, tag = 'input window, operand 5, single buffered']
    #allocation11 [shape = 'u8[1024]{0}', space=vmem, size = 0x400, scoped, tag = 'output window, operand 0, single buffered']
    %11 = vsyncpa [#allocation3], 0
    %12 = vsyncpa [#allocation6], 0
    %13 = vsyncpa [#allocation9], 0
    %14 = vsyncpa [#allocation4], 0
    // Predicated region
    $region2: #{actor_forward.1} parent=1 // pred_check
      _
    $region3: #{actor_forward.1} parent=1 // pred_check_branch
      %16 = sbr.rel (0) target = $region5
    $region4: #{actor_forward.1} parent=1 // pred_region
      _
    $region5: #{actor_forward.1} parent=1 // pred_fallthru
      _
    // Predicated region
    $region6: #{actor_forward.1} parent=1 // pred_check
      _
    $region7: #{actor_forward.1} parent=1 // pred_check_branch
      %18 = sbr.rel (0) target = $region9
    $region8: #{actor_forward.1} parent=1 // pred_region
      %20 = vsyncadd [#allocation3], 0
      %s22 = sshll.u32 %s1, 4
      %s23 = int_to_ptr.hbm [resolvable:$true] %s22
      %s24 = sshll.u32 [#allocation2], 4
      %s25 = int_to_ptr.vmem [resolvable:$true] %s24
      %27 = dma.hbm_to_vmem [thread:$0]  %s23, 832, %s25, [#allocation3]
    $region9: #{actor_forward.1} parent=1 // pred_fallthru
      _
    // Predicated region
    $region10: #{actor_forward.1} parent=1 // pred_check
      _
    $region11: #{actor_forward.1} parent=1 // pred_check_branch
      %29 = sbr.rel (0) target = $region13
    $region12: #{actor_forward.1} parent=1 // pred_region
      %31 = vsyncadd [#allocation6], 0
      %s33 = sshll.u32 %s2, 4
      %s34 = int_to_ptr.hbm [resolvable:$true] %s33
      %s35 = sshll.u32 [#allocation5], 4
      %s36 = int_to_ptr.vmem [resolvable:$true] %s35
      %38 = dma.hbm_to_vmem [thread:$0]  %s34, 832, %s36, [#allocation6]
    $region13: #{actor_forward.1} parent=1 // pred_fallthru
      _
    // Predicated region
    $region14: #{actor_forward.1} parent=1 // pred_check
      _
    $region15: #{actor_forward.1} parent=1 // pred_check_branch
      %40 = sbr.rel (0) target = $region17
    $region16: #{actor_forward.1} parent=1 // pred_region
      %42 = vsyncadd [#allocation6], 0
      %s43 = sshll.u32 %s3, 4
      %s44 = int_to_ptr.hbm [resolvable:$true] %s43
      %s45 = sshll.u32 [#allocation7], 4
      %s46 = int_to_ptr.vmem [resolvable:$true] %s45
      %51 = dma.hbm_to_vmem [thread:$0]  %s44, 106496, %s46, [#allocation6], 128, 128, 8
    $region17: #{actor_forward.1} parent=1 // pred_fallthru
      _
    // Predicated region
    $region18: #{actor_forward.1} parent=1 // pred_check
      _
    $region19: #{actor_forward.1} parent=1 // pred_check_branch
      %53 = sbr.rel (0) target = $region21
    $region20: #{actor_forward.1} parent=1 // pred_region
      %55 = vsyncadd [#allocation9], 0
      %s56 = sshll.u32 %s4, 4
      %s57 = int_to_ptr.hbm [resolvable:$true] %s56
      %s58 = sshll.u32 [#allocation8], 4
      %s59 = int_to_ptr.vmem [resolvable:$true] %s58
      %64 = dma.hbm_to_vmem [thread:$0]  %s57, 4096, %s59, [#allocation9], 128, 128, 8
    $region21: #{actor_forward.1} parent=1 // pred_fallthru
      _
    // Predicated region
    $region22: #{actor_forward.1} parent=1 // pred_check
      _
    $region23: #{actor_forward.1} parent=1 // pred_check_branch
      %66 = sbr.rel (0) target = $region25
    $region24: #{actor_forward.1} parent=1 // pred_region
      %68 = vsyncadd [#allocation9], 0
      %s70 = sshll.u32 %s5, 4
      %s71 = int_to_ptr.hbm [resolvable:$true] %s70
      %s72 = sshll.u32 [#allocation10], 4
      %s73 = int_to_ptr.vmem [resolvable:$true] %s72
      %75 = dma.hbm_to_vmem [thread:$0]  %s71, 16, %s73, [#allocation9]
    $region25: #{actor_forward.1} parent=1 // pred_fallthru
      _
    // Predicated region
    $region26: #{actor_forward.1} parent=1 // pred_check
      _
    $region27: #{actor_forward.1} parent=1 // pred_check_branch
      %77 = sbr.rel (0) target = $region29
    $region28: #{actor_forward.1} parent=1 // pred_region
      %79 = dma.done [#allocation3], 832
    $region29: #{actor_forward.1} parent=1 // pred_fallthru
      _
    // Predicated region
    $region30: #{actor_forward.1} parent=1 // pred_check
      _
    $region31: #{actor_forward.1} parent=1 // pred_check_branch
      %81 = sbr.rel (0) target = $region33
    $region32: #{actor_forward.1} parent=1 // pred_region
      %83 = dma.done [#allocation6], 832
    $region33: #{actor_forward.1} parent=1 // pred_fallthru
      _
    // Predicated region
    $region34: #{actor_forward.1} parent=1 // pred_check
      _
    $region35: #{actor_forward.1} parent=1 // pred_check_branch
      %85 = sbr.rel (0) target = $region37
    $region36: #{actor_forward.1} parent=1 // pred_region
      %87 = dma.done [#allocation6], 106496
    $region37: #{actor_forward.1} parent=1 // pred_fallthru
      _
    // Predicated region
    $region38: #{actor_forward.1} parent=1 // pred_check
      _
    $region39: #{actor_forward.1} parent=1 // pred_check_branch
      %89 = sbr.rel (0) target = $region41
    $region40: #{actor_forward.1} parent=1 // pred_region
      %91 = dma.done [#allocation9], 4096
    $region41: #{actor_forward.1} parent=1 // pred_fallthru
      _
    // Predicated region
    $region42: #{actor_forward.1} parent=1 // pred_check
      _
    $region43: #{actor_forward.1} parent=1 // pred_check_branch
      %93 = sbr.rel (0) target = $region45
    $region44: #{actor_forward.1} parent=1 // pred_region
      %95 = dma.done [#allocation9], 16
    $region45: #{actor_forward.1} parent=1 // pred_fallthru
      _
    %v96 = vld [vmem:[%s0] sm:$0xff]
    %v97 = vld [vmem:[%s0 + $0x8] sm:$0xff]
    %v98 = vld [vmem:[%s0 + $0x10] sm:$0xff]
    %v99 = vld [vmem:[%s0 + $0x18] sm:$0xff]
    %v100 = vld [vmem:[%s0 + $0x20] sm:$0xff]
    %v101 = vld [vmem:[%s0 + $0x28] sm:$0xff]
    %v102 = vld [vmem:[%s0 + $0x30] sm:$0xff]
    %v103 = vld [vmem:[%s0 + $0x38] sm:$0xff]
    %v104 = vld [vmem:[%s0 + $0x40] sm:$0xff]
    %v105 = vld [vmem:[%s0 + $0x48] sm:$0xff]
    %v106 = vld [vmem:[%s0 + $0x50] sm:$0xff]
    %v107 = vld [vmem:[%s0 + $0x58] sm:$0xff]
    %v108 = vld [vmem:[%s0 + $0x60] sm:$0xff]
    %v109 = vld [vmem:[#allocation2] sm:$0xff]
    %v110 = vld [vmem:[#allocation2 + $0x8] sm:$0xff]
    %v111 = vld [vmem:[#allocation2 + $0x10] sm:$0xff]
    %v112 = vld [vmem:[#allocation2 + $0x18] sm:$0xff]
    %v113 = vld [vmem:[#allocation2 + $0x20] sm:$0xff]
    %v114 = vld [vmem:[#allocation2 + $0x28] sm:$0xff]
    %v115 = vld [vmem:[#allocation2 + $0x30] sm:$0xf]
    %v123 = vperm.slane %v109, 0
    %v124 = vperm.slane %v109, 1
    %v125 = vperm.slane %v109, 2
    %v126 = vperm.slane %v109, 3
    %v127 = vperm.slane %v109, 4
    %v128 = vperm.slane %v109, 5
    %v129 = vperm.slane %v109, 6
    %v130 = vperm.slane %v109, 7
    %v131 = vperm.slane %v110, 0
    %v132 = vperm.slane %v110, 1
    %v133 = vperm.slane %v110, 2
    %v134 = vperm.slane %v110, 3
    %v135 = vperm.slane %v110, 4
    %v136 = vperm.slane %v110, 5
    %v137 = vperm.slane %v110, 6
    %v138 = vperm.slane %v110, 7
    %v139 = vperm.slane %v111, 0
    %v140 = vperm.slane %v111, 1
    %v141 = vperm.slane %v111, 2
    %v142 = vperm.slane %v111, 3
    %v143 = vperm.slane %v111, 4
    %v144 = vperm.slane %v111, 5
    %v145 = vperm.slane %v111, 6
    %v146 = vperm.slane %v111, 7
    %v147 = vperm.slane %v112, 0
    %v148 = vperm.slane %v112, 1
    %v149 = vperm.slane %v112, 2
    %v150 = vperm.slane %v112, 3
    %v151 = vperm.slane %v112, 4
    %v152 = vperm.slane %v112, 5
    %v153 = vperm.slane %v112, 6
    %v154 = vperm.slane %v112, 7
    %v155 = vperm.slane %v113, 0
    %v156 = vperm.slane %v113, 1
    %v157 = vperm.slane %v113, 2
    %v158 = vperm.slane %v113, 3
    %v159 = vperm.slane %v113, 4
    %v160 = vperm.slane %v113, 5
    %v161 = vperm.slane %v113, 6
    %v162 = vperm.slane %v113, 7
    %v163 = vperm.slane %v114, 0
    %v164 = vperm.slane %v114, 1
    %v165 = vperm.slane %v114, 2
    %v166 = vperm.slane %v114, 3
    %v167 = vperm.slane %v114, 4
    %v168 = vperm.slane %v114, 5
    %v169 = vperm.slane %v114, 6
    %v170 = vperm.slane %v114, 7
    %v171 = vperm.slane %v115, 0
    %v172 = vperm.slane %v115, 1
    %v173 = vperm.slane %v115, 2
    %v174 = vperm.slane %v115, 3
    %v175 = vrot.slane %v124, 6
    %v176 = vrot.slane %v125, 4
    %v177 = vrot.slane %v126, 2
    %v178 = vrot.slane %v128, 6
    %v179 = vrot.slane %v129, 4
    %v180 = vrot.slane %v130, 2
    %v181 = vrot.slane %v132, 6
    %v182 = vrot.slane %v133, 4
    %v183 = vrot.slane %v134, 2
    %v184 = vrot.slane %v136, 6
    %v185 = vrot.slane %v137, 4
    %v186 = vrot.slane %v138, 2
    %v187 = vrot.slane %v140, 6
    %v188 = vrot.slane %v141, 4
    %v189 = vrot.slane %v142, 2
    %v190 = vrot.slane %v144, 6
    %v191 = vrot.slane %v145, 4
    %v192 = vrot.slane %v146, 2
    %v193 = vrot.slane %v148, 6
    %v194 = vrot.slane %v149, 4
    %v195 = vrot.slane %v150, 2
    %v196 = vrot.slane %v152, 6
    %v197 = vrot.slane %v153, 4
    %v198 = vrot.slane %v154, 2
    %v199 = vrot.slane %v156, 6
    %v200 = vrot.slane %v157, 4
    %v201 = vrot.slane %v158, 2
    %v202 = vrot.slane %v160, 6
    %v203 = vrot.slane %v161, 4
    %v204 = vrot.slane %v162, 2
    %v205 = vrot.slane %v164, 6
    %v206 = vrot.slane %v165, 4
    %v207 = vrot.slane %v166, 2
    %v208 = vrot.slane %v168, 6
    %v209 = vrot.slane %v169, 4
    %v210 = vrot.slane %v170, 2
    %v211 = vrot.slane %v172, 6
    %v212 = vrot.slane %v173, 4
    %v213 = vrot.slane %v174, 2
    %vm214 = vcmask 1041408
    %v215 = vsel %vm214, %v123, %v175
    %vm216 = vcmask 1045508
    %v217 = vsel %vm216, %v176, %v177
    %vm218 = vcmask 1043456
    %v219 = vsel %vm218, %v215, %v217
    %v220 = vsel %vm214, %v127, %v178
    %v221 = vsel %vm216, %v179, %v180
    %v222 = vsel %vm218, %v220, %v221
    %v223 = vsel %vm214, %v131, %v181
    %v224 = vsel %vm216, %v182, %v183
    %v225 = vsel %vm218, %v223, %v224
    %v226 = vsel %vm214, %v135, %v184
    %v227 = vsel %vm216, %v185, %v186
    %v228 = vsel %vm218, %v226, %v227
    %v229 = vsel %vm214, %v139, %v187
    %v230 = vsel %vm216, %v188, %v189
    %v231 = vsel %vm218, %v229, %v230
    %v232 = vsel %vm214, %v143, %v190
    %v233 = vsel %vm216, %v191, %v192
    %v234 = vsel %vm218, %v232, %v233
    %v235 = vsel %vm214, %v147, %v193
    %v236 = vsel %vm216, %v194, %v195
    %v237 = vsel %vm218, %v235, %v236
    %v238 = vsel %vm214, %v151, %v196
    %v239 = vsel %vm216, %v197, %v198
    %v240 = vsel %vm218, %v238, %v239
    %v241 = vsel %vm214, %v155, %v199
    %v242 = vsel %vm216, %v200, %v201
    %v243 = vsel %vm218, %v241, %v242
    %v244 = vsel %vm214, %v159, %v202
    %v245 = vsel %vm216, %v203, %v204
    %v246 = vsel %vm218, %v244, %v245
    %v247 = vsel %vm214, %v163, %v205
    %v248 = vsel %vm216, %v206, %v207
    %v249 = vsel %vm218, %v247, %v248
    %v250 = vsel %vm214, %v167, %v208
    %v251 = vsel %vm216, %v209, %v210
    %v252 = vsel %vm218, %v250, %v251
    %v253 = vsel %vm214, %v171, %v211
    %v254 = vsel %vm216, %v212, %v213
    %v255 = vsel %vm218, %v253, %v254
    %v269 = vmul.f32 %v96, %v219
    %v270 = vmul.f32 %v97, %v222
    %v271 = vmul.f32 %v98, %v225
    %v272 = vmul.f32 %v99, %v228
    %v273 = vmul.f32 %v100, %v231
    %v274 = vmul.f32 %v101, %v234
    %v275 = vmul.f32 %v102, %v237
    %v276 = vmul.f32 %v103, %v240
    %v277 = vmul.f32 %v104, %v243
    %v278 = vmul.f32 %v105, %v246
    %v279 = vmul.f32 %v106, %v249
    %v280 = vmul.f32 %v107, %v252
    %v281 = vmul.f32 %v108, %v255
    %v282 = vld [vmem:[#allocation5] sm:$0xff]
    %v283 = vld [vmem:[#allocation5 + $0x8] sm:$0xff]
    %v284 = vld [vmem:[#allocation5 + $0x10] sm:$0xff]
    %v285 = vld [vmem:[#allocation5 + $0x18] sm:$0xff]
    %v286 = vld [vmem:[#allocation5 + $0x20] sm:$0xff]
    %v287 = vld [vmem:[#allocation5 + $0x28] sm:$0xff]
    %v288 = vld [vmem:[#allocation5 + $0x30] sm:$0xf]
    %v296 = vperm.slane %v282, 0
    %v297 = vperm.slane %v282, 1
    %v298 = vperm.slane %v282, 2
    %v299 = vperm.slane %v282, 3
    %v300 = vperm.slane %v282, 4
    %v301 = vperm.slane %v282, 5
    %v302 = vperm.slane %v282, 6
    %v303 = vperm.slane %v282, 7
    %v304 = vperm.slane %v283, 0
    %v305 = vperm.slane %v283, 1
    %v306 = vperm.slane %v283, 2
    %v307 = vperm.slane %v283, 3
    %v308 = vperm.slane %v283, 4
    %v309 = vperm.slane %v283, 5
    %v310 = vperm.slane %v283, 6
    %v311 = vperm.slane %v283, 7
    %v312 = vperm.slane %v284, 0
    %v313 = vperm.slane %v284, 1
    %v314 = vperm.slane %v284, 2
    %v315 = vperm.slane %v284, 3
    %v316 = vperm.slane %v284, 4
    %v317 = vperm.slane %v284, 5
    %v318 = vperm.slane %v284, 6
    %v319 = vperm.slane %v284, 7
    %v320 = vperm.slane %v285, 0
    %v321 = vperm.slane %v285, 1
    %v322 = vperm.slane %v285, 2
    %v323 = vperm.slane %v285, 3
    %v324 = vperm.slane %v285, 4
    %v325 = vperm.slane %v285, 5
    %v326 = vperm.slane %v285, 6
    %v327 = vperm.slane %v285, 7
    %v328 = vperm.slane %v286, 0
    %v329 = vperm.slane %v286, 1
    %v330 = vperm.slane %v286, 2
    %v331 = vperm.slane %v286, 3
    %v332 = vperm.slane %v286, 4
    %v333 = vperm.slane %v286, 5
    %v334 = vperm.slane %v286, 6
    %v335 = vperm.slane %v286, 7
    %v336 = vperm.slane %v287, 0
    %v337 = vperm.slane %v287, 1
    %v338 = vperm.slane %v287, 2
    %v339 = vperm.slane %v287, 3
    %v340 = vperm.slane %v287, 4
    %v341 = vperm.slane %v287, 5
    %v342 = vperm.slane %v287, 6
    %v343 = vperm.slane %v287, 7
    %v344 = vperm.slane %v288, 0
    %v345 = vperm.slane %v288, 1
    %v346 = vperm.slane %v288, 2
    %v347 = vperm.slane %v288, 3
    %v348 = vrot.slane %v297, 6
    %v349 = vrot.slane %v298, 4
    %v350 = vrot.slane %v299, 2
    %v351 = vrot.slane %v301, 6
    %v352 = vrot.slane %v302, 4
    %v353 = vrot.slane %v303, 2
    %v354 = vrot.slane %v305, 6
    %v355 = vrot.slane %v306, 4
    %v356 = vrot.slane %v307, 2
    %v357 = vrot.slane %v309, 6
    %v358 = vrot.slane %v310, 4
    %v359 = vrot.slane %v311, 2
    %v360 = vrot.slane %v313, 6
    %v361 = vrot.slane %v314, 4
    %v362 = vrot.slane %v315, 2
    %v363 = vrot.slane %v317, 6
    %v364 = vrot.slane %v318, 4
    %v365 = vrot.slane %v319, 2
    %v366 = vrot.slane %v321, 6
    %v367 = vrot.slane %v322, 4
    %v368 = vrot.slane %v323, 2
    %v369 = vrot.slane %v325, 6
    %v370 = vrot.slane %v326, 4
    %v371 = vrot.slane %v327, 2
    %v372 = vrot.slane %v329, 6
    %v373 = vrot.slane %v330, 4
    %v374 = vrot.slane %v331, 2
    %v375 = vrot.slane %v333, 6
    %v376 = vrot.slane %v334, 4
    %v377 = vrot.slane %v335, 2
    %v378 = vrot.slane %v337, 6
    %v379 = vrot.slane %v338, 4
    %v380 = vrot.slane %v339, 2
    %v381 = vrot.slane %v341, 6
    %v382 = vrot.slane %v342, 4
    %v383 = vrot.slane %v343, 2
    %v384 = vrot.slane %v345, 6
    %v385 = vrot.slane %v346, 4
    %v386 = vrot.slane %v347, 2
    %v387 = vsel %vm214, %v296, %v348
    %v388 = vsel %vm216, %v349, %v350
    %v389 = vsel %vm218, %v387, %v388
    %v390 = vsel %vm214, %v300, %v351
    %v391 = vsel %vm216, %v352, %v353
    %v392 = vsel %vm218, %v390, %v391
    %v393 = vsel %vm214, %v304, %v354
    %v394 = vsel %vm216, %v355, %v356
    %v395 = vsel %vm218, %v393, %v394
    %v396 = vsel %vm214, %v308, %v357
    %v397 = vsel %vm216, %v358, %v359
    %v398 = vsel %vm218, %v396, %v397
    %v399 = vsel %vm214, %v312, %v360
    %v400 = vsel %vm216, %v361, %v362
    %v401 = vsel %vm218, %v399, %v400
    %v402 = vsel %vm214, %v316, %v363
    %v403 = vsel %vm216, %v364, %v365
    %v404 = vsel %vm218, %v402, %v403
    %v405 = vsel %vm214, %v320, %v366
    %v406 = vsel %vm216, %v367, %v368
    %v407 = vsel %vm218, %v405, %v406
    %v408 = vsel %vm214, %v324, %v369
    %v409 = vsel %vm216, %v370, %v371
    %v410 = vsel %vm218, %v408, %v409
    %v411 = vsel %vm214, %v328, %v372
    %v412 = vsel %vm216, %v373, %v374
    %v413 = vsel %vm218, %v411, %v412
    %v414 = vsel %vm214, %v332, %v375
    %v415 = vsel %vm216, %v376, %v377
    %v416 = vsel %vm218, %v414, %v415
    %v417 = vsel %vm214, %v336, %v378
    %v418 = vsel %vm216, %v379, %v380
    %v419 = vsel %vm218, %v417, %v418
    %v420 = vsel %vm214, %v340, %v381
    %v421 = vsel %vm216, %v382, %v383
    %v422 = vsel %vm218, %v420, %v421
    %v423 = vsel %vm214, %v344, %v384
    %v424 = vsel %vm216, %v385, %v386
    %v425 = vsel %vm218, %v423, %v424
    %v439 = vadd.f32 %v269, %v389
    %v440 = vadd.f32 %v270, %v392
    %v441 = vadd.f32 %v271, %v395
    %v442 = vadd.f32 %v272, %v398
    %v443 = vadd.f32 %v273, %v401
    %v444 = vadd.f32 %v274, %v404
    %v445 = vadd.f32 %v275, %v407
    %v446 = vadd.f32 %v276, %v410
    %v447 = vadd.f32 %v277, %v413
    %v448 = vadd.f32 %v278, %v416
    %v449 = vadd.f32 %v279, %v419
    %v450 = vadd.f32 %v280, %v422
    %v451 = vadd.f32 %v281, %v425
    %v452 = vmax.f32 %v439, 0.0
    %v453 = vmax.f32 %v440, 0.0
    %v454 = vmax.f32 %v441, 0.0
    %v455 = vmax.f32 %v442, 0.0
    %v456 = vmax.f32 %v443, 0.0
    %v457 = vmax.f32 %v444, 0.0
    %v458 = vmax.f32 %v445, 0.0
    %v459 = vmax.f32 %v446, 0.0
    %v460 = vmax.f32 %v447, 0.0
    %v461 = vmax.f32 %v448, 0.0
    %v462 = vmax.f32 %v449, 0.0
    %v463 = vmax.f32 %v450, 0.0
    %v464 = vmax.f32 %v451, 0.0
    %478 = vst [vmem:[#allocation1] ss:$4 sm:$0xff] %v452
    %s479 = scalar_lea.vmem [#allocation1], 32
    %480 = vst [vmem:[%s479] ss:$4 sm:$0xff] %v453
    %v481 = vld.sshfl [vmem:[#allocation1] sm:$0xff pattern:$0x73625140]
    %v482 = vld.sshfl [vmem:[#allocation1 + $0x8] sm:$0xff pattern:$0x73625140]
    %v483 = vld.sshfl [vmem:[#allocation1 + $0x10] sm:$0xff pattern:$0x73625140]
    %v484 = vld.sshfl [vmem:[#allocation1 + $0x18] sm:$0xff pattern:$0x73625140]
    %v485 = vld.sshfl [vmem:[#allocation1 + $0x20] sm:$0xff pattern:$0x73625140]
    %v486 = vld.sshfl [vmem:[#allocation1 + $0x28] sm:$0xff pattern:$0x73625140]
    %v487 = vld.sshfl [vmem:[#allocation1 + $0x30] sm:$0xff pattern:$0x73625140]
    %v488 = vld.sshfl [vmem:[#allocation1 + $0x38] sm:$0xff pattern:$0x73625140]
    %489 = vst [vmem:[#allocation1] ss:$4 sm:$0xff] %v454
    %490 = vst [vmem:[%s479] ss:$4 sm:$0xff] %v455
    %v491 = vld.sshfl [vmem:[#allocation1] sm:$0xff pattern:$0x73625140]
    %v492 = vld.sshfl [vmem:[#allocation1 + $0x8] sm:$0xff pattern:$0x73625140]
    %v493 = vld.sshfl [vmem:[#allocation1 + $0x10] sm:$0xff pattern:$0x73625140]
    %v494 = vld.sshfl [vmem:[#allocation1 + $0x18] sm:$0xff pattern:$0x73625140]
    %v495 = vld.sshfl [vmem:[#allocation1 + $0x20] sm:$0xff pattern:$0x73625140]
    %v496 = vld.sshfl [vmem:[#allocation1 + $0x28] sm:$0xff pattern:$0x73625140]
    %v497 = vld.sshfl [vmem:[#allocation1 + $0x30] sm:$0xff pattern:$0x73625140]
    %v498 = vld.sshfl [vmem:[#allocation1 + $0x38] sm:$0xff pattern:$0x73625140]
    %499 = vst [vmem:[#allocation1] ss:$4 sm:$0xff] %v456
    %500 = vst [vmem:[%s479] ss:$4 sm:$0xff] %v457
    %v501 = vld.sshfl [vmem:[#allocation1] sm:$0xff pattern:$0x73625140]
    %v502 = vld.sshfl [vmem:[#allocation1 + $0x8] sm:$0xff pattern:$0x73625140]
    %v503 = vld.sshfl [vmem:[#allocation1 + $0x10] sm:$0xff pattern:$0x73625140]
    %v504 = vld.sshfl [vmem:[#allocation1 + $0x18] sm:$0xff pattern:$0x73625140]
    %v505 = vld.sshfl [vmem:[#allocation1 + $0x20] sm:$0xff pattern:$0x73625140]
    %v506 = vld.sshfl [vmem:[#allocation1 + $0x28] sm:$0xff pattern:$0x73625140]
    %v507 = vld.sshfl [vmem:[#allocation1 + $0x30] sm:$0xff pattern:$0x73625140]
    %v508 = vld.sshfl [vmem:[#allocation1 + $0x38] sm:$0xff pattern:$0x73625140]
    %509 = vst [vmem:[#allocation1] ss:$4 sm:$0xff] %v458
    %510 = vst [vmem:[%s479] ss:$4 sm:$0xff] %v459
    %v511 = vld.sshfl [vmem:[#allocation1] sm:$0xff pattern:$0x73625140]
    %v512 = vld.sshfl [vmem:[#allocation1 + $0x8] sm:$0xff pattern:$0x73625140]
    %v513 = vld.sshfl [vmem:[#allocation1 + $0x10] sm:$0xff pattern:$0x73625140]
    %v514 = vld.sshfl [vmem:[#allocation1 + $0x18] sm:$0xff pattern:$0x73625140]
    %v515 = vld.sshfl [vmem:[#allocation1 + $0x20] sm:$0xff pattern:$0x73625140]
    %v516 = vld.sshfl [vmem:[#allocation1 + $0x28] sm:$0xff pattern:$0x73625140]
    %v517 = vld.sshfl [vmem:[#allocation1 + $0x30] sm:$0xff pattern:$0x73625140]
    %v518 = vld.sshfl [vmem:[#allocation1 + $0x38] sm:$0xff pattern:$0x73625140]
    %519 = vst [vmem:[#allocation1] ss:$4 sm:$0xff] %v460
    %520 = vst [vmem:[%s479] ss:$4 sm:$0xff] %v461
    %v521 = vld.sshfl [vmem:[#allocation1] sm:$0xff pattern:$0x73625140]
    %v522 = vld.sshfl [vmem:[#allocation1 + $0x8] sm:$0xff pattern:$0x73625140]
    %v523 = vld.sshfl [vmem:[#allocation1 + $0x10] sm:$0xff pattern:$0x73625140]
    %v524 = vld.sshfl [vmem:[#allocation1 + $0x18] sm:$0xff pattern:$0x73625140]
    %v525 = vld.sshfl [vmem:[#allocation1 + $0x20] sm:$0xff pattern:$0x73625140]
    %v526 = vld.sshfl [vmem:[#allocation1 + $0x28] sm:$0xff pattern:$0x73625140]
    %v527 = vld.sshfl [vmem:[#allocation1 + $0x30] sm:$0xff pattern:$0x73625140]
    %v528 = vld.sshfl [vmem:[#allocation1 + $0x38] sm:$0xff pattern:$0x73625140]
    %529 = vst [vmem:[#allocation1] ss:$4 sm:$0xff] %v462
    %530 = vst [vmem:[%s479] ss:$4 sm:$0xff] %v463
    %v531 = vld.sshfl [vmem:[#allocation1] sm:$0xff pattern:$0x73625140]
    %v532 = vld.sshfl [vmem:[#allocation1 + $0x8] sm:$0xff pattern:$0x73625140]
    %v533 = vld.sshfl [vmem:[#allocation1 + $0x10] sm:$0xff pattern:$0x73625140]
    %v534 = vld.sshfl [vmem:[#allocation1 + $0x18] sm:$0xff pattern:$0x73625140]
    %v535 = vld.sshfl [vmem:[#allocation1 + $0x20] sm:$0xff pattern:$0x73625140]
    %v536 = vld.sshfl [vmem:[#allocation1 + $0x28] sm:$0xff pattern:$0x73625140]
    %v537 = vld.sshfl [vmem:[#allocation1 + $0x30] sm:$0xff pattern:$0x73625140]
    %v538 = vld.sshfl [vmem:[#allocation1 + $0x38] sm:$0xff pattern:$0x73625140]
    %539 = vst [vmem:[#allocation1] ss:$4 sm:$0xff] %v464
    %v540 = vld.sshfl [vmem:[#allocation1] sm:$0xff pattern:$0x73625140]
    %v541 = vld.sshfl [vmem:[#allocation1 + $0x8] sm:$0xff pattern:$0x73625140]
    %v542 = vld.sshfl [vmem:[#allocation1 + $0x10] sm:$0xff pattern:$0x73625140]
    %v543 = vld.sshfl [vmem:[#allocation1 + $0x18] sm:$0xff pattern:$0x73625140]
    %v596 = vpack.c.bf16 %v481, %v481
    %v597 = vpack.c.bf16 %v482, %v482
    %v598 = vpack.c.bf16 %v483, %v483
    %v599 = vpack.c.bf16 %v484, %v484
    %v600 = vpack.c.bf16 %v485, %v485
    %v601 = vpack.c.bf16 %v486, %v486
    %v602 = vpack.c.bf16 %v487, %v487
    %v603 = vpack.c.bf16 %v488, %v488
    %v604 = vpack.c.bf16 %v491, %v491
    %v605 = vpack.c.bf16 %v492, %v492
    %v606 = vpack.c.bf16 %v493, %v493
    %v607 = vpack.c.bf16 %v494, %v494
    %v608 = vpack.c.bf16 %v495, %v495
    %v609 = vpack.c.bf16 %v496, %v496
    %v610 = vpack.c.bf16 %v497, %v497
    %v611 = vpack.c.bf16 %v498, %v498
    %v612 = vpack.c.bf16 %v501, %v501
    %v613 = vpack.c.bf16 %v502, %v502
    %v614 = vpack.c.bf16 %v503, %v503
    %v615 = vpack.c.bf16 %v504, %v504
    %v616 = vpack.c.bf16 %v505, %v505
    %v617 = vpack.c.bf16 %v506, %v506
    %v618 = vpack.c.bf16 %v507, %v507
    %v619 = vpack.c.bf16 %v508, %v508
    %v620 = vpack.c.bf16 %v511, %v511
    %v621 = vpack.c.bf16 %v512, %v512
    %v622 = vpack.c.bf16 %v513, %v513
    %v623 = vpack.c.bf16 %v514, %v514
    %v624 = vpack.c.bf16 %v515, %v515
    %v625 = vpack.c.bf16 %v516, %v516
    %v626 = vpack.c.bf16 %v517, %v517
    %v627 = vpack.c.bf16 %v518, %v518
    %v628 = vpack.c.bf16 %v521, %v521
    %v629 = vpack.c.bf16 %v522, %v522
    %v630 = vpack.c.bf16 %v523, %v523
    %v631 = vpack.c.bf16 %v524, %v524
    %v632 = vpack.c.bf16 %v525, %v525
    %v633 = vpack.c.bf16 %v526, %v526
    %v634 = vpack.c.bf16 %v527, %v527
    %v635 = vpack.c.bf16 %v528, %v528
    %v636 = vpack.c.bf16 %v531, %v531
    %v637 = vpack.c.bf16 %v532, %v532
    %v638 = vpack.c.bf16 %v533, %v533
    %v639 = vpack.c.bf16 %v534, %v534
    %v640 = vpack.c.bf16 %v535, %v535
    %v641 = vpack.c.bf16 %v536, %v536
    %v642 = vpack.c.bf16 %v537, %v537
    %v643 = vpack.c.bf16 %v538, %v538
    %v644 = vpack.c.bf16 %v540, %v540
    %v645 = vpack.c.bf16 %v541, %v541
    %v646 = vpack.c.bf16 %v542, %v542
    %v647 = vpack.c.bf16 %v543, %v543
    %v648 = vld [vmem:[#allocation7] sm:$0xff]
    %v649 = vld [vmem:[#allocation7 + $0x8] sm:$0xff]
    %v650 = vld [vmem:[#allocation7 + $0x10] sm:$0xff]
    %v651 = vld [vmem:[#allocation7 + $0x18] sm:$0xff]
    %v652 = vld [vmem:[#allocation7 + $0x20] sm:$0xff]
    %v653 = vld [vmem:[#allocation7 + $0x28] sm:$0xff]
    %v654 = vld [vmem:[#allocation7 + $0x30] sm:$0xff]
    %v655 = vld [vmem:[#allocation7 + $0x38] sm:$0xff]
    %v656 = vld [vmem:[#allocation7 + $0x40] sm:$0xff]
    %v657 = vld [vmem:[#allocation7 + $0x48] sm:$0xff]
    %v658 = vld [vmem:[#allocation7 + $0x50] sm:$0xff]
    %v659 = vld [vmem:[#allocation7 + $0x58] sm:$0xff]
    %v660 = vld [vmem:[#allocation7 + $0x60] sm:$0xff]
    %v661 = vld [vmem:[#allocation7 + $0x68] sm:$0xff]
    %v662 = vld [vmem:[#allocation7 + $0x70] sm:$0xff]
    %v663 = vld [vmem:[#allocation7 + $0x78] sm:$0xff]
    %v664 = vld [vmem:[#allocation7 + $0x80] sm:$0xff]
    %v665 = vld [vmem:[#allocation7 + $0x88] sm:$0xff]
    %v666 = vld [vmem:[#allocation7 + $0x90] sm:$0xff]
    %v667 = vld [vmem:[#allocation7 + $0x98] sm:$0xff]
    %v668 = vld [vmem:[#allocation7 + $0xa0] sm:$0xff]
    %v669 = vld [vmem:[#allocation7 + $0xa8] sm:$0xff]
    %v670 = vld [vmem:[#allocation7 + $0xb0] sm:$0xff]
    %v671 = vld [vmem:[#allocation7 + $0xb8] sm:$0xff]
    %v672 = vld [vmem:[#allocation7 + $0xc0] sm:$0xff]
    %v673 = vld [vmem:[#allocation7 + $0xc8] sm:$0xff]
    %v674 = vld [vmem:[#allocation7 + $0xd0] sm:$0xff]
    %v675 = vld [vmem:[#allocation7 + $0xd8] sm:$0xff]
    %v676 = vld [vmem:[#allocation7 + $0xe0] sm:$0xff]
    %v677 = vld [vmem:[#allocation7 + $0xe8] sm:$0xff]
    %v678 = vld [vmem:[#allocation7 + $0xf0] sm:$0xff]
    %v679 = vld [vmem:[#allocation7 + $0xf8] sm:$0xff]
    %v680 = vld [vmem:[#allocation7 + $0x100] sm:$0xff]
    %v681 = vld [vmem:[#allocation7 + $0x108] sm:$0xff]
    %v682 = vld [vmem:[#allocation7 + $0x110] sm:$0xff]
    %v683 = vld [vmem:[#allocation7 + $0x118] sm:$0xff]
    %v684 = vld [vmem:[#allocation7 + $0x120] sm:$0xff]
    %v685 = vld [vmem:[#allocation7 + $0x128] sm:$0xff]
    %v686 = vld [vmem:[#allocation7 + $0x130] sm:$0xff]
    %v687 = vld [vmem:[#allocation7 + $0x138] sm:$0xff]
    %v688 = vld [vmem:[#allocation7 + $0x140] sm:$0xff]
    %v689 = vld [vmem:[#allocation7 + $0x148] sm:$0xff]
    %v690 = vld [vmem:[#allocation7 + $0x150] sm:$0xff]
    %v691 = vld [vmem:[#allocation7 + $0x158] sm:$0xff]
    %v692 = vld [vmem:[#allocation7 + $0x160] sm:$0xff]
    %v693 = vld [vmem:[#allocation7 + $0x168] sm:$0xff]
    %v694 = vld [vmem:[#allocation7 + $0x170] sm:$0xff]
    %v695 = vld [vmem:[#allocation7 + $0x178] sm:$0xff]
    %v696 = vld [vmem:[#allocation7 + $0x180] sm:$0xff]
    %v697 = vld [vmem:[#allocation7 + $0x188] sm:$0xff]
    %v698 = vld [vmem:[#allocation7 + $0x190] sm:$0xff]
    %v699 = vld [vmem:[#allocation7 + $0x198] sm:$0xff]
    %v700 = vld [vmem:[#allocation7 + $0x1a0] sm:$0xff]
    %v701 = vld [vmem:[#allocation7 + $0x1a8] sm:$0xff]
    %v702 = vld [vmem:[#allocation7 + $0x1b0] sm:$0xff]
    %v703 = vld [vmem:[#allocation7 + $0x1b8] sm:$0xff]
    %v704 = vld [vmem:[#allocation7 + $0x1c0] sm:$0xff]
    %v705 = vld [vmem:[#allocation7 + $0x1c8] sm:$0xff]
    %v706 = vld [vmem:[#allocation7 + $0x1d0] sm:$0xff]
    %v707 = vld [vmem:[#allocation7 + $0x1d8] sm:$0xff]
    %v708 = vld [vmem:[#allocation7 + $0x1e0] sm:$0xff]
    %v709 = vld [vmem:[#allocation7 + $0x1e8] sm:$0xff]
    %v710 = vld [vmem:[#allocation7 + $0x1f0] sm:$0xff]
    %v711 = vld [vmem:[#allocation7 + $0x1f8] sm:$0xff]
    %v712 = vld [vmem:[#allocation7 + $0x200] sm:$0xff]
    %v713 = vld [vmem:[#allocation7 + $0x208] sm:$0xff]
    %v714 = vld [vmem:[#allocation7 + $0x210] sm:$0xff]
    %v715 = vld [vmem:[#allocation7 + $0x218] sm:$0xff]
    %v716 = vld [vmem:[#allocation7 + $0x220] sm:$0xff]
    %v717 = vld [vmem:[#allocation7 + $0x228] sm:$0xff]
    %v718 = vld [vmem:[#allocation7 + $0x230] sm:$0xff]
    %v719 = vld [vmem:[#allocation7 + $0x238] sm:$0xff]
    %v720 = vld [vmem:[#allocation7 + $0x240] sm:$0xff]
    %v721 = vld [vmem:[#allocation7 + $0x248] sm:$0xff]
    %v722 = vld [vmem:[#allocation7 + $0x250] sm:$0xff]
    %v723 = vld [vmem:[#allocation7 + $0x258] sm:$0xff]
    %v724 = vld [vmem:[#allocation7 + $0x260] sm:$0xff]
    %v725 = vld [vmem:[#allocation7 + $0x268] sm:$0xff]
    %v726 = vld [vmem:[#allocation7 + $0x270] sm:$0xff]
    %v727 = vld [vmem:[#allocation7 + $0x278] sm:$0xff]
    %v728 = vld [vmem:[#allocation7 + $0x280] sm:$0xff]
    %v729 = vld [vmem:[#allocation7 + $0x288] sm:$0xff]
    %v730 = vld [vmem:[#allocation7 + $0x290] sm:$0xff]
    %v731 = vld [vmem:[#allocation7 + $0x298] sm:$0xff]
    %v732 = vld [vmem:[#allocation7 + $0x2a0] sm:$0xff]
    %v733 = vld [vmem:[#allocation7 + $0x2a8] sm:$0xff]
    %v734 = vld [vmem:[#allocation7 + $0x2b0] sm:$0xff]
    %v735 = vld [vmem:[#allocation7 + $0x2b8] sm:$0xff]
    %v736 = vld [vmem:[#allocation7 + $0x2c0] sm:$0xff]
    %v737 = vld [vmem:[#allocation7 + $0x2c8] sm:$0xff]
    %v738 = vld [vmem:[#allocation7 + $0x2d0] sm:$0xff]
    %v739 = vld [vmem:[#allocation7 + $0x2d8] sm:$0xff]
    %v740 = vld [vmem:[#allocation7 + $0x2e0] sm:$0xff]
    %v741 = vld [vmem:[#allocation7 + $0x2e8] sm:$0xff]
    %v742 = vld [vmem:[#allocation7 + $0x2f0] sm:$0xff]
    %v743 = vld [vmem:[#allocation7 + $0x2f8] sm:$0xff]
    %v744 = vld [vmem:[#allocation7 + $0x300] sm:$0xff]
    %v745 = vld [vmem:[#allocation7 + $0x308] sm:$0xff]
    %v746 = vld [vmem:[#allocation7 + $0x310] sm:$0xff]
    %v747 = vld [vmem:[#allocation7 + $0x318] sm:$0xff]
    %v748 = vld [vmem:[#allocation7 + $0x320] sm:$0xff]
    %v749 = vld [vmem:[#allocation7 + $0x328] sm:$0xff]
    %v750 = vld [vmem:[#allocation7 + $0x330] sm:$0xff]
    %v751 = vld [vmem:[#allocation7 + $0x338] sm:$0xff]
    %v752 = vld [vmem:[#allocation7 + $0x340] sm:$0xff]
    %v753 = vld [vmem:[#allocation7 + $0x348] sm:$0xff]
    %v754 = vld [vmem:[#allocation7 + $0x350] sm:$0xff]
    %v755 = vld [vmem:[#allocation7 + $0x358] sm:$0xff]
    %v756 = vld [vmem:[#allocation7 + $0x360] sm:$0xff]
    %v757 = vld [vmem:[#allocation7 + $0x368] sm:$0xff]
    %v758 = vld [vmem:[#allocation7 + $0x370] sm:$0xff]
    %v759 = vld [vmem:[#allocation7 + $0x378] sm:$0xff]
    %v760 = vld [vmem:[#allocation7 + $0x380] sm:$0xff]
    %v761 = vld [vmem:[#allocation7 + $0x388] sm:$0xff]
    %v762 = vld [vmem:[#allocation7 + $0x390] sm:$0xff]
    %v763 = vld [vmem:[#allocation7 + $0x398] sm:$0xff]
    %v764 = vld [vmem:[#allocation7 + $0x3a0] sm:$0xff]
    %v765 = vld [vmem:[#allocation7 + $0x3a8] sm:$0xff]
    %v766 = vld [vmem:[#allocation7 + $0x3b0] sm:$0xff]
    %v767 = vld [vmem:[#allocation7 + $0x3b8] sm:$0xff]
    %v768 = vld [vmem:[#allocation7 + $0x3c0] sm:$0xff]
    %v769 = vld [vmem:[#allocation7 + $0x3c8] sm:$0xff]
    %v770 = vld [vmem:[#allocation7 + $0x3d0] sm:$0xff]
    %v771 = vld [vmem:[#allocation7 + $0x3d8] sm:$0xff]
    %v772 = vld [vmem:[#allocation7 + $0x3e0] sm:$0xff]
    %v773 = vld [vmem:[#allocation7 + $0x3e8] sm:$0xff]
    %v774 = vld [vmem:[#allocation7 + $0x3f0] sm:$0xff]
    %v775 = vld [vmem:[#allocation7 + $0x3f8] sm:$0xff]
    %v776 = vld [vmem:[#allocation7 + $0x400] sm:$0xff]
    %v777 = vld [vmem:[#allocation7 + $0x408] sm:$0xff]
    %v778 = vld [vmem:[#allocation7 + $0x410] sm:$0xff]
    %v779 = vld [vmem:[#allocation7 + $0x418] sm:$0xff]
    %v780 = vld [vmem:[#allocation7 + $0x420] sm:$0xff]
    %v781 = vld [vmem:[#allocation7 + $0x428] sm:$0xff]
    %v782 = vld [vmem:[#allocation7 + $0x430] sm:$0xff]
    %v783 = vld [vmem:[#allocation7 + $0x438] sm:$0xff]
    %v784 = vld [vmem:[#allocation7 + $0x440] sm:$0xff]
    %v785 = vld [vmem:[#allocation7 + $0x448] sm:$0xff]
    %v786 = vld [vmem:[#allocation7 + $0x450] sm:$0xff]
    %v787 = vld [vmem:[#allocation7 + $0x458] sm:$0xff]
    %v788 = vld [vmem:[#allocation7 + $0x460] sm:$0xff]
    %v789 = vld [vmem:[#allocation7 + $0x468] sm:$0xff]
    %v790 = vld [vmem:[#allocation7 + $0x470] sm:$0xff]
    %v791 = vld [vmem:[#allocation7 + $0x478] sm:$0xff]
    %v792 = vld [vmem:[#allocation7 + $0x480] sm:$0xff]
    %v793 = vld [vmem:[#allocation7 + $0x488] sm:$0xff]
    %v794 = vld [vmem:[#allocation7 + $0x490] sm:$0xff]
    %v795 = vld [vmem:[#allocation7 + $0x498] sm:$0xff]
    %v796 = vld [vmem:[#allocation7 + $0x4a0] sm:$0xff]
    %v797 = vld [vmem:[#allocation7 + $0x4a8] sm:$0xff]
    %v798 = vld [vmem:[#allocation7 + $0x4b0] sm:$0xff]
    %v799 = vld [vmem:[#allocation7 + $0x4b8] sm:$0xff]
    %v800 = vld [vmem:[#allocation7 + $0x4c0] sm:$0xff]
    %v801 = vld [vmem:[#allocation7 + $0x4c8] sm:$0xff]
    %v802 = vld [vmem:[#allocation7 + $0x4d0] sm:$0xff]
    %v803 = vld [vmem:[#allocation7 + $0x4d8] sm:$0xff]
    %v804 = vld [vmem:[#allocation7 + $0x4e0] sm:$0xff]
    %v805 = vld [vmem:[#allocation7 + $0x4e8] sm:$0xff]
    %v806 = vld [vmem:[#allocation7 + $0x4f0] sm:$0xff]
    %v807 = vld [vmem:[#allocation7 + $0x4f8] sm:$0xff]
    %v808 = vld [vmem:[#allocation7 + $0x500] sm:$0xff]
    %v809 = vld [vmem:[#allocation7 + $0x508] sm:$0xff]
    %v810 = vld [vmem:[#allocation7 + $0x510] sm:$0xff]
    %v811 = vld [vmem:[#allocation7 + $0x518] sm:$0xff]
    %v812 = vld [vmem:[#allocation7 + $0x520] sm:$0xff]
    %v813 = vld [vmem:[#allocation7 + $0x528] sm:$0xff]
    %v814 = vld [vmem:[#allocation7 + $0x530] sm:$0xff]
    %v815 = vld [vmem:[#allocation7 + $0x538] sm:$0xff]
    %v816 = vld [vmem:[#allocation7 + $0x540] sm:$0xff]
    %v817 = vld [vmem:[#allocation7 + $0x548] sm:$0xff]
    %v818 = vld [vmem:[#allocation7 + $0x550] sm:$0xff]
    %v819 = vld [vmem:[#allocation7 + $0x558] sm:$0xff]
    %v820 = vld [vmem:[#allocation7 + $0x560] sm:$0xff]
    %v821 = vld [vmem:[#allocation7 + $0x568] sm:$0xff]
    %v822 = vld [vmem:[#allocation7 + $0x570] sm:$0xff]
    %v823 = vld [vmem:[#allocation7 + $0x578] sm:$0xff]
    %v824 = vld [vmem:[#allocation7 + $0x580] sm:$0xff]
    %v825 = vld [vmem:[#allocation7 + $0x588] sm:$0xff]
    %v826 = vld [vmem:[#allocation7 + $0x590] sm:$0xff]
    %v827 = vld [vmem:[#allocation7 + $0x598] sm:$0xff]
    %v828 = vld [vmem:[#allocation7 + $0x5a0] sm:$0xff]
    %v829 = vld [vmem:[#allocation7 + $0x5a8] sm:$0xff]
    %v830 = vld [vmem:[#allocation7 + $0x5b0] sm:$0xff]
    %v831 = vld [vmem:[#allocation7 + $0x5b8] sm:$0xff]
    %v832 = vld [vmem:[#allocation7 + $0x5c0] sm:$0xff]
    %v833 = vld [vmem:[#allocation7 + $0x5c8] sm:$0xff]
    %v834 = vld [vmem:[#allocation7 + $0x5d0] sm:$0xff]
    %v835 = vld [vmem:[#allocation7 + $0x5d8] sm:$0xff]
    %v836 = vld [vmem:[#allocation7 + $0x5e0] sm:$0xff]
    %v837 = vld [vmem:[#allocation7 + $0x5e8] sm:$0xff]
    %v838 = vld [vmem:[#allocation7 + $0x5f0] sm:$0xff]
    %v839 = vld [vmem:[#allocation7 + $0x5f8] sm:$0xff]
    %v840 = vld [vmem:[#allocation7 + $0x600] sm:$0xff]
    %v841 = vld [vmem:[#allocation7 + $0x608] sm:$0xff]
    %v842 = vld [vmem:[#allocation7 + $0x610] sm:$0xff]
    %v843 = vld [vmem:[#allocation7 + $0x618] sm:$0xff]
    %v844 = vld [vmem:[#allocation7 + $0x620] sm:$0xff]
    %v845 = vld [vmem:[#allocation7 + $0x628] sm:$0xff]
    %v846 = vld [vmem:[#allocation7 + $0x630] sm:$0xff]
    %v847 = vld [vmem:[#allocation7 + $0x638] sm:$0xff]
    %v848 = vld [vmem:[#allocation7 + $0x640] sm:$0xff]
    %v849 = vld [vmem:[#allocation7 + $0x648] sm:$0xff]
    %v850 = vld [vmem:[#allocation7 + $0x650] sm:$0xff]
    %v851 = vld [vmem:[#allocation7 + $0x658] sm:$0xff]
    %v852 = vld [vmem:[#allocation7 + $0x660] sm:$0xff]
    %v853 = vld [vmem:[#allocation7 + $0x668] sm:$0xff]
    %v854 = vld [vmem:[#allocation7 + $0x670] sm:$0xff]
    %v855 = vld [vmem:[#allocation7 + $0x678] sm:$0xff]
    %v856 = vld [vmem:[#allocation7 + $0x680] sm:$0xff]
    %v857 = vld [vmem:[#allocation7 + $0x688] sm:$0xff]
    %v858 = vld [vmem:[#allocation7 + $0x690] sm:$0xff]
    %v859 = vld [vmem:[#allocation7 + $0x698] sm:$0xff]
    %v860 = vld [vmem:[#allocation7 + $0x6a0] sm:$0xff]
    %v861 = vld [vmem:[#allocation7 + $0x6a8] sm:$0xff]
    %v862 = vld [vmem:[#allocation7 + $0x6b0] sm:$0xff]
    %v863 = vld [vmem:[#allocation7 + $0x6b8] sm:$0xff]
    %v864 = vld [vmem:[#allocation7 + $0x6c0] sm:$0xff]
    %v865 = vld [vmem:[#allocation7 + $0x6c8] sm:$0xff]
    %v866 = vld [vmem:[#allocation7 + $0x6d0] sm:$0xff]
    %v867 = vld [vmem:[#allocation7 + $0x6d8] sm:$0xff]
    %v868 = vld [vmem:[#allocation7 + $0x6e0] sm:$0xff]
    %v869 = vld [vmem:[#allocation7 + $0x6e8] sm:$0xff]
    %v870 = vld [vmem:[#allocation7 + $0x6f0] sm:$0xff]
    %v871 = vld [vmem:[#allocation7 + $0x6f8] sm:$0xff]
    %v872 = vld [vmem:[#allocation7 + $0x700] sm:$0xff]
    %v873 = vld [vmem:[#allocation7 + $0x708] sm:$0xff]
    %v874 = vld [vmem:[#allocation7 + $0x710] sm:$0xff]
    %v875 = vld [vmem:[#allocation7 + $0x718] sm:$0xff]
    %v876 = vld [vmem:[#allocation7 + $0x720] sm:$0xff]
    %v877 = vld [vmem:[#allocation7 + $0x728] sm:$0xff]
    %v878 = vld [vmem:[#allocation7 + $0x730] sm:$0xff]
    %v879 = vld [vmem:[#allocation7 + $0x738] sm:$0xff]
    %v880 = vld [vmem:[#allocation7 + $0x740] sm:$0xff]
    %v881 = vld [vmem:[#allocation7 + $0x748] sm:$0xff]
    %v882 = vld [vmem:[#allocation7 + $0x750] sm:$0xff]
    %v883 = vld [vmem:[#allocation7 + $0x758] sm:$0xff]
    %v884 = vld [vmem:[#allocation7 + $0x760] sm:$0xff]
    %v885 = vld [vmem:[#allocation7 + $0x768] sm:$0xff]
    %v886 = vld [vmem:[#allocation7 + $0x770] sm:$0xff]
    %v887 = vld [vmem:[#allocation7 + $0x778] sm:$0xff]
    %v888 = vld [vmem:[#allocation7 + $0x780] sm:$0xff]
    %v889 = vld [vmem:[#allocation7 + $0x788] sm:$0xff]
    %v890 = vld [vmem:[#allocation7 + $0x790] sm:$0xff]
    %v891 = vld [vmem:[#allocation7 + $0x798] sm:$0xff]
    %v892 = vld [vmem:[#allocation7 + $0x7a0] sm:$0xff]
    %v893 = vld [vmem:[#allocation7 + $0x7a8] sm:$0xff]
    %v894 = vld [vmem:[#allocation7 + $0x7b0] sm:$0xff]
    %v895 = vld [vmem:[#allocation7 + $0x7b8] sm:$0xff]
    %v896 = vld [vmem:[#allocation7 + $0x7c0] sm:$0xff]
    %v897 = vld [vmem:[#allocation7 + $0x7c8] sm:$0xff]
    %v898 = vld [vmem:[#allocation7 + $0x7d0] sm:$0xff]
    %v899 = vld [vmem:[#allocation7 + $0x7d8] sm:$0xff]
    %v900 = vld [vmem:[#allocation7 + $0x7e0] sm:$0xff]
    %v901 = vld [vmem:[#allocation7 + $0x7e8] sm:$0xff]
    %v902 = vld [vmem:[#allocation7 + $0x7f0] sm:$0xff]
    %v903 = vld [vmem:[#allocation7 + $0x7f8] sm:$0xff]
    %v904 = vld [vmem:[#allocation7 + $0x800] sm:$0xff]
    %v905 = vld [vmem:[#allocation7 + $0x808] sm:$0xff]
    %v906 = vld [vmem:[#allocation7 + $0x810] sm:$0xff]
    %v907 = vld [vmem:[#allocation7 + $0x818] sm:$0xff]
    %v908 = vld [vmem:[#allocation7 + $0x820] sm:$0xff]
    %v909 = vld [vmem:[#allocation7 + $0x828] sm:$0xff]
    %v910 = vld [vmem:[#allocation7 + $0x830] sm:$0xff]
    %v911 = vld [vmem:[#allocation7 + $0x838] sm:$0xff]
    %v912 = vld [vmem:[#allocation7 + $0x840] sm:$0xff]
    %v913 = vld [vmem:[#allocation7 + $0x848] sm:$0xff]
    %v914 = vld [vmem:[#allocation7 + $0x850] sm:$0xff]
    %v915 = vld [vmem:[#allocation7 + $0x858] sm:$0xff]
    %v916 = vld [vmem:[#allocation7 + $0x860] sm:$0xff]
    %v917 = vld [vmem:[#allocation7 + $0x868] sm:$0xff]
    %v918 = vld [vmem:[#allocation7 + $0x870] sm:$0xff]
    %v919 = vld [vmem:[#allocation7 + $0x878] sm:$0xff]
    %v920 = vld [vmem:[#allocation7 + $0x880] sm:$0xff]
    %v921 = vld [vmem:[#allocation7 + $0x888] sm:$0xff]
    %v922 = vld [vmem:[#allocation7 + $0x890] sm:$0xff]
    %v923 = vld [vmem:[#allocation7 + $0x898] sm:$0xff]
    %v924 = vld [vmem:[#allocation7 + $0x8a0] sm:$0xff]
    %v925 = vld [vmem:[#allocation7 + $0x8a8] sm:$0xff]
    %v926 = vld [vmem:[#allocation7 + $0x8b0] sm:$0xff]
    %v927 = vld [vmem:[#allocation7 + $0x8b8] sm:$0xff]
    %v928 = vld [vmem:[#allocation7 + $0x8c0] sm:$0xff]
    %v929 = vld [vmem:[#allocation7 + $0x8c8] sm:$0xff]
    %v930 = vld [vmem:[#allocation7 + $0x8d0] sm:$0xff]
    %v931 = vld [vmem:[#allocation7 + $0x8d8] sm:$0xff]
    %v932 = vld [vmem:[#allocation7 + $0x8e0] sm:$0xff]
    %v933 = vld [vmem:[#allocation7 + $0x8e8] sm:$0xff]
    %v934 = vld [vmem:[#allocation7 + $0x8f0] sm:$0xff]
    %v935 = vld [vmem:[#allocation7 + $0x8f8] sm:$0xff]
    %v936 = vld [vmem:[#allocation7 + $0x900] sm:$0xff]
    %v937 = vld [vmem:[#allocation7 + $0x908] sm:$0xff]
    %v938 = vld [vmem:[#allocation7 + $0x910] sm:$0xff]
    %v939 = vld [vmem:[#allocation7 + $0x918] sm:$0xff]
    %v940 = vld [vmem:[#allocation7 + $0x920] sm:$0xff]
    %v941 = vld [vmem:[#allocation7 + $0x928] sm:$0xff]
    %v942 = vld [vmem:[#allocation7 + $0x930] sm:$0xff]
    %v943 = vld [vmem:[#allocation7 + $0x938] sm:$0xff]
    %v944 = vld [vmem:[#allocation7 + $0x940] sm:$0xff]
    %v945 = vld [vmem:[#allocation7 + $0x948] sm:$0xff]
    %v946 = vld [vmem:[#allocation7 + $0x950] sm:$0xff]
    %v947 = vld [vmem:[#allocation7 + $0x958] sm:$0xff]
    %v948 = vld [vmem:[#allocation7 + $0x960] sm:$0xff]
    %v949 = vld [vmem:[#allocation7 + $0x968] sm:$0xff]
    %v950 = vld [vmem:[#allocation7 + $0x970] sm:$0xff]
    %v951 = vld [vmem:[#allocation7 + $0x978] sm:$0xff]
    %v952 = vld [vmem:[#allocation7 + $0x980] sm:$0xff]
    %v953 = vld [vmem:[#allocation7 + $0x988] sm:$0xff]
    %v954 = vld [vmem:[#allocation7 + $0x990] sm:$0xff]
    %v955 = vld [vmem:[#allocation7 + $0x998] sm:$0xff]
    %v956 = vld [vmem:[#allocation7 + $0x9a0] sm:$0xff]
    %v957 = vld [vmem:[#allocation7 + $0x9a8] sm:$0xff]
    %v958 = vld [vmem:[#allocation7 + $0x9b0] sm:$0xff]
    %v959 = vld [vmem:[#allocation7 + $0x9b8] sm:$0xff]
    %v960 = vld [vmem:[#allocation7 + $0x9c0] sm:$0xff]
    %v961 = vld [vmem:[#allocation7 + $0x9c8] sm:$0xff]
    %v962 = vld [vmem:[#allocation7 + $0x9d0] sm:$0xff]
    %v963 = vld [vmem:[#allocation7 + $0x9d8] sm:$0xff]
    %v964 = vld [vmem:[#allocation7 + $0x9e0] sm:$0xff]
    %v965 = vld [vmem:[#allocation7 + $0x9e8] sm:$0xff]
    %v966 = vld [vmem:[#allocation7 + $0x9f0] sm:$0xff]
    %v967 = vld [vmem:[#allocation7 + $0x9f8] sm:$0xff]
    %v968 = vld [vmem:[#allocation7 + $0xa00] sm:$0xff]
    %v969 = vld [vmem:[#allocation7 + $0xa08] sm:$0xff]
    %v970 = vld [vmem:[#allocation7 + $0xa10] sm:$0xff]
    %v971 = vld [vmem:[#allocation7 + $0xa18] sm:$0xff]
    %v972 = vld [vmem:[#allocation7 + $0xa20] sm:$0xff]
    %v973 = vld [vmem:[#allocation7 + $0xa28] sm:$0xff]
    %v974 = vld [vmem:[#allocation7 + $0xa30] sm:$0xff]
    %v975 = vld [vmem:[#allocation7 + $0xa38] sm:$0xff]
    %v976 = vld [vmem:[#allocation7 + $0xa40] sm:$0xff]
    %v977 = vld [vmem:[#allocation7 + $0xa48] sm:$0xff]
    %v978 = vld [vmem:[#allocation7 + $0xa50] sm:$0xff]
    %v979 = vld [vmem:[#allocation7 + $0xa58] sm:$0xff]
    %v980 = vld [vmem:[#allocation7 + $0xa60] sm:$0xff]
    %v981 = vld [vmem:[#allocation7 + $0xa68] sm:$0xff]
    %v982 = vld [vmem:[#allocation7 + $0xa70] sm:$0xff]
    %v983 = vld [vmem:[#allocation7 + $0xa78] sm:$0xff]
    %v984 = vld [vmem:[#allocation7 + $0xa80] sm:$0xff]
    %v985 = vld [vmem:[#allocation7 + $0xa88] sm:$0xff]
    %v986 = vld [vmem:[#allocation7 + $0xa90] sm:$0xff]
    %v987 = vld [vmem:[#allocation7 + $0xa98] sm:$0xff]
    %v988 = vld [vmem:[#allocation7 + $0xaa0] sm:$0xff]
    %v989 = vld [vmem:[#allocation7 + $0xaa8] sm:$0xff]
    %v990 = vld [vmem:[#allocation7 + $0xab0] sm:$0xff]
    %v991 = vld [vmem:[#allocation7 + $0xab8] sm:$0xff]
    %v992 = vld [vmem:[#allocation7 + $0xac0] sm:$0xff]
    %v993 = vld [vmem:[#allocation7 + $0xac8] sm:$0xff]
    %v994 = vld [vmem:[#allocation7 + $0xad0] sm:$0xff]
    %v995 = vld [vmem:[#allocation7 + $0xad8] sm:$0xff]
    %v996 = vld [vmem:[#allocation7 + $0xae0] sm:$0xff]
    %v997 = vld [vmem:[#allocation7 + $0xae8] sm:$0xff]
    %v998 = vld [vmem:[#allocation7 + $0xaf0] sm:$0xff]
    %v999 = vld [vmem:[#allocation7 + $0xaf8] sm:$0xff]
    %v1000 = vld [vmem:[#allocation7 + $0xb00] sm:$0xff]
    %v1001 = vld [vmem:[#allocation7 + $0xb08] sm:$0xff]
    %v1002 = vld [vmem:[#allocation7 + $0xb10] sm:$0xff]
    %v1003 = vld [vmem:[#allocation7 + $0xb18] sm:$0xff]
    %v1004 = vld [vmem:[#allocation7 + $0xb20] sm:$0xff]
    %v1005 = vld [vmem:[#allocation7 + $0xb28] sm:$0xff]
    %v1006 = vld [vmem:[#allocation7 + $0xb30] sm:$0xff]
    %v1007 = vld [vmem:[#allocation7 + $0xb38] sm:$0xff]
    %v1008 = vld [vmem:[#allocation7 + $0xb40] sm:$0xff]
    %v1009 = vld [vmem:[#allocation7 + $0xb48] sm:$0xff]
    %v1010 = vld [vmem:[#allocation7 + $0xb50] sm:$0xff]
    %v1011 = vld [vmem:[#allocation7 + $0xb58] sm:$0xff]
    %v1012 = vld [vmem:[#allocation7 + $0xb60] sm:$0xff]
    %v1013 = vld [vmem:[#allocation7 + $0xb68] sm:$0xff]
    %v1014 = vld [vmem:[#allocation7 + $0xb70] sm:$0xff]
    %v1015 = vld [vmem:[#allocation7 + $0xb78] sm:$0xff]
    %v1016 = vld [vmem:[#allocation7 + $0xb80] sm:$0xff]
    %v1017 = vld [vmem:[#allocation7 + $0xb88] sm:$0xff]
    %v1018 = vld [vmem:[#allocation7 + $0xb90] sm:$0xff]
    %v1019 = vld [vmem:[#allocation7 + $0xb98] sm:$0xff]
    %v1020 = vld [vmem:[#allocation7 + $0xba0] sm:$0xff]
    %v1021 = vld [vmem:[#allocation7 + $0xba8] sm:$0xff]
    %v1022 = vld [vmem:[#allocation7 + $0xbb0] sm:$0xff]
    %v1023 = vld [vmem:[#allocation7 + $0xbb8] sm:$0xff]
    %v1024 = vld [vmem:[#allocation7 + $0xbc0] sm:$0xff]
    %v1025 = vld [vmem:[#allocation7 + $0xbc8] sm:$0xff]
    %v1026 = vld [vmem:[#allocation7 + $0xbd0] sm:$0xff]
    %v1027 = vld [vmem:[#allocation7 + $0xbd8] sm:$0xff]
    %v1028 = vld [vmem:[#allocation7 + $0xbe0] sm:$0xff]
    %v1029 = vld [vmem:[#allocation7 + $0xbe8] sm:$0xff]
    %v1030 = vld [vmem:[#allocation7 + $0xbf0] sm:$0xff]
    %v1031 = vld [vmem:[#allocation7 + $0xbf8] sm:$0xff]
    %v1032 = vld [vmem:[#allocation7 + $0xc00] sm:$0xff]
    %v1033 = vld [vmem:[#allocation7 + $0xc08] sm:$0xff]
    %v1034 = vld [vmem:[#allocation7 + $0xc10] sm:$0xff]
    %v1035 = vld [vmem:[#allocation7 + $0xc18] sm:$0xff]
    %v1036 = vld [vmem:[#allocation7 + $0xc20] sm:$0xff]
    %v1037 = vld [vmem:[#allocation7 + $0xc28] sm:$0xff]
    %v1038 = vld [vmem:[#allocation7 + $0xc30] sm:$0xff]
    %v1039 = vld [vmem:[#allocation7 + $0xc38] sm:$0xff]
    %v1040 = vld [vmem:[#allocation7 + $0xc40] sm:$0xff]
    %v1041 = vld [vmem:[#allocation7 + $0xc48] sm:$0xff]
    %v1042 = vld [vmem:[#allocation7 + $0xc50] sm:$0xff]
    %v1043 = vld [vmem:[#allocation7 + $0xc58] sm:$0xff]
    %v1044 = vld [vmem:[#allocation7 + $0xc60] sm:$0xff]
    %v1045 = vld [vmem:[#allocation7 + $0xc68] sm:$0xff]
    %v1046 = vld [vmem:[#allocation7 + $0xc70] sm:$0xff]
    %v1047 = vld [vmem:[#allocation7 + $0xc78] sm:$0xff]
    %v1048 = vld [vmem:[#allocation7 + $0xc80] sm:$0xff]
    %v1049 = vld [vmem:[#allocation7 + $0xc88] sm:$0xff]
    %v1050 = vld [vmem:[#allocation7 + $0xc90] sm:$0xff]
    %v1051 = vld [vmem:[#allocation7 + $0xc98] sm:$0xff]
    %v1052 = vld [vmem:[#allocation7 + $0xca0] sm:$0xff]
    %v1053 = vld [vmem:[#allocation7 + $0xca8] sm:$0xff]
    %v1054 = vld [vmem:[#allocation7 + $0xcb0] sm:$0xff]
    %v1055 = vld [vmem:[#allocation7 + $0xcb8] sm:$0xff]
    %v1056 = vld [vmem:[#allocation7 + $0xcc0] sm:$0xff]
    %v1057 = vld [vmem:[#allocation7 + $0xcc8] sm:$0xff]
    %v1058 = vld [vmem:[#allocation7 + $0xcd0] sm:$0xff]
    %v1059 = vld [vmem:[#allocation7 + $0xcd8] sm:$0xff]
    %v1060 = vld [vmem:[#allocation7 + $0xce0] sm:$0xff]
    %v1061 = vld [vmem:[#allocation7 + $0xce8] sm:$0xff]
    %v1062 = vld [vmem:[#allocation7 + $0xcf0] sm:$0xff]
    %v1063 = vld [vmem:[#allocation7 + $0xcf8] sm:$0xff]
    %v1064 = vld [vmem:[#allocation7 + $0xd00] sm:$0xff]
    %v1065 = vld [vmem:[#allocation7 + $0xd08] sm:$0xff]
    %v1066 = vld [vmem:[#allocation7 + $0xd10] sm:$0xff]
    %v1067 = vld [vmem:[#allocation7 + $0xd18] sm:$0xff]
    %v1068 = vld [vmem:[#allocation7 + $0xd20] sm:$0xff]
    %v1069 = vld [vmem:[#allocation7 + $0xd28] sm:$0xff]
    %v1070 = vld [vmem:[#allocation7 + $0xd30] sm:$0xff]
    %v1071 = vld [vmem:[#allocation7 + $0xd38] sm:$0xff]
    %v1072 = vld [vmem:[#allocation7 + $0xd40] sm:$0xff]
    %v1073 = vld [vmem:[#allocation7 + $0xd48] sm:$0xff]
    %v1074 = vld [vmem:[#allocation7 + $0xd50] sm:$0xff]
    %v1075 = vld [vmem:[#allocation7 + $0xd58] sm:$0xff]
    %v1076 = vld [vmem:[#allocation7 + $0xd60] sm:$0xff]
    %v1077 = vld [vmem:[#allocation7 + $0xd68] sm:$0xff]
    %v1078 = vld [vmem:[#allocation7 + $0xd70] sm:$0xff]
    %v1079 = vld [vmem:[#allocation7 + $0xd78] sm:$0xff]
    %v1080 = vld [vmem:[#allocation7 + $0xd80] sm:$0xff]
    %v1081 = vld [vmem:[#allocation7 + $0xd88] sm:$0xff]
    %v1082 = vld [vmem:[#allocation7 + $0xd90] sm:$0xff]
    %v1083 = vld [vmem:[#allocation7 + $0xd98] sm:$0xff]
    %v1084 = vld [vmem:[#allocation7 + $0xda0] sm:$0xff]
    %v1085 = vld [vmem:[#allocation7 + $0xda8] sm:$0xff]
    %v1086 = vld [vmem:[#allocation7 + $0xdb0] sm:$0xff]
    %v1087 = vld [vmem:[#allocation7 + $0xdb8] sm:$0xff]
    %v1088 = vld [vmem:[#allocation7 + $0xdc0] sm:$0xff]
    %v1089 = vld [vmem:[#allocation7 + $0xdc8] sm:$0xff]
    %v1090 = vld [vmem:[#allocation7 + $0xdd0] sm:$0xff]
    %v1091 = vld [vmem:[#allocation7 + $0xdd8] sm:$0xff]
    %v1092 = vld [vmem:[#allocation7 + $0xde0] sm:$0xff]
    %v1093 = vld [vmem:[#allocation7 + $0xde8] sm:$0xff]
    %v1094 = vld [vmem:[#allocation7 + $0xdf0] sm:$0xff]
    %v1095 = vld [vmem:[#allocation7 + $0xdf8] sm:$0xff]
    %v1096 = vld [vmem:[#allocation7 + $0xe00] sm:$0xff]
    %v1097 = vld [vmem:[#allocation7 + $0xe08] sm:$0xff]
    %v1098 = vld [vmem:[#allocation7 + $0xe10] sm:$0xff]
    %v1099 = vld [vmem:[#allocation7 + $0xe18] sm:$0xff]
    %v1100 = vld [vmem:[#allocation7 + $0xe20] sm:$0xff]
    %v1101 = vld [vmem:[#allocation7 + $0xe28] sm:$0xff]
    %v1102 = vld [vmem:[#allocation7 + $0xe30] sm:$0xff]
    %v1103 = vld [vmem:[#allocation7 + $0xe38] sm:$0xff]
    %v1104 = vld [vmem:[#allocation7 + $0xe40] sm:$0xff]
    %v1105 = vld [vmem:[#allocation7 + $0xe48] sm:$0xff]
    %v1106 = vld [vmem:[#allocation7 + $0xe50] sm:$0xff]
    %v1107 = vld [vmem:[#allocation7 + $0xe58] sm:$0xff]
    %v1108 = vld [vmem:[#allocation7 + $0xe60] sm:$0xff]
    %v1109 = vld [vmem:[#allocation7 + $0xe68] sm:$0xff]
    %v1110 = vld [vmem:[#allocation7 + $0xe70] sm:$0xff]
    %v1111 = vld [vmem:[#allocation7 + $0xe78] sm:$0xff]
    %v1112 = vld [vmem:[#allocation7 + $0xe80] sm:$0xff]
    %v1113 = vld [vmem:[#allocation7 + $0xe88] sm:$0xff]
    %v1114 = vld [vmem:[#allocation7 + $0xe90] sm:$0xff]
    %v1115 = vld [vmem:[#allocation7 + $0xe98] sm:$0xff]
    %v1116 = vld [vmem:[#allocation7 + $0xea0] sm:$0xff]
    %v1117 = vld [vmem:[#allocation7 + $0xea8] sm:$0xff]
    %v1118 = vld [vmem:[#allocation7 + $0xeb0] sm:$0xff]
    %v1119 = vld [vmem:[#allocation7 + $0xeb8] sm:$0xff]
    %v1120 = vld [vmem:[#allocation7 + $0xec0] sm:$0xff]
    %v1121 = vld [vmem:[#allocation7 + $0xec8] sm:$0xff]
    %v1122 = vld [vmem:[#allocation7 + $0xed0] sm:$0xff]
    %v1123 = vld [vmem:[#allocation7 + $0xed8] sm:$0xff]
    %v1124 = vld [vmem:[#allocation7 + $0xee0] sm:$0xff]
    %v1125 = vld [vmem:[#allocation7 + $0xee8] sm:$0xff]
    %v1126 = vld [vmem:[#allocation7 + $0xef0] sm:$0xff]
    %v1127 = vld [vmem:[#allocation7 + $0xef8] sm:$0xff]
    %v1128 = vld [vmem:[#allocation7 + $0xf00] sm:$0xff]
    %v1129 = vld [vmem:[#allocation7 + $0xf08] sm:$0xff]
    %v1130 = vld [vmem:[#allocation7 + $0xf10] sm:$0xff]
    %v1131 = vld [vmem:[#allocation7 + $0xf18] sm:$0xff]
    %v1132 = vld [vmem:[#allocation7 + $0xf20] sm:$0xff]
    %v1133 = vld [vmem:[#allocation7 + $0xf28] sm:$0xff]
    %v1134 = vld [vmem:[#allocation7 + $0xf30] sm:$0xff]
    %v1135 = vld [vmem:[#allocation7 + $0xf38] sm:$0xff]
    %v1136 = vld [vmem:[#allocation7 + $0xf40] sm:$0xff]
    %v1137 = vld [vmem:[#allocation7 + $0xf48] sm:$0xff]
    %v1138 = vld [vmem:[#allocation7 + $0xf50] sm:$0xff]
    %v1139 = vld [vmem:[#allocation7 + $0xf58] sm:$0xff]
    %v1140 = vld [vmem:[#allocation7 + $0xf60] sm:$0xff]
    %v1141 = vld [vmem:[#allocation7 + $0xf68] sm:$0xff]
    %v1142 = vld [vmem:[#allocation7 + $0xf70] sm:$0xff]
    %v1143 = vld [vmem:[#allocation7 + $0xf78] sm:$0xff]
    %v1144 = vld [vmem:[#allocation7 + $0xf80] sm:$0xff]
    %v1145 = vld [vmem:[#allocation7 + $0xf88] sm:$0xff]
    %v1146 = vld [vmem:[#allocation7 + $0xf90] sm:$0xff]
    %v1147 = vld [vmem:[#allocation7 + $0xf98] sm:$0xff]
    %v1148 = vld [vmem:[#allocation7 + $0xfa0] sm:$0xff]
    %v1149 = vld [vmem:[#allocation7 + $0xfa8] sm:$0xff]
    %v1150 = vld [vmem:[#allocation7 + $0xfb0] sm:$0xff]
    %v1151 = vld [vmem:[#allocation7 + $0xfb8] sm:$0xff]
    %v1152 = vld [vmem:[#allocation7 + $0xfc0] sm:$0xff]
    %v1153 = vld [vmem:[#allocation7 + $0xfc8] sm:$0xff]
    %v1154 = vld [vmem:[#allocation7 + $0xfd0] sm:$0xff]
    %v1155 = vld [vmem:[#allocation7 + $0xfd8] sm:$0xff]
    %v1156 = vld [vmem:[#allocation7 + $0xfe0] sm:$0xff]
    %v1157 = vld [vmem:[#allocation7 + $0xfe8] sm:$0xff]
    %v1158 = vld [vmem:[#allocation7 + $0xff0] sm:$0xff]
    %v1159 = vld [vmem:[#allocation7 + $0xff8] sm:$0xff]
    %v1160 = vld [vmem:[#allocation7 + $0x1000] sm:$0xff]
    %v1161 = vld [vmem:[#allocation7 + $0x1008] sm:$0xff]
    %v1162 = vld [vmem:[#allocation7 + $0x1010] sm:$0xff]
    %v1163 = vld [vmem:[#allocation7 + $0x1018] sm:$0xff]
    %v1164 = vld [vmem:[#allocation7 + $0x1020] sm:$0xff]
    %v1165 = vld [vmem:[#allocation7 + $0x1028] sm:$0xff]
    %v1166 = vld [vmem:[#allocation7 + $0x1030] sm:$0xff]
    %v1167 = vld [vmem:[#allocation7 + $0x1038] sm:$0xff]
    %v1168 = vld [vmem:[#allocation7 + $0x1040] sm:$0xff]
    %v1169 = vld [vmem:[#allocation7 + $0x1048] sm:$0xff]
    %v1170 = vld [vmem:[#allocation7 + $0x1050] sm:$0xff]
    %v1171 = vld [vmem:[#allocation7 + $0x1058] sm:$0xff]
    %v1172 = vld [vmem:[#allocation7 + $0x1060] sm:$0xff]
    %v1173 = vld [vmem:[#allocation7 + $0x1068] sm:$0xff]
    %v1174 = vld [vmem:[#allocation7 + $0x1070] sm:$0xff]
    %v1175 = vld [vmem:[#allocation7 + $0x1078] sm:$0xff]
    %v1176 = vld [vmem:[#allocation7 + $0x1080] sm:$0xff]
    %v1177 = vld [vmem:[#allocation7 + $0x1088] sm:$0xff]
    %v1178 = vld [vmem:[#allocation7 + $0x1090] sm:$0xff]
    %v1179 = vld [vmem:[#allocation7 + $0x1098] sm:$0xff]
    %v1180 = vld [vmem:[#allocation7 + $0x10a0] sm:$0xff]
    %v1181 = vld [vmem:[#allocation7 + $0x10a8] sm:$0xff]
    %v1182 = vld [vmem:[#allocation7 + $0x10b0] sm:$0xff]
    %v1183 = vld [vmem:[#allocation7 + $0x10b8] sm:$0xff]
    %v1184 = vld [vmem:[#allocation7 + $0x10c0] sm:$0xff]
    %v1185 = vld [vmem:[#allocation7 + $0x10c8] sm:$0xff]
    %v1186 = vld [vmem:[#allocation7 + $0x10d0] sm:$0xff]
    %v1187 = vld [vmem:[#allocation7 + $0x10d8] sm:$0xff]
    %v1188 = vld [vmem:[#allocation7 + $0x10e0] sm:$0xff]
    %v1189 = vld [vmem:[#allocation7 + $0x10e8] sm:$0xff]
    %v1190 = vld [vmem:[#allocation7 + $0x10f0] sm:$0xff]
    %v1191 = vld [vmem:[#allocation7 + $0x10f8] sm:$0xff]
    %v1192 = vld [vmem:[#allocation7 + $0x1100] sm:$0xff]
    %v1193 = vld [vmem:[#allocation7 + $0x1108] sm:$0xff]
    %v1194 = vld [vmem:[#allocation7 + $0x1110] sm:$0xff]
    %v1195 = vld [vmem:[#allocation7 + $0x1118] sm:$0xff]
    %v1196 = vld [vmem:[#allocation7 + $0x1120] sm:$0xff]
    %v1197 = vld [vmem:[#allocation7 + $0x1128] sm:$0xff]
    %v1198 = vld [vmem:[#allocation7 + $0x1130] sm:$0xff]
    %v1199 = vld [vmem:[#allocation7 + $0x1138] sm:$0xff]
    %v1200 = vld [vmem:[#allocation7 + $0x1140] sm:$0xff]
    %v1201 = vld [vmem:[#allocation7 + $0x1148] sm:$0xff]
    %v1202 = vld [vmem:[#allocation7 + $0x1150] sm:$0xff]
    %v1203 = vld [vmem:[#allocation7 + $0x1158] sm:$0xff]
    %v1204 = vld [vmem:[#allocation7 + $0x1160] sm:$0xff]
    %v1205 = vld [vmem:[#allocation7 + $0x1168] sm:$0xff]
    %v1206 = vld [vmem:[#allocation7 + $0x1170] sm:$0xff]
    %v1207 = vld [vmem:[#allocation7 + $0x1178] sm:$0xff]
    %v1208 = vld [vmem:[#allocation7 + $0x1180] sm:$0xff]
    %v1209 = vld [vmem:[#allocation7 + $0x1188] sm:$0xff]
    %v1210 = vld [vmem:[#allocation7 + $0x1190] sm:$0xff]
    %v1211 = vld [vmem:[#allocation7 + $0x1198] sm:$0xff]
    %v1212 = vld [vmem:[#allocation7 + $0x11a0] sm:$0xff]
    %v1213 = vld [vmem:[#allocation7 + $0x11a8] sm:$0xff]
    %v1214 = vld [vmem:[#allocation7 + $0x11b0] sm:$0xff]
    %v1215 = vld [vmem:[#allocation7 + $0x11b8] sm:$0xff]
    %v1216 = vld [vmem:[#allocation7 + $0x11c0] sm:$0xff]
    %v1217 = vld [vmem:[#allocation7 + $0x11c8] sm:$0xff]
    %v1218 = vld [vmem:[#allocation7 + $0x11d0] sm:$0xff]
    %v1219 = vld [vmem:[#allocation7 + $0x11d8] sm:$0xff]
    %v1220 = vld [vmem:[#allocation7 + $0x11e0] sm:$0xff]
    %v1221 = vld [vmem:[#allocation7 + $0x11e8] sm:$0xff]
    %v1222 = vld [vmem:[#allocation7 + $0x11f0] sm:$0xff]
    %v1223 = vld [vmem:[#allocation7 + $0x11f8] sm:$0xff]
    %v1224 = vld [vmem:[#allocation7 + $0x1200] sm:$0xff]
    %v1225 = vld [vmem:[#allocation7 + $0x1208] sm:$0xff]
    %v1226 = vld [vmem:[#allocation7 + $0x1210] sm:$0xff]
    %v1227 = vld [vmem:[#allocation7 + $0x1218] sm:$0xff]
    %v1228 = vld [vmem:[#allocation7 + $0x1220] sm:$0xff]
    %v1229 = vld [vmem:[#allocation7 + $0x1228] sm:$0xff]
    %v1230 = vld [vmem:[#allocation7 + $0x1230] sm:$0xff]
    %v1231 = vld [vmem:[#allocation7 + $0x1238] sm:$0xff]
    %v1232 = vld [vmem:[#allocation7 + $0x1240] sm:$0xff]
    %v1233 = vld [vmem:[#allocation7 + $0x1248] sm:$0xff]
    %v1234 = vld [vmem:[#allocation7 + $0x1250] sm:$0xff]
    %v1235 = vld [vmem:[#allocation7 + $0x1258] sm:$0xff]
    %v1236 = vld [vmem:[#allocation7 + $0x1260] sm:$0xff]
    %v1237 = vld [vmem:[#allocation7 + $0x1268] sm:$0xff]
    %v1238 = vld [vmem:[#allocation7 + $0x1270] sm:$0xff]
    %v1239 = vld [vmem:[#allocation7 + $0x1278] sm:$0xff]
    %v1240 = vld [vmem:[#allocation7 + $0x1280] sm:$0xff]
    %v1241 = vld [vmem:[#allocation7 + $0x1288] sm:$0xff]
    %v1242 = vld [vmem:[#allocation7 + $0x1290] sm:$0xff]
    %v1243 = vld [vmem:[#allocation7 + $0x1298] sm:$0xff]
    %v1244 = vld [vmem:[#allocation7 + $0x12a0] sm:$0xff]
    %v1245 = vld [vmem:[#allocation7 + $0x12a8] sm:$0xff]
    %v1246 = vld [vmem:[#allocation7 + $0x12b0] sm:$0xff]
    %v1247 = vld [vmem:[#allocation7 + $0x12b8] sm:$0xff]
    %v1248 = vld [vmem:[#allocation7 + $0x12c0] sm:$0xff]
    %v1249 = vld [vmem:[#allocation7 + $0x12c8] sm:$0xff]
    %v1250 = vld [vmem:[#allocation7 + $0x12d0] sm:$0xff]
    %v1251 = vld [vmem:[#allocation7 + $0x12d8] sm:$0xff]
    %v1252 = vld [vmem:[#allocation7 + $0x12e0] sm:$0xff]
    %v1253 = vld [vmem:[#allocation7 + $0x12e8] sm:$0xff]
    %v1254 = vld [vmem:[#allocation7 + $0x12f0] sm:$0xff]
    %v1255 = vld [vmem:[#allocation7 + $0x12f8] sm:$0xff]
    %v1256 = vld [vmem:[#allocation7 + $0x1300] sm:$0xff]
    %v1257 = vld [vmem:[#allocation7 + $0x1308] sm:$0xff]
    %v1258 = vld [vmem:[#allocation7 + $0x1310] sm:$0xff]
    %v1259 = vld [vmem:[#allocation7 + $0x1318] sm:$0xff]
    %v1260 = vld [vmem:[#allocation7 + $0x1320] sm:$0xff]
    %v1261 = vld [vmem:[#allocation7 + $0x1328] sm:$0xff]
    %v1262 = vld [vmem:[#allocation7 + $0x1330] sm:$0xff]
    %v1263 = vld [vmem:[#allocation7 + $0x1338] sm:$0xff]
    %v1264 = vld [vmem:[#allocation7 + $0x1340] sm:$0xff]
    %v1265 = vld [vmem:[#allocation7 + $0x1348] sm:$0xff]
    %v1266 = vld [vmem:[#allocation7 + $0x1350] sm:$0xff]
    %v1267 = vld [vmem:[#allocation7 + $0x1358] sm:$0xff]
    %v1268 = vld [vmem:[#allocation7 + $0x1360] sm:$0xff]
    %v1269 = vld [vmem:[#allocation7 + $0x1368] sm:$0xff]
    %v1270 = vld [vmem:[#allocation7 + $0x1370] sm:$0xff]
    %v1271 = vld [vmem:[#allocation7 + $0x1378] sm:$0xff]
    %v1272 = vld [vmem:[#allocation7 + $0x1380] sm:$0xff]
    %v1273 = vld [vmem:[#allocation7 + $0x1388] sm:$0xff]
    %v1274 = vld [vmem:[#allocation7 + $0x1390] sm:$0xff]
    %v1275 = vld [vmem:[#allocation7 + $0x1398] sm:$0xff]
    %v1276 = vld [vmem:[#allocation7 + $0x13a0] sm:$0xff]
    %v1277 = vld [vmem:[#allocation7 + $0x13a8] sm:$0xff]
    %v1278 = vld [vmem:[#allocation7 + $0x13b0] sm:$0xff]
    %v1279 = vld [vmem:[#allocation7 + $0x13b8] sm:$0xff]
    %v1280 = vld [vmem:[#allocation7 + $0x13c0] sm:$0xff]
    %v1281 = vld [vmem:[#allocation7 + $0x13c8] sm:$0xff]
    %v1282 = vld [vmem:[#allocation7 + $0x13d0] sm:$0xff]
    %v1283 = vld [vmem:[#allocation7 + $0x13d8] sm:$0xff]
    %v1284 = vld [vmem:[#allocation7 + $0x13e0] sm:$0xff]
    %v1285 = vld [vmem:[#allocation7 + $0x13e8] sm:$0xff]
    %v1286 = vld [vmem:[#allocation7 + $0x13f0] sm:$0xff]
    %v1287 = vld [vmem:[#allocation7 + $0x13f8] sm:$0xff]
    %v1288 = vld [vmem:[#allocation7 + $0x1400] sm:$0xff]
    %v1289 = vld [vmem:[#allocation7 + $0x1408] sm:$0xff]
    %v1290 = vld [vmem:[#allocation7 + $0x1410] sm:$0xff]
    %v1291 = vld [vmem:[#allocation7 + $0x1418] sm:$0xff]
    %v1292 = vld [vmem:[#allocation7 + $0x1420] sm:$0xff]
    %v1293 = vld [vmem:[#allocation7 + $0x1428] sm:$0xff]
    %v1294 = vld [vmem:[#allocation7 + $0x1430] sm:$0xff]
    %v1295 = vld [vmem:[#allocation7 + $0x1438] sm:$0xff]
    %v1296 = vld [vmem:[#allocation7 + $0x1440] sm:$0xff]
    %v1297 = vld [vmem:[#allocation7 + $0x1448] sm:$0xff]
    %v1298 = vld [vmem:[#allocation7 + $0x1450] sm:$0xff]
    %v1299 = vld [vmem:[#allocation7 + $0x1458] sm:$0xff]
    %v1300 = vld [vmem:[#allocation7 + $0x1460] sm:$0xff]
    %v1301 = vld [vmem:[#allocation7 + $0x1468] sm:$0xff]
    %v1302 = vld [vmem:[#allocation7 + $0x1470] sm:$0xff]
    %v1303 = vld [vmem:[#allocation7 + $0x1478] sm:$0xff]
    %v1304 = vld [vmem:[#allocation7 + $0x1480] sm:$0xff]
    %v1305 = vld [vmem:[#allocation7 + $0x1488] sm:$0xff]
    %v1306 = vld [vmem:[#allocation7 + $0x1490] sm:$0xff]
    %v1307 = vld [vmem:[#allocation7 + $0x1498] sm:$0xff]
    %v1308 = vld [vmem:[#allocation7 + $0x14a0] sm:$0xff]
    %v1309 = vld [vmem:[#allocation7 + $0x14a8] sm:$0xff]
    %v1310 = vld [vmem:[#allocation7 + $0x14b0] sm:$0xff]
    %v1311 = vld [vmem:[#allocation7 + $0x14b8] sm:$0xff]
    %v1312 = vld [vmem:[#allocation7 + $0x14c0] sm:$0xff]
    %v1313 = vld [vmem:[#allocation7 + $0x14c8] sm:$0xff]
    %v1314 = vld [vmem:[#allocation7 + $0x14d0] sm:$0xff]
    %v1315 = vld [vmem:[#allocation7 + $0x14d8] sm:$0xff]
    %v1316 = vld [vmem:[#allocation7 + $0x14e0] sm:$0xff]
    %v1317 = vld [vmem:[#allocation7 + $0x14e8] sm:$0xff]
    %v1318 = vld [vmem:[#allocation7 + $0x14f0] sm:$0xff]
    %v1319 = vld [vmem:[#allocation7 + $0x14f8] sm:$0xff]
    %v1320 = vld [vmem:[#allocation7 + $0x1500] sm:$0xff]
    %v1321 = vld [vmem:[#allocation7 + $0x1508] sm:$0xff]
    %v1322 = vld [vmem:[#allocation7 + $0x1510] sm:$0xff]
    %v1323 = vld [vmem:[#allocation7 + $0x1518] sm:$0xff]
    %v1324 = vld [vmem:[#allocation7 + $0x1520] sm:$0xff]
    %v1325 = vld [vmem:[#allocation7 + $0x1528] sm:$0xff]
    %v1326 = vld [vmem:[#allocation7 + $0x1530] sm:$0xff]
    %v1327 = vld [vmem:[#allocation7 + $0x1538] sm:$0xff]
    %v1328 = vld [vmem:[#allocation7 + $0x1540] sm:$0xff]
    %v1329 = vld [vmem:[#allocation7 + $0x1548] sm:$0xff]
    %v1330 = vld [vmem:[#allocation7 + $0x1550] sm:$0xff]
    %v1331 = vld [vmem:[#allocation7 + $0x1558] sm:$0xff]
    %v1332 = vld [vmem:[#allocation7 + $0x1560] sm:$0xff]
    %v1333 = vld [vmem:[#allocation7 + $0x1568] sm:$0xff]
    %v1334 = vld [vmem:[#allocation7 + $0x1570] sm:$0xff]
    %v1335 = vld [vmem:[#allocation7 + $0x1578] sm:$0xff]
    %v1336 = vld [vmem:[#allocation7 + $0x1580] sm:$0xff]
    %v1337 = vld [vmem:[#allocation7 + $0x1588] sm:$0xff]
    %v1338 = vld [vmem:[#allocation7 + $0x1590] sm:$0xff]
    %v1339 = vld [vmem:[#allocation7 + $0x1598] sm:$0xff]
    %v1340 = vld [vmem:[#allocation7 + $0x15a0] sm:$0xff]
    %v1341 = vld [vmem:[#allocation7 + $0x15a8] sm:$0xff]
    %v1342 = vld [vmem:[#allocation7 + $0x15b0] sm:$0xff]
    %v1343 = vld [vmem:[#allocation7 + $0x15b8] sm:$0xff]
    %v1344 = vld [vmem:[#allocation7 + $0x15c0] sm:$0xff]
    %v1345 = vld [vmem:[#allocation7 + $0x15c8] sm:$0xff]
    %v1346 = vld [vmem:[#allocation7 + $0x15d0] sm:$0xff]
    %v1347 = vld [vmem:[#allocation7 + $0x15d8] sm:$0xff]
    %v1348 = vld [vmem:[#allocation7 + $0x15e0] sm:$0xff]
    %v1349 = vld [vmem:[#allocation7 + $0x15e8] sm:$0xff]
    %v1350 = vld [vmem:[#allocation7 + $0x15f0] sm:$0xff]
    %v1351 = vld [vmem:[#allocation7 + $0x15f8] sm:$0xff]
    %v1352 = vld [vmem:[#allocation7 + $0x1600] sm:$0xff]
    %v1353 = vld [vmem:[#allocation7 + $0x1608] sm:$0xff]
    %v1354 = vld [vmem:[#allocation7 + $0x1610] sm:$0xff]
    %v1355 = vld [vmem:[#allocation7 + $0x1618] sm:$0xff]
    %v1356 = vld [vmem:[#allocation7 + $0x1620] sm:$0xff]
    %v1357 = vld [vmem:[#allocation7 + $0x1628] sm:$0xff]
    %v1358 = vld [vmem:[#allocation7 + $0x1630] sm:$0xff]
    %v1359 = vld [vmem:[#allocation7 + $0x1638] sm:$0xff]
    %v1360 = vld [vmem:[#allocation7 + $0x1640] sm:$0xff]
    %v1361 = vld [vmem:[#allocation7 + $0x1648] sm:$0xff]
    %v1362 = vld [vmem:[#allocation7 + $0x1650] sm:$0xff]
    %v1363 = vld [vmem:[#allocation7 + $0x1658] sm:$0xff]
    %v1364 = vld [vmem:[#allocation7 + $0x1660] sm:$0xff]
    %v1365 = vld [vmem:[#allocation7 + $0x1668] sm:$0xff]
    %v1366 = vld [vmem:[#allocation7 + $0x1670] sm:$0xff]
    %v1367 = vld [vmem:[#allocation7 + $0x1678] sm:$0xff]
    %v1368 = vld [vmem:[#allocation7 + $0x1680] sm:$0xff]
    %v1369 = vld [vmem:[#allocation7 + $0x1688] sm:$0xff]
    %v1370 = vld [vmem:[#allocation7 + $0x1690] sm:$0xff]
    %v1371 = vld [vmem:[#allocation7 + $0x1698] sm:$0xff]
    %v1372 = vld [vmem:[#allocation7 + $0x16a0] sm:$0xff]
    %v1373 = vld [vmem:[#allocation7 + $0x16a8] sm:$0xff]
    %v1374 = vld [vmem:[#allocation7 + $0x16b0] sm:$0xff]
    %v1375 = vld [vmem:[#allocation7 + $0x16b8] sm:$0xff]
    %v1376 = vld [vmem:[#allocation7 + $0x16c0] sm:$0xff]
    %v1377 = vld [vmem:[#allocation7 + $0x16c8] sm:$0xff]
    %v1378 = vld [vmem:[#allocation7 + $0x16d0] sm:$0xff]
    %v1379 = vld [vmem:[#allocation7 + $0x16d8] sm:$0xff]
    %v1380 = vld [vmem:[#allocation7 + $0x16e0] sm:$0xff]
    %v1381 = vld [vmem:[#allocation7 + $0x16e8] sm:$0xff]
    %v1382 = vld [vmem:[#allocation7 + $0x16f0] sm:$0xff]
    %v1383 = vld [vmem:[#allocation7 + $0x16f8] sm:$0xff]
    %v1384 = vld [vmem:[#allocation7 + $0x1700] sm:$0xff]
    %v1385 = vld [vmem:[#allocation7 + $0x1708] sm:$0xff]
    %v1386 = vld [vmem:[#allocation7 + $0x1710] sm:$0xff]
    %v1387 = vld [vmem:[#allocation7 + $0x1718] sm:$0xff]
    %v1388 = vld [vmem:[#allocation7 + $0x1720] sm:$0xff]
    %v1389 = vld [vmem:[#allocation7 + $0x1728] sm:$0xff]
    %v1390 = vld [vmem:[#allocation7 + $0x1730] sm:$0xff]
    %v1391 = vld [vmem:[#allocation7 + $0x1738] sm:$0xff]
    %v1392 = vld [vmem:[#allocation7 + $0x1740] sm:$0xff]
    %v1393 = vld [vmem:[#allocation7 + $0x1748] sm:$0xff]
    %v1394 = vld [vmem:[#allocation7 + $0x1750] sm:$0xff]
    %v1395 = vld [vmem:[#allocation7 + $0x1758] sm:$0xff]
    %v1396 = vld [vmem:[#allocation7 + $0x1760] sm:$0xff]
    %v1397 = vld [vmem:[#allocation7 + $0x1768] sm:$0xff]
    %v1398 = vld [vmem:[#allocation7 + $0x1770] sm:$0xff]
    %v1399 = vld [vmem:[#allocation7 + $0x1778] sm:$0xff]
    %v1400 = vld [vmem:[#allocation7 + $0x1780] sm:$0xff]
    %v1401 = vld [vmem:[#allocation7 + $0x1788] sm:$0xff]
    %v1402 = vld [vmem:[#allocation7 + $0x1790] sm:$0xff]
    %v1403 = vld [vmem:[#allocation7 + $0x1798] sm:$0xff]
    %v1404 = vld [vmem:[#allocation7 + $0x17a0] sm:$0xff]
    %v1405 = vld [vmem:[#allocation7 + $0x17a8] sm:$0xff]
    %v1406 = vld [vmem:[#allocation7 + $0x17b0] sm:$0xff]
    %v1407 = vld [vmem:[#allocation7 + $0x17b8] sm:$0xff]
    %v1408 = vld [vmem:[#allocation7 + $0x17c0] sm:$0xff]
    %v1409 = vld [vmem:[#allocation7 + $0x17c8] sm:$0xff]
    %v1410 = vld [vmem:[#allocation7 + $0x17d0] sm:$0xff]
    %v1411 = vld [vmem:[#allocation7 + $0x17d8] sm:$0xff]
    %v1412 = vld [vmem:[#allocation7 + $0x17e0] sm:$0xff]
    %v1413 = vld [vmem:[#allocation7 + $0x17e8] sm:$0xff]
    %v1414 = vld [vmem:[#allocation7 + $0x17f0] sm:$0xff]
    %v1415 = vld [vmem:[#allocation7 + $0x17f8] sm:$0xff]
    %v1416 = vld [vmem:[#allocation7 + $0x1800] sm:$0xff]
    %v1417 = vld [vmem:[#allocation7 + $0x1808] sm:$0xff]
    %v1418 = vld [vmem:[#allocation7 + $0x1810] sm:$0xff]
    %v1419 = vld [vmem:[#allocation7 + $0x1818] sm:$0xff]
    %v1420 = vld [vmem:[#allocation7 + $0x1820] sm:$0xff]
    %v1421 = vld [vmem:[#allocation7 + $0x1828] sm:$0xff]
    %v1422 = vld [vmem:[#allocation7 + $0x1830] sm:$0xff]
    %v1423 = vld [vmem:[#allocation7 + $0x1838] sm:$0xff]
    %v1424 = vld [vmem:[#allocation7 + $0x1840] sm:$0xff]
    %v1425 = vld [vmem:[#allocation7 + $0x1848] sm:$0xff]
    %v1426 = vld [vmem:[#allocation7 + $0x1850] sm:$0xff]
    %v1427 = vld [vmem:[#allocation7 + $0x1858] sm:$0xff]
    %v1428 = vld [vmem:[#allocation7 + $0x1860] sm:$0xff]
    %v1429 = vld [vmem:[#allocation7 + $0x1868] sm:$0xff]
    %v1430 = vld [vmem:[#allocation7 + $0x1870] sm:$0xff]
    %v1431 = vld [vmem:[#allocation7 + $0x1878] sm:$0xff]
    %v1432 = vld [vmem:[#allocation7 + $0x1880] sm:$0xff]
    %v1433 = vld [vmem:[#allocation7 + $0x1888] sm:$0xff]
    %v1434 = vld [vmem:[#allocation7 + $0x1890] sm:$0xff]
    %v1435 = vld [vmem:[#allocation7 + $0x1898] sm:$0xff]
    %v1436 = vld [vmem:[#allocation7 + $0x18a0] sm:$0xff]
    %v1437 = vld [vmem:[#allocation7 + $0x18a8] sm:$0xff]
    %v1438 = vld [vmem:[#allocation7 + $0x18b0] sm:$0xff]
    %v1439 = vld [vmem:[#allocation7 + $0x18b8] sm:$0xff]
    %v1440 = vld [vmem:[#allocation7 + $0x18c0] sm:$0xff]
    %v1441 = vld [vmem:[#allocation7 + $0x18c8] sm:$0xff]
    %v1442 = vld [vmem:[#allocation7 + $0x18d0] sm:$0xff]
    %v1443 = vld [vmem:[#allocation7 + $0x18d8] sm:$0xff]
    %v1444 = vld [vmem:[#allocation7 + $0x18e0] sm:$0xff]
    %v1445 = vld [vmem:[#allocation7 + $0x18e8] sm:$0xff]
    %v1446 = vld [vmem:[#allocation7 + $0x18f0] sm:$0xff]
    %v1447 = vld [vmem:[#allocation7 + $0x18f8] sm:$0xff]
    %v1448 = vld [vmem:[#allocation7 + $0x1900] sm:$0xff]
    %v1449 = vld [vmem:[#allocation7 + $0x1908] sm:$0xff]
    %v1450 = vld [vmem:[#allocation7 + $0x1910] sm:$0xff]
    %v1451 = vld [vmem:[#allocation7 + $0x1918] sm:$0xff]
    %v1452 = vld [vmem:[#allocation7 + $0x1920] sm:$0xff]
    %v1453 = vld [vmem:[#allocation7 + $0x1928] sm:$0xff]
    %v1454 = vld [vmem:[#allocation7 + $0x1930] sm:$0xff]
    %v1455 = vld [vmem:[#allocation7 + $0x1938] sm:$0xff]
    %v1456 = vld [vmem:[#allocation7 + $0x1940] sm:$0xff]
    %v1457 = vld [vmem:[#allocation7 + $0x1948] sm:$0xff]
    %v1458 = vld [vmem:[#allocation7 + $0x1950] sm:$0xff]
    %v1459 = vld [vmem:[#allocation7 + $0x1958] sm:$0xff]
    %v1460 = vld [vmem:[#allocation7 + $0x1960] sm:$0xff]
    %v1461 = vld [vmem:[#allocation7 + $0x1968] sm:$0xff]
    %v1462 = vld [vmem:[#allocation7 + $0x1970] sm:$0xff]
    %v1463 = vld [vmem:[#allocation7 + $0x1978] sm:$0xff]
    %v1464 = vld [vmem:[#allocation7 + $0x1980] sm:$0xff]
    %v1465 = vld [vmem:[#allocation7 + $0x1988] sm:$0xff]
    %v1466 = vld [vmem:[#allocation7 + $0x1990] sm:$0xff]
    %v1467 = vld [vmem:[#allocation7 + $0x1998] sm:$0xff]
    %v1468 = vld [vmem:[#allocation7 + $0x19a0] sm:$0xff]
    %v1469 = vld [vmem:[#allocation7 + $0x19a8] sm:$0xff]
    %v1470 = vld [vmem:[#allocation7 + $0x19b0] sm:$0xff]
    %v1471 = vld [vmem:[#allocation7 + $0x19b8] sm:$0xff]
    %v1472 = vld [vmem:[#allocation7 + $0x19c0] sm:$0xff]
    %v1473 = vld [vmem:[#allocation7 + $0x19c8] sm:$0xff]
    %v1474 = vld [vmem:[#allocation7 + $0x19d0] sm:$0xff]
    %v1475 = vld [vmem:[#allocation7 + $0x19d8] sm:$0xff]
    %v1476 = vld [vmem:[#allocation7 + $0x19e0] sm:$0xff]
    %v1477 = vld [vmem:[#allocation7 + $0x19e8] sm:$0xff]
    %v1478 = vld [vmem:[#allocation7 + $0x19f0] sm:$0xff]
    %v1479 = vld [vmem:[#allocation7 + $0x19f8] sm:$0xff]
    %v2312 = vunpack.c.l.b16 %v648
    %v2313 = vunpack.c.h.b16 %v648
    %v2314 = vunpack.c.l.b16 %v649
    %v2315 = vunpack.c.h.b16 %v649
    %v2316 = vunpack.c.l.b16 %v650
    %v2317 = vunpack.c.h.b16 %v650
    %v2318 = vunpack.c.l.b16 %v651
    %v2319 = vunpack.c.h.b16 %v651
    %v2320 = vunpack.c.l.b16 %v652
    %v2321 = vunpack.c.h.b16 %v652
    %v2322 = vunpack.c.l.b16 %v653
    %v2323 = vunpack.c.h.b16 %v653
    %v2324 = vunpack.c.l.b16 %v654
    %v2325 = vunpack.c.h.b16 %v654
    %v2326 = vunpack.c.l.b16 %v655
    %v2327 = vunpack.c.h.b16 %v655
    %v2328 = vunpack.c.l.b16 %v656
    %v2329 = vunpack.c.h.b16 %v656
    %v2330 = vunpack.c.l.b16 %v657
    %v2331 = vunpack.c.h.b16 %v657
    %v2332 = vunpack.c.l.b16 %v658
    %v2333 = vunpack.c.h.b16 %v658
    %v2334 = vunpack.c.l.b16 %v659
    %v2335 = vunpack.c.h.b16 %v659
    %v2336 = vunpack.c.l.b16 %v660
    %v2337 = vunpack.c.h.b16 %v660
    %v2338 = vunpack.c.l.b16 %v661
    %v2339 = vunpack.c.h.b16 %v661
    %v2340 = vunpack.c.l.b16 %v662
    %v2341 = vunpack.c.h.b16 %v662
    %v2342 = vunpack.c.l.b16 %v663
    %v2343 = vunpack.c.h.b16 %v663
    %v2344 = vunpack.c.l.b16 %v664
    %v2345 = vunpack.c.h.b16 %v664
    %v2346 = vunpack.c.l.b16 %v665
    %v2347 = vunpack.c.h.b16 %v665
    %v2348 = vunpack.c.l.b16 %v666
    %v2349 = vunpack.c.h.b16 %v666
    %v2350 = vunpack.c.l.b16 %v667
    %v2351 = vunpack.c.h.b16 %v667
    %v2352 = vunpack.c.l.b16 %v668
    %v2353 = vunpack.c.h.b16 %v668
    %v2354 = vunpack.c.l.b16 %v669
    %v2355 = vunpack.c.h.b16 %v669
    %v2356 = vunpack.c.l.b16 %v670
    %v2357 = vunpack.c.h.b16 %v670
    %v2358 = vunpack.c.l.b16 %v671
    %v2359 = vunpack.c.h.b16 %v671
    %v2360 = vunpack.c.l.b16 %v672
    %v2361 = vunpack.c.h.b16 %v672
    %v2362 = vunpack.c.l.b16 %v673
    %v2363 = vunpack.c.h.b16 %v673
    %v2364 = vunpack.c.l.b16 %v674
    %v2365 = vunpack.c.h.b16 %v674
    %v2366 = vunpack.c.l.b16 %v675
    %v2367 = vunpack.c.h.b16 %v675
    %v2368 = vunpack.c.l.b16 %v676
    %v2369 = vunpack.c.h.b16 %v676
    %v2370 = vunpack.c.l.b16 %v677
    %v2371 = vunpack.c.h.b16 %v677
    %v2372 = vunpack.c.l.b16 %v678
    %v2373 = vunpack.c.h.b16 %v678
    %v2374 = vunpack.c.l.b16 %v679
    %v2375 = vunpack.c.h.b16 %v679
    %v2376 = vunpack.c.l.b16 %v680
    %v2377 = vunpack.c.h.b16 %v680
    %v2378 = vunpack.c.l.b16 %v681
    %v2379 = vunpack.c.h.b16 %v681
    %v2380 = vunpack.c.l.b16 %v682
    %v2381 = vunpack.c.h.b16 %v682
    %v2382 = vunpack.c.l.b16 %v683
    %v2383 = vunpack.c.h.b16 %v683
    %v2384 = vunpack.c.l.b16 %v684
    %v2385 = vunpack.c.h.b16 %v684
    %v2386 = vunpack.c.l.b16 %v685
    %v2387 = vunpack.c.h.b16 %v685
    %v2388 = vunpack.c.l.b16 %v686
    %v2389 = vunpack.c.h.b16 %v686
    %v2390 = vunpack.c.l.b16 %v687
    %v2391 = vunpack.c.h.b16 %v687
    %v2392 = vunpack.c.l.b16 %v688
    %v2393 = vunpack.c.h.b16 %v688
    %v2394 = vunpack.c.l.b16 %v689
    %v2395 = vunpack.c.h.b16 %v689
    %v2396 = vunpack.c.l.b16 %v690
    %v2397 = vunpack.c.h.b16 %v690
    %v2398 = vunpack.c.l.b16 %v691
    %v2399 = vunpack.c.h.b16 %v691
    %v2400 = vunpack.c.l.b16 %v692
    %v2401 = vunpack.c.h.b16 %v692
    %v2402 = vunpack.c.l.b16 %v693
    %v2403 = vunpack.c.h.b16 %v693
    %v2404 = vunpack.c.l.b16 %v694
    %v2405 = vunpack.c.h.b16 %v694
    %v2406 = vunpack.c.l.b16 %v695
    %v2407 = vunpack.c.h.b16 %v695
    %v2408 = vunpack.c.l.b16 %v696
    %v2409 = vunpack.c.h.b16 %v696
    %v2410 = vunpack.c.l.b16 %v697
    %v2411 = vunpack.c.h.b16 %v697
    %v2412 = vunpack.c.l.b16 %v698
    %v2413 = vunpack.c.h.b16 %v698
    %v2414 = vunpack.c.l.b16 %v699
    %v2415 = vunpack.c.h.b16 %v699
    %v2416 = vunpack.c.l.b16 %v700
    %v2417 = vunpack.c.h.b16 %v700
    %v2418 = vunpack.c.l.b16 %v701
    %v2419 = vunpack.c.h.b16 %v701
    %v2420 = vunpack.c.l.b16 %v702
    %v2421 = vunpack.c.h.b16 %v702
    %v2422 = vunpack.c.l.b16 %v703
    %v2423 = vunpack.c.h.b16 %v703
    %v2424 = vunpack.c.l.b16 %v704
    %v2425 = vunpack.c.h.b16 %v704
    %v2426 = vunpack.c.l.b16 %v705
    %v2427 = vunpack.c.h.b16 %v705
    %v2428 = vunpack.c.l.b16 %v706
    %v2429 = vunpack.c.h.b16 %v706
    %v2430 = vunpack.c.l.b16 %v707
    %v2431 = vunpack.c.h.b16 %v707
    %v2432 = vunpack.c.l.b16 %v708
    %v2433 = vunpack.c.h.b16 %v708
    %v2434 = vunpack.c.l.b16 %v709
    %v2435 = vunpack.c.h.b16 %v709
    %v2436 = vunpack.c.l.b16 %v710
    %v2437 = vunpack.c.h.b16 %v710
    %v2438 = vunpack.c.l.b16 %v711
    %v2439 = vunpack.c.h.b16 %v711
    %v2440 = vunpack.c.l.b16 %v712
    %v2441 = vunpack.c.h.b16 %v712
    %v2442 = vunpack.c.l.b16 %v713
    %v2443 = vunpack.c.h.b16 %v713
    %v2444 = vunpack.c.l.b16 %v714
    %v2445 = vunpack.c.h.b16 %v714
    %v2446 = vunpack.c.l.b16 %v715
    %v2447 = vunpack.c.h.b16 %v715
    %v2448 = vunpack.c.l.b16 %v716
    %v2449 = vunpack.c.h.b16 %v716
    %v2450 = vunpack.c.l.b16 %v717
    %v2451 = vunpack.c.h.b16 %v717
    %v2452 = vunpack.c.l.b16 %v718
    %v2453 = vunpack.c.h.b16 %v718
    %v2454 = vunpack.c.l.b16 %v719
    %v2455 = vunpack.c.h.b16 %v719
    %v2456 = vunpack.c.l.b16 %v720
    %v2457 = vunpack.c.h.b16 %v720
    %v2458 = vunpack.c.l.b16 %v721
    %v2459 = vunpack.c.h.b16 %v721
    %v2460 = vunpack.c.l.b16 %v722
    %v2461 = vunpack.c.h.b16 %v722
    %v2462 = vunpack.c.l.b16 %v723
    %v2463 = vunpack.c.h.b16 %v723
    %v2464 = vunpack.c.l.b16 %v724
    %v2465 = vunpack.c.h.b16 %v724
    %v2466 = vunpack.c.l.b16 %v725
    %v2467 = vunpack.c.h.b16 %v725
    %v2468 = vunpack.c.l.b16 %v726
    %v2469 = vunpack.c.h.b16 %v726
    %v2470 = vunpack.c.l.b16 %v727
    %v2471 = vunpack.c.h.b16 %v727
    %v2472 = vunpack.c.l.b16 %v728
    %v2473 = vunpack.c.h.b16 %v728
    %v2474 = vunpack.c.l.b16 %v729
    %v2475 = vunpack.c.h.b16 %v729
    %v2476 = vunpack.c.l.b16 %v730
    %v2477 = vunpack.c.h.b16 %v730
    %v2478 = vunpack.c.l.b16 %v731
    %v2479 = vunpack.c.h.b16 %v731
    %v2480 = vunpack.c.l.b16 %v732
    %v2481 = vunpack.c.h.b16 %v732
    %v2482 = vunpack.c.l.b16 %v733
    %v2483 = vunpack.c.h.b16 %v733
    %v2484 = vunpack.c.l.b16 %v734
    %v2485 = vunpack.c.h.b16 %v734
    %v2486 = vunpack.c.l.b16 %v735
    %v2487 = vunpack.c.h.b16 %v735
    %v2488 = vunpack.c.l.b16 %v736
    %v2489 = vunpack.c.h.b16 %v736
    %v2490 = vunpack.c.l.b16 %v737
    %v2491 = vunpack.c.h.b16 %v737
    %v2492 = vunpack.c.l.b16 %v738
    %v2493 = vunpack.c.h.b16 %v738
    %v2494 = vunpack.c.l.b16 %v739
    %v2495 = vunpack.c.h.b16 %v739
    %v2496 = vunpack.c.l.b16 %v740
    %v2497 = vunpack.c.h.b16 %v740
    %v2498 = vunpack.c.l.b16 %v741
    %v2499 = vunpack.c.h.b16 %v741
    %v2500 = vunpack.c.l.b16 %v742
    %v2501 = vunpack.c.h.b16 %v742
    %v2502 = vunpack.c.l.b16 %v743
    %v2503 = vunpack.c.h.b16 %v743
    %v2504 = vunpack.c.l.b16 %v744
    %v2505 = vunpack.c.h.b16 %v744
    %v2506 = vunpack.c.l.b16 %v745
    %v2507 = vunpack.c.h.b16 %v745
    %v2508 = vunpack.c.l.b16 %v746
    %v2509 = vunpack.c.h.b16 %v746
    %v2510 = vunpack.c.l.b16 %v747
    %v2511 = vunpack.c.h.b16 %v747
    %v2512 = vunpack.c.l.b16 %v748
    %v2513 = vunpack.c.h.b16 %v748
    %v2514 = vunpack.c.l.b16 %v749
    %v2515 = vunpack.c.h.b16 %v749
    %v2516 = vunpack.c.l.b16 %v750
    %v2517 = vunpack.c.h.b16 %v750
    %v2518 = vunpack.c.l.b16 %v751
    %v2519 = vunpack.c.h.b16 %v751
    %v2520 = vunpack.c.l.b16 %v752
    %v2521 = vunpack.c.h.b16 %v752
    %v2522 = vunpack.c.l.b16 %v753
    %v2523 = vunpack.c.h.b16 %v753
    %v2524 = vunpack.c.l.b16 %v754
    %v2525 = vunpack.c.h.b16 %v754
    %v2526 = vunpack.c.l.b16 %v755
    %v2527 = vunpack.c.h.b16 %v755
    %v2528 = vunpack.c.l.b16 %v756
    %v2529 = vunpack.c.h.b16 %v756
    %v2530 = vunpack.c.l.b16 %v757
    %v2531 = vunpack.c.h.b16 %v757
    %v2532 = vunpack.c.l.b16 %v758
    %v2533 = vunpack.c.h.b16 %v758
    %v2534 = vunpack.c.l.b16 %v759
    %v2535 = vunpack.c.h.b16 %v759
    %v2536 = vunpack.c.l.b16 %v760
    %v2537 = vunpack.c.h.b16 %v760
    %v2538 = vunpack.c.l.b16 %v761
    %v2539 = vunpack.c.h.b16 %v761
    %v2540 = vunpack.c.l.b16 %v762
    %v2541 = vunpack.c.h.b16 %v762
    %v2542 = vunpack.c.l.b16 %v763
    %v2543 = vunpack.c.h.b16 %v763
    %v2544 = vunpack.c.l.b16 %v764
    %v2545 = vunpack.c.h.b16 %v764
    %v2546 = vunpack.c.l.b16 %v765
    %v2547 = vunpack.c.h.b16 %v765
    %v2548 = vunpack.c.l.b16 %v766
    %v2549 = vunpack.c.h.b16 %v766
    %v2550 = vunpack.c.l.b16 %v767
    %v2551 = vunpack.c.h.b16 %v767
    %v2552 = vunpack.c.l.b16 %v768
    %v2553 = vunpack.c.h.b16 %v768
    %v2554 = vunpack.c.l.b16 %v769
    %v2555 = vunpack.c.h.b16 %v769
    %v2556 = vunpack.c.l.b16 %v770
    %v2557 = vunpack.c.h.b16 %v770
    %v2558 = vunpack.c.l.b16 %v771
    %v2559 = vunpack.c.h.b16 %v771
    %v2560 = vunpack.c.l.b16 %v772
    %v2561 = vunpack.c.h.b16 %v772
    %v2562 = vunpack.c.l.b16 %v773
    %v2563 = vunpack.c.h.b16 %v773
    %v2564 = vunpack.c.l.b16 %v774
    %v2565 = vunpack.c.h.b16 %v774
    %v2566 = vunpack.c.l.b16 %v775
    %v2567 = vunpack.c.h.b16 %v775
    %v2568 = vunpack.c.l.b16 %v776
    %v2569 = vunpack.c.h.b16 %v776
    %v2570 = vunpack.c.l.b16 %v777
    %v2571 = vunpack.c.h.b16 %v777
    %v2572 = vunpack.c.l.b16 %v778
    %v2573 = vunpack.c.h.b16 %v778
    %v2574 = vunpack.c.l.b16 %v779
    %v2575 = vunpack.c.h.b16 %v779
    %v2576 = vunpack.c.l.b16 %v780
    %v2577 = vunpack.c.h.b16 %v780
    %v2578 = vunpack.c.l.b16 %v781
    %v2579 = vunpack.c.h.b16 %v781
    %v2580 = vunpack.c.l.b16 %v782
    %v2581 = vunpack.c.h.b16 %v782
    %v2582 = vunpack.c.l.b16 %v783
    %v2583 = vunpack.c.h.b16 %v783
    %v2584 = vunpack.c.l.b16 %v784
    %v2585 = vunpack.c.h.b16 %v784
    %v2586 = vunpack.c.l.b16 %v785
    %v2587 = vunpack.c.h.b16 %v785
    %v2588 = vunpack.c.l.b16 %v786
    %v2589 = vunpack.c.h.b16 %v786
    %v2590 = vunpack.c.l.b16 %v787
    %v2591 = vunpack.c.h.b16 %v787
    %v2592 = vunpack.c.l.b16 %v788
    %v2593 = vunpack.c.h.b16 %v788
    %v2594 = vunpack.c.l.b16 %v789
    %v2595 = vunpack.c.h.b16 %v789
    %v2596 = vunpack.c.l.b16 %v790
    %v2597 = vunpack.c.h.b16 %v790
    %v2598 = vunpack.c.l.b16 %v791
    %v2599 = vunpack.c.h.b16 %v791
    %v2600 = vunpack.c.l.b16 %v792
    %v2601 = vunpack.c.h.b16 %v792
    %v2602 = vunpack.c.l.b16 %v793
    %v2603 = vunpack.c.h.b16 %v793
    %v2604 = vunpack.c.l.b16 %v794
    %v2605 = vunpack.c.h.b16 %v794
    %v2606 = vunpack.c.l.b16 %v795
    %v2607 = vunpack.c.h.b16 %v795
    %v2608 = vunpack.c.l.b16 %v796
    %v2609 = vunpack.c.h.b16 %v796
    %v2610 = vunpack.c.l.b16 %v797
    %v2611 = vunpack.c.h.b16 %v797
    %v2612 = vunpack.c.l.b16 %v798
    %v2613 = vunpack.c.h.b16 %v798
    %v2614 = vunpack.c.l.b16 %v799
    %v2615 = vunpack.c.h.b16 %v799
    %v2616 = vunpack.c.l.b16 %v800
    %v2617 = vunpack.c.h.b16 %v800
    %v2618 = vunpack.c.l.b16 %v801
    %v2619 = vunpack.c.h.b16 %v801
    %v2620 = vunpack.c.l.b16 %v802
    %v2621 = vunpack.c.h.b16 %v802
    %v2622 = vunpack.c.l.b16 %v803
    %v2623 = vunpack.c.h.b16 %v803
    %v2624 = vunpack.c.l.b16 %v804
    %v2625 = vunpack.c.h.b16 %v804
    %v2626 = vunpack.c.l.b16 %v805
    %v2627 = vunpack.c.h.b16 %v805
    %v2628 = vunpack.c.l.b16 %v806
    %v2629 = vunpack.c.h.b16 %v806
    %v2630 = vunpack.c.l.b16 %v807
    %v2631 = vunpack.c.h.b16 %v807
    %v2632 = vunpack.c.l.b16 %v808
    %v2633 = vunpack.c.h.b16 %v808
    %v2634 = vunpack.c.l.b16 %v809
    %v2635 = vunpack.c.h.b16 %v809
    %v2636 = vunpack.c.l.b16 %v810
    %v2637 = vunpack.c.h.b16 %v810
    %v2638 = vunpack.c.l.b16 %v811
    %v2639 = vunpack.c.h.b16 %v811
    %v2640 = vunpack.c.l.b16 %v812
    %v2641 = vunpack.c.h.b16 %v812
    %v2642 = vunpack.c.l.b16 %v813
    %v2643 = vunpack.c.h.b16 %v813
    %v2644 = vunpack.c.l.b16 %v814
    %v2645 = vunpack.c.h.b16 %v814
    %v2646 = vunpack.c.l.b16 %v815
    %v2647 = vunpack.c.h.b16 %v815
    %v2648 = vunpack.c.l.b16 %v816
    %v2649 = vunpack.c.h.b16 %v816
    %v2650 = vunpack.c.l.b16 %v817
    %v2651 = vunpack.c.h.b16 %v817
    %v2652 = vunpack.c.l.b16 %v818
    %v2653 = vunpack.c.h.b16 %v818
    %v2654 = vunpack.c.l.b16 %v819
    %v2655 = vunpack.c.h.b16 %v819
    %v2656 = vunpack.c.l.b16 %v820
    %v2657 = vunpack.c.h.b16 %v820
    %v2658 = vunpack.c.l.b16 %v821
    %v2659 = vunpack.c.h.b16 %v821
    %v2660 = vunpack.c.l.b16 %v822
    %v2661 = vunpack.c.h.b16 %v822
    %v2662 = vunpack.c.l.b16 %v823
    %v2663 = vunpack.c.h.b16 %v823
    %v2664 = vunpack.c.l.b16 %v824
    %v2665 = vunpack.c.h.b16 %v824
    %v2666 = vunpack.c.l.b16 %v825
    %v2667 = vunpack.c.h.b16 %v825
    %v2668 = vunpack.c.l.b16 %v826
    %v2669 = vunpack.c.h.b16 %v826
    %v2670 = vunpack.c.l.b16 %v827
    %v2671 = vunpack.c.h.b16 %v827
    %v2672 = vunpack.c.l.b16 %v828
    %v2673 = vunpack.c.h.b16 %v828
    %v2674 = vunpack.c.l.b16 %v829
    %v2675 = vunpack.c.h.b16 %v829
    %v2676 = vunpack.c.l.b16 %v830
    %v2677 = vunpack.c.h.b16 %v830
    %v2678 = vunpack.c.l.b16 %v831
    %v2679 = vunpack.c.h.b16 %v831
    %v2680 = vunpack.c.l.b16 %v832
    %v2681 = vunpack.c.h.b16 %v832
    %v2682 = vunpack.c.l.b16 %v833
    %v2683 = vunpack.c.h.b16 %v833
    %v2684 = vunpack.c.l.b16 %v834
    %v2685 = vunpack.c.h.b16 %v834
    %v2686 = vunpack.c.l.b16 %v835
    %v2687 = vunpack.c.h.b16 %v835
    %v2688 = vunpack.c.l.b16 %v836
    %v2689 = vunpack.c.h.b16 %v836
    %v2690 = vunpack.c.l.b16 %v837
    %v2691 = vunpack.c.h.b16 %v837
    %v2692 = vunpack.c.l.b16 %v838
    %v2693 = vunpack.c.h.b16 %v838
    %v2694 = vunpack.c.l.b16 %v839
    %v2695 = vunpack.c.h.b16 %v839
    %v2696 = vunpack.c.l.b16 %v840
    %v2697 = vunpack.c.h.b16 %v840
    %v2698 = vunpack.c.l.b16 %v841
    %v2699 = vunpack.c.h.b16 %v841
    %v2700 = vunpack.c.l.b16 %v842
    %v2701 = vunpack.c.h.b16 %v842
    %v2702 = vunpack.c.l.b16 %v843
    %v2703 = vunpack.c.h.b16 %v843
    %v2704 = vunpack.c.l.b16 %v844
    %v2705 = vunpack.c.h.b16 %v844
    %v2706 = vunpack.c.l.b16 %v845
    %v2707 = vunpack.c.h.b16 %v845
    %v2708 = vunpack.c.l.b16 %v846
    %v2709 = vunpack.c.h.b16 %v846
    %v2710 = vunpack.c.l.b16 %v847
    %v2711 = vunpack.c.h.b16 %v847
    %v2712 = vunpack.c.l.b16 %v848
    %v2713 = vunpack.c.h.b16 %v848
    %v2714 = vunpack.c.l.b16 %v849
    %v2715 = vunpack.c.h.b16 %v849
    %v2716 = vunpack.c.l.b16 %v850
    %v2717 = vunpack.c.h.b16 %v850
    %v2718 = vunpack.c.l.b16 %v851
    %v2719 = vunpack.c.h.b16 %v851
    %v2720 = vunpack.c.l.b16 %v852
    %v2721 = vunpack.c.h.b16 %v852
    %v2722 = vunpack.c.l.b16 %v853
    %v2723 = vunpack.c.h.b16 %v853
    %v2724 = vunpack.c.l.b16 %v854
    %v2725 = vunpack.c.h.b16 %v854
    %v2726 = vunpack.c.l.b16 %v855
    %v2727 = vunpack.c.h.b16 %v855
    %v2728 = vunpack.c.l.b16 %v856
    %v2729 = vunpack.c.h.b16 %v856
    %v2730 = vunpack.c.l.b16 %v857
    %v2731 = vunpack.c.h.b16 %v857
    %v2732 = vunpack.c.l.b16 %v858
    %v2733 = vunpack.c.h.b16 %v858
    %v2734 = vunpack.c.l.b16 %v859
    %v2735 = vunpack.c.h.b16 %v859
    %v2736 = vunpack.c.l.b16 %v860
    %v2737 = vunpack.c.h.b16 %v860
    %v2738 = vunpack.c.l.b16 %v861
    %v2739 = vunpack.c.h.b16 %v861
    %v2740 = vunpack.c.l.b16 %v862
    %v2741 = vunpack.c.h.b16 %v862
    %v2742 = vunpack.c.l.b16 %v863
    %v2743 = vunpack.c.h.b16 %v863
    %v2744 = vunpack.c.l.b16 %v864
    %v2745 = vunpack.c.h.b16 %v864
    %v2746 = vunpack.c.l.b16 %v865
    %v2747 = vunpack.c.h.b16 %v865
    %v2748 = vunpack.c.l.b16 %v866
    %v2749 = vunpack.c.h.b16 %v866
    %v2750 = vunpack.c.l.b16 %v867
    %v2751 = vunpack.c.h.b16 %v867
    %v2752 = vunpack.c.l.b16 %v868
    %v2753 = vunpack.c.h.b16 %v868
    %v2754 = vunpack.c.l.b16 %v869
    %v2755 = vunpack.c.h.b16 %v869
    %v2756 = vunpack.c.l.b16 %v870
    %v2757 = vunpack.c.h.b16 %v870
    %v2758 = vunpack.c.l.b16 %v871
    %v2759 = vunpack.c.h.b16 %v871
    %v2760 = vunpack.c.l.b16 %v872
    %v2761 = vunpack.c.h.b16 %v872
    %v2762 = vunpack.c.l.b16 %v873
    %v2763 = vunpack.c.h.b16 %v873
    %v2764 = vunpack.c.l.b16 %v874
    %v2765 = vunpack.c.h.b16 %v874
    %v2766 = vunpack.c.l.b16 %v875
    %v2767 = vunpack.c.h.b16 %v875
    %v2768 = vunpack.c.l.b16 %v876
    %v2769 = vunpack.c.h.b16 %v876
    %v2770 = vunpack.c.l.b16 %v877
    %v2771 = vunpack.c.h.b16 %v877
    %v2772 = vunpack.c.l.b16 %v878
    %v2773 = vunpack.c.h.b16 %v878
    %v2774 = vunpack.c.l.b16 %v879
    %v2775 = vunpack.c.h.b16 %v879
    %v2776 = vunpack.c.l.b16 %v880
    %v2777 = vunpack.c.h.b16 %v880
    %v2778 = vunpack.c.l.b16 %v881
    %v2779 = vunpack.c.h.b16 %v881
    %v2780 = vunpack.c.l.b16 %v882
    %v2781 = vunpack.c.h.b16 %v882
    %v2782 = vunpack.c.l.b16 %v883
    %v2783 = vunpack.c.h.b16 %v883
    %v2784 = vunpack.c.l.b16 %v884
    %v2785 = vunpack.c.h.b16 %v884
    %v2786 = vunpack.c.l.b16 %v885
    %v2787 = vunpack.c.h.b16 %v885
    %v2788 = vunpack.c.l.b16 %v886
    %v2789 = vunpack.c.h.b16 %v886
    %v2790 = vunpack.c.l.b16 %v887
    %v2791 = vunpack.c.h.b16 %v887
    %v2792 = vunpack.c.l.b16 %v888
    %v2793 = vunpack.c.h.b16 %v888
    %v2794 = vunpack.c.l.b16 %v889
    %v2795 = vunpack.c.h.b16 %v889
    %v2796 = vunpack.c.l.b16 %v890
    %v2797 = vunpack.c.h.b16 %v890
    %v2798 = vunpack.c.l.b16 %v891
    %v2799 = vunpack.c.h.b16 %v891
    %v2800 = vunpack.c.l.b16 %v892
    %v2801 = vunpack.c.h.b16 %v892
    %v2802 = vunpack.c.l.b16 %v893
    %v2803 = vunpack.c.h.b16 %v893
    %v2804 = vunpack.c.l.b16 %v894
    %v2805 = vunpack.c.h.b16 %v894
    %v2806 = vunpack.c.l.b16 %v895
    %v2807 = vunpack.c.h.b16 %v895
    %v2808 = vunpack.c.l.b16 %v896
    %v2809 = vunpack.c.h.b16 %v896
    %v2810 = vunpack.c.l.b16 %v897
    %v2811 = vunpack.c.h.b16 %v897
    %v2812 = vunpack.c.l.b16 %v898
    %v2813 = vunpack.c.h.b16 %v898
    %v2814 = vunpack.c.l.b16 %v899
    %v2815 = vunpack.c.h.b16 %v899
    %v2816 = vunpack.c.l.b16 %v900
    %v2817 = vunpack.c.h.b16 %v900
    %v2818 = vunpack.c.l.b16 %v901
    %v2819 = vunpack.c.h.b16 %v901
    %v2820 = vunpack.c.l.b16 %v902
    %v2821 = vunpack.c.h.b16 %v902
    %v2822 = vunpack.c.l.b16 %v903
    %v2823 = vunpack.c.h.b16 %v903
    %v2824 = vunpack.c.l.b16 %v904
    %v2825 = vunpack.c.h.b16 %v904
    %v2826 = vunpack.c.l.b16 %v905
    %v2827 = vunpack.c.h.b16 %v905
    %v2828 = vunpack.c.l.b16 %v906
    %v2829 = vunpack.c.h.b16 %v906
    %v2830 = vunpack.c.l.b16 %v907
    %v2831 = vunpack.c.h.b16 %v907
    %v2832 = vunpack.c.l.b16 %v908
    %v2833 = vunpack.c.h.b16 %v908
    %v2834 = vunpack.c.l.b16 %v909
    %v2835 = vunpack.c.h.b16 %v909
    %v2836 = vunpack.c.l.b16 %v910
    %v2837 = vunpack.c.h.b16 %v910
    %v2838 = vunpack.c.l.b16 %v911
    %v2839 = vunpack.c.h.b16 %v911
    %v2840 = vunpack.c.l.b16 %v912
    %v2841 = vunpack.c.h.b16 %v912
    %v2842 = vunpack.c.l.b16 %v913
    %v2843 = vunpack.c.h.b16 %v913
    %v2844 = vunpack.c.l.b16 %v914
    %v2845 = vunpack.c.h.b16 %v914
    %v2846 = vunpack.c.l.b16 %v915
    %v2847 = vunpack.c.h.b16 %v915
    %v2848 = vunpack.c.l.b16 %v916
    %v2849 = vunpack.c.h.b16 %v916
    %v2850 = vunpack.c.l.b16 %v917
    %v2851 = vunpack.c.h.b16 %v917
    %v2852 = vunpack.c.l.b16 %v918
    %v2853 = vunpack.c.h.b16 %v918
    %v2854 = vunpack.c.l.b16 %v919
    %v2855 = vunpack.c.h.b16 %v919
    %v2856 = vunpack.c.l.b16 %v920
    %v2857 = vunpack.c.h.b16 %v920
    %v2858 = vunpack.c.l.b16 %v921
    %v2859 = vunpack.c.h.b16 %v921
    %v2860 = vunpack.c.l.b16 %v922
    %v2861 = vunpack.c.h.b16 %v922
    %v2862 = vunpack.c.l.b16 %v923
    %v2863 = vunpack.c.h.b16 %v923
    %v2864 = vunpack.c.l.b16 %v924
    %v2865 = vunpack.c.h.b16 %v924
    %v2866 = vunpack.c.l.b16 %v925
    %v2867 = vunpack.c.h.b16 %v925
    %v2868 = vunpack.c.l.b16 %v926
    %v2869 = vunpack.c.h.b16 %v926
    %v2870 = vunpack.c.l.b16 %v927
    %v2871 = vunpack.c.h.b16 %v927
    %v2872 = vunpack.c.l.b16 %v928
    %v2873 = vunpack.c.h.b16 %v928
    %v2874 = vunpack.c.l.b16 %v929
    %v2875 = vunpack.c.h.b16 %v929
    %v2876 = vunpack.c.l.b16 %v930
    %v2877 = vunpack.c.h.b16 %v930
    %v2878 = vunpack.c.l.b16 %v931
    %v2879 = vunpack.c.h.b16 %v931
    %v2880 = vunpack.c.l.b16 %v932
    %v2881 = vunpack.c.h.b16 %v932
    %v2882 = vunpack.c.l.b16 %v933
    %v2883 = vunpack.c.h.b16 %v933
    %v2884 = vunpack.c.l.b16 %v934
    %v2885 = vunpack.c.h.b16 %v934
    %v2886 = vunpack.c.l.b16 %v935
    %v2887 = vunpack.c.h.b16 %v935
    %v2888 = vunpack.c.l.b16 %v936
    %v2889 = vunpack.c.h.b16 %v936
    %v2890 = vunpack.c.l.b16 %v937
    %v2891 = vunpack.c.h.b16 %v937
    %v2892 = vunpack.c.l.b16 %v938
    %v2893 = vunpack.c.h.b16 %v938
    %v2894 = vunpack.c.l.b16 %v939
    %v2895 = vunpack.c.h.b16 %v939
    %v2896 = vunpack.c.l.b16 %v940
    %v2897 = vunpack.c.h.b16 %v940
    %v2898 = vunpack.c.l.b16 %v941
    %v2899 = vunpack.c.h.b16 %v941
    %v2900 = vunpack.c.l.b16 %v942
    %v2901 = vunpack.c.h.b16 %v942
    %v2902 = vunpack.c.l.b16 %v943
    %v2903 = vunpack.c.h.b16 %v943
    %v2904 = vunpack.c.l.b16 %v944
    %v2905 = vunpack.c.h.b16 %v944
    %v2906 = vunpack.c.l.b16 %v945
    %v2907 = vunpack.c.h.b16 %v945
    %v2908 = vunpack.c.l.b16 %v946
    %v2909 = vunpack.c.h.b16 %v946
    %v2910 = vunpack.c.l.b16 %v947
    %v2911 = vunpack.c.h.b16 %v947
    %v2912 = vunpack.c.l.b16 %v948
    %v2913 = vunpack.c.h.b16 %v948
    %v2914 = vunpack.c.l.b16 %v949
    %v2915 = vunpack.c.h.b16 %v949
    %v2916 = vunpack.c.l.b16 %v950
    %v2917 = vunpack.c.h.b16 %v950
    %v2918 = vunpack.c.l.b16 %v951
    %v2919 = vunpack.c.h.b16 %v951
    %v2920 = vunpack.c.l.b16 %v952
    %v2921 = vunpack.c.h.b16 %v952
    %v2922 = vunpack.c.l.b16 %v953
    %v2923 = vunpack.c.h.b16 %v953
    %v2924 = vunpack.c.l.b16 %v954
    %v2925 = vunpack.c.h.b16 %v954
    %v2926 = vunpack.c.l.b16 %v955
    %v2927 = vunpack.c.h.b16 %v955
    %v2928 = vunpack.c.l.b16 %v956
    %v2929 = vunpack.c.h.b16 %v956
    %v2930 = vunpack.c.l.b16 %v957
    %v2931 = vunpack.c.h.b16 %v957
    %v2932 = vunpack.c.l.b16 %v958
    %v2933 = vunpack.c.h.b16 %v958
    %v2934 = vunpack.c.l.b16 %v959
    %v2935 = vunpack.c.h.b16 %v959
    %v2936 = vunpack.c.l.b16 %v960
    %v2937 = vunpack.c.h.b16 %v960
    %v2938 = vunpack.c.l.b16 %v961
    %v2939 = vunpack.c.h.b16 %v961
    %v2940 = vunpack.c.l.b16 %v962
    %v2941 = vunpack.c.h.b16 %v962
    %v2942 = vunpack.c.l.b16 %v963
    %v2943 = vunpack.c.h.b16 %v963
    %v2944 = vunpack.c.l.b16 %v964
    %v2945 = vunpack.c.h.b16 %v964
    %v2946 = vunpack.c.l.b16 %v965
    %v2947 = vunpack.c.h.b16 %v965
    %v2948 = vunpack.c.l.b16 %v966
    %v2949 = vunpack.c.h.b16 %v966
    %v2950 = vunpack.c.l.b16 %v967
    %v2951 = vunpack.c.h.b16 %v967
    %v2952 = vunpack.c.l.b16 %v968
    %v2953 = vunpack.c.h.b16 %v968
    %v2954 = vunpack.c.l.b16 %v969
    %v2955 = vunpack.c.h.b16 %v969
    %v2956 = vunpack.c.l.b16 %v970
    %v2957 = vunpack.c.h.b16 %v970
    %v2958 = vunpack.c.l.b16 %v971
    %v2959 = vunpack.c.h.b16 %v971
    %v2960 = vunpack.c.l.b16 %v972
    %v2961 = vunpack.c.h.b16 %v972
    %v2962 = vunpack.c.l.b16 %v973
    %v2963 = vunpack.c.h.b16 %v973
    %v2964 = vunpack.c.l.b16 %v974
    %v2965 = vunpack.c.h.b16 %v974
    %v2966 = vunpack.c.l.b16 %v975
    %v2967 = vunpack.c.h.b16 %v975
    %v2968 = vunpack.c.l.b16 %v976
    %v2969 = vunpack.c.h.b16 %v976
    %v2970 = vunpack.c.l.b16 %v977
    %v2971 = vunpack.c.h.b16 %v977
    %v2972 = vunpack.c.l.b16 %v978
    %v2973 = vunpack.c.h.b16 %v978
    %v2974 = vunpack.c.l.b16 %v979
    %v2975 = vunpack.c.h.b16 %v979
    %v2976 = vunpack.c.l.b16 %v980
    %v2977 = vunpack.c.h.b16 %v980
    %v2978 = vunpack.c.l.b16 %v981
    %v2979 = vunpack.c.h.b16 %v981
    %v2980 = vunpack.c.l.b16 %v982
    %v2981 = vunpack.c.h.b16 %v982
    %v2982 = vunpack.c.l.b16 %v983
    %v2983 = vunpack.c.h.b16 %v983
    %v2984 = vunpack.c.l.b16 %v984
    %v2985 = vunpack.c.h.b16 %v984
    %v2986 = vunpack.c.l.b16 %v985
    %v2987 = vunpack.c.h.b16 %v985
    %v2988 = vunpack.c.l.b16 %v986
    %v2989 = vunpack.c.h.b16 %v986
    %v2990 = vunpack.c.l.b16 %v987
    %v2991 = vunpack.c.h.b16 %v987
    %v2992 = vunpack.c.l.b16 %v988
    %v2993 = vunpack.c.h.b16 %v988
    %v2994 = vunpack.c.l.b16 %v989
    %v2995 = vunpack.c.h.b16 %v989
    %v2996 = vunpack.c.l.b16 %v990
    %v2997 = vunpack.c.h.b16 %v990
    %v2998 = vunpack.c.l.b16 %v991
    %v2999 = vunpack.c.h.b16 %v991
    %v3000 = vunpack.c.l.b16 %v992
    %v3001 = vunpack.c.h.b16 %v992
    %v3002 = vunpack.c.l.b16 %v993
    %v3003 = vunpack.c.h.b16 %v993
    %v3004 = vunpack.c.l.b16 %v994
    %v3005 = vunpack.c.h.b16 %v994
    %v3006 = vunpack.c.l.b16 %v995
    %v3007 = vunpack.c.h.b16 %v995
    %v3008 = vunpack.c.l.b16 %v996
    %v3009 = vunpack.c.h.b16 %v996
    %v3010 = vunpack.c.l.b16 %v997
    %v3011 = vunpack.c.h.b16 %v997
    %v3012 = vunpack.c.l.b16 %v998
    %v3013 = vunpack.c.h.b16 %v998
    %v3014 = vunpack.c.l.b16 %v999
    %v3015 = vunpack.c.h.b16 %v999
    %v3016 = vunpack.c.l.b16 %v1000
    %v3017 = vunpack.c.h.b16 %v1000
    %v3018 = vunpack.c.l.b16 %v1001
    %v3019 = vunpack.c.h.b16 %v1001
    %v3020 = vunpack.c.l.b16 %v1002
    %v3021 = vunpack.c.h.b16 %v1002
    %v3022 = vunpack.c.l.b16 %v1003
    %v3023 = vunpack.c.h.b16 %v1003
    %v3024 = vunpack.c.l.b16 %v1004
    %v3025 = vunpack.c.h.b16 %v1004
    %v3026 = vunpack.c.l.b16 %v1005
    %v3027 = vunpack.c.h.b16 %v1005
    %v3028 = vunpack.c.l.b16 %v1006
    %v3029 = vunpack.c.h.b16 %v1006
    %v3030 = vunpack.c.l.b16 %v1007
    %v3031 = vunpack.c.h.b16 %v1007
    %v3032 = vunpack.c.l.b16 %v1008
    %v3033 = vunpack.c.h.b16 %v1008
    %v3034 = vunpack.c.l.b16 %v1009
    %v3035 = vunpack.c.h.b16 %v1009
    %v3036 = vunpack.c.l.b16 %v1010
    %v3037 = vunpack.c.h.b16 %v1010
    %v3038 = vunpack.c.l.b16 %v1011
    %v3039 = vunpack.c.h.b16 %v1011
    %v3040 = vunpack.c.l.b16 %v1012
    %v3041 = vunpack.c.h.b16 %v1012
    %v3042 = vunpack.c.l.b16 %v1013
    %v3043 = vunpack.c.h.b16 %v1013
    %v3044 = vunpack.c.l.b16 %v1014
    %v3045 = vunpack.c.h.b16 %v1014
    %v3046 = vunpack.c.l.b16 %v1015
    %v3047 = vunpack.c.h.b16 %v1015
    %v3048 = vunpack.c.l.b16 %v1016
    %v3049 = vunpack.c.h.b16 %v1016
    %v3050 = vunpack.c.l.b16 %v1017
    %v3051 = vunpack.c.h.b16 %v1017
    %v3052 = vunpack.c.l.b16 %v1018
    %v3053 = vunpack.c.h.b16 %v1018
    %v3054 = vunpack.c.l.b16 %v1019
    %v3055 = vunpack.c.h.b16 %v1019
    %v3056 = vunpack.c.l.b16 %v1020
    %v3057 = vunpack.c.h.b16 %v1020
    %v3058 = vunpack.c.l.b16 %v1021
    %v3059 = vunpack.c.h.b16 %v1021
    %v3060 = vunpack.c.l.b16 %v1022
    %v3061 = vunpack.c.h.b16 %v1022
    %v3062 = vunpack.c.l.b16 %v1023
    %v3063 = vunpack.c.h.b16 %v1023
    %v3064 = vunpack.c.l.b16 %v1024
    %v3065 = vunpack.c.h.b16 %v1024
    %v3066 = vunpack.c.l.b16 %v1025
    %v3067 = vunpack.c.h.b16 %v1025
    %v3068 = vunpack.c.l.b16 %v1026
    %v3069 = vunpack.c.h.b16 %v1026
    %v3070 = vunpack.c.l.b16 %v1027
    %v3071 = vunpack.c.h.b16 %v1027
    %v3072 = vunpack.c.l.b16 %v1028
    %v3073 = vunpack.c.h.b16 %v1028
    %v3074 = vunpack.c.l.b16 %v1029
    %v3075 = vunpack.c.h.b16 %v1029
    %v3076 = vunpack.c.l.b16 %v1030
    %v3077 = vunpack.c.h.b16 %v1030
    %v3078 = vunpack.c.l.b16 %v1031
    %v3079 = vunpack.c.h.b16 %v1031
    %v3080 = vunpack.c.l.b16 %v1032
    %v3081 = vunpack.c.h.b16 %v1032
    %v3082 = vunpack.c.l.b16 %v1033
    %v3083 = vunpack.c.h.b16 %v1033
    %v3084 = vunpack.c.l.b16 %v1034
    %v3085 = vunpack.c.h.b16 %v1034
    %v3086 = vunpack.c.l.b16 %v1035
    %v3087 = vunpack.c.h.b16 %v1035
    %v3088 = vunpack.c.l.b16 %v1036
    %v3089 = vunpack.c.h.b16 %v1036
    %v3090 = vunpack.c.l.b16 %v1037
    %v3091 = vunpack.c.h.b16 %v1037
    %v3092 = vunpack.c.l.b16 %v1038
    %v3093 = vunpack.c.h.b16 %v1038
    %v3094 = vunpack.c.l.b16 %v1039
    %v3095 = vunpack.c.h.b16 %v1039
    %v3096 = vunpack.c.l.b16 %v1040
    %v3097 = vunpack.c.h.b16 %v1040
    %v3098 = vunpack.c.l.b16 %v1041
    %v3099 = vunpack.c.h.b16 %v1041
    %v3100 = vunpack.c.l.b16 %v1042
    %v3101 = vunpack.c.h.b16 %v1042
    %v3102 = vunpack.c.l.b16 %v1043
    %v3103 = vunpack.c.h.b16 %v1043
    %v3104 = vunpack.c.l.b16 %v1044
    %v3105 = vunpack.c.h.b16 %v1044
    %v3106 = vunpack.c.l.b16 %v1045
    %v3107 = vunpack.c.h.b16 %v1045
    %v3108 = vunpack.c.l.b16 %v1046
    %v3109 = vunpack.c.h.b16 %v1046
    %v3110 = vunpack.c.l.b16 %v1047
    %v3111 = vunpack.c.h.b16 %v1047
    %v3112 = vunpack.c.l.b16 %v1048
    %v3113 = vunpack.c.h.b16 %v1048
    %v3114 = vunpack.c.l.b16 %v1049
    %v3115 = vunpack.c.h.b16 %v1049
    %v3116 = vunpack.c.l.b16 %v1050
    %v3117 = vunpack.c.h.b16 %v1050
    %v3118 = vunpack.c.l.b16 %v1051
    %v3119 = vunpack.c.h.b16 %v1051
    %v3120 = vunpack.c.l.b16 %v1052
    %v3121 = vunpack.c.h.b16 %v1052
    %v3122 = vunpack.c.l.b16 %v1053
    %v3123 = vunpack.c.h.b16 %v1053
    %v3124 = vunpack.c.l.b16 %v1054
    %v3125 = vunpack.c.h.b16 %v1054
    %v3126 = vunpack.c.l.b16 %v1055
    %v3127 = vunpack.c.h.b16 %v1055
    %v3128 = vunpack.c.l.b16 %v1056
    %v3129 = vunpack.c.h.b16 %v1056
    %v3130 = vunpack.c.l.b16 %v1057
    %v3131 = vunpack.c.h.b16 %v1057
    %v3132 = vunpack.c.l.b16 %v1058
    %v3133 = vunpack.c.h.b16 %v1058
    %v3134 = vunpack.c.l.b16 %v1059
    %v3135 = vunpack.c.h.b16 %v1059
    %v3136 = vunpack.c.l.b16 %v1060
    %v3137 = vunpack.c.h.b16 %v1060
    %v3138 = vunpack.c.l.b16 %v1061
    %v3139 = vunpack.c.h.b16 %v1061
    %v3140 = vunpack.c.l.b16 %v1062
    %v3141 = vunpack.c.h.b16 %v1062
    %v3142 = vunpack.c.l.b16 %v1063
    %v3143 = vunpack.c.h.b16 %v1063
    %v3144 = vunpack.c.l.b16 %v1064
    %v3145 = vunpack.c.h.b16 %v1064
    %v3146 = vunpack.c.l.b16 %v1065
    %v3147 = vunpack.c.h.b16 %v1065
    %v3148 = vunpack.c.l.b16 %v1066
    %v3149 = vunpack.c.h.b16 %v1066
    %v3150 = vunpack.c.l.b16 %v1067
    %v3151 = vunpack.c.h.b16 %v1067
    %v3152 = vunpack.c.l.b16 %v1068
    %v3153 = vunpack.c.h.b16 %v1068
    %v3154 = vunpack.c.l.b16 %v1069
    %v3155 = vunpack.c.h.b16 %v1069
    %v3156 = vunpack.c.l.b16 %v1070
    %v3157 = vunpack.c.h.b16 %v1070
    %v3158 = vunpack.c.l.b16 %v1071
    %v3159 = vunpack.c.h.b16 %v1071
    %v3160 = vunpack.c.l.b16 %v1072
    %v3161 = vunpack.c.h.b16 %v1072
    %v3162 = vunpack.c.l.b16 %v1073
    %v3163 = vunpack.c.h.b16 %v1073
    %v3164 = vunpack.c.l.b16 %v1074
    %v3165 = vunpack.c.h.b16 %v1074
    %v3166 = vunpack.c.l.b16 %v1075
    %v3167 = vunpack.c.h.b16 %v1075
    %v3168 = vunpack.c.l.b16 %v1076
    %v3169 = vunpack.c.h.b16 %v1076
    %v3170 = vunpack.c.l.b16 %v1077
    %v3171 = vunpack.c.h.b16 %v1077
    %v3172 = vunpack.c.l.b16 %v1078
    %v3173 = vunpack.c.h.b16 %v1078
    %v3174 = vunpack.c.l.b16 %v1079
    %v3175 = vunpack.c.h.b16 %v1079
    %v3176 = vunpack.c.l.b16 %v1080
    %v3177 = vunpack.c.h.b16 %v1080
    %v3178 = vunpack.c.l.b16 %v1081
    %v3179 = vunpack.c.h.b16 %v1081
    %v3180 = vunpack.c.l.b16 %v1082
    %v3181 = vunpack.c.h.b16 %v1082
    %v3182 = vunpack.c.l.b16 %v1083
    %v3183 = vunpack.c.h.b16 %v1083
    %v3184 = vunpack.c.l.b16 %v1084
    %v3185 = vunpack.c.h.b16 %v1084
    %v3186 = vunpack.c.l.b16 %v1085
    %v3187 = vunpack.c.h.b16 %v1085
    %v3188 = vunpack.c.l.b16 %v1086
    %v3189 = vunpack.c.h.b16 %v1086
    %v3190 = vunpack.c.l.b16 %v1087
    %v3191 = vunpack.c.h.b16 %v1087
    %v3192 = vunpack.c.l.b16 %v1088
    %v3193 = vunpack.c.h.b16 %v1088
    %v3194 = vunpack.c.l.b16 %v1089
    %v3195 = vunpack.c.h.b16 %v1089
    %v3196 = vunpack.c.l.b16 %v1090
    %v3197 = vunpack.c.h.b16 %v1090
    %v3198 = vunpack.c.l.b16 %v1091
    %v3199 = vunpack.c.h.b16 %v1091
    %v3200 = vunpack.c.l.b16 %v1092
    %v3201 = vunpack.c.h.b16 %v1092
    %v3202 = vunpack.c.l.b16 %v1093
    %v3203 = vunpack.c.h.b16 %v1093
    %v3204 = vunpack.c.l.b16 %v1094
    %v3205 = vunpack.c.h.b16 %v1094
    %v3206 = vunpack.c.l.b16 %v1095
    %v3207 = vunpack.c.h.b16 %v1095
    %v3208 = vunpack.c.l.b16 %v1096
    %v3209 = vunpack.c.h.b16 %v1096
    %v3210 = vunpack.c.l.b16 %v1097
    %v3211 = vunpack.c.h.b16 %v1097
    %v3212 = vunpack.c.l.b16 %v1098
    %v3213 = vunpack.c.h.b16 %v1098
    %v3214 = vunpack.c.l.b16 %v1099
    %v3215 = vunpack.c.h.b16 %v1099
    %v3216 = vunpack.c.l.b16 %v1100
    %v3217 = vunpack.c.h.b16 %v1100
    %v3218 = vunpack.c.l.b16 %v1101
    %v3219 = vunpack.c.h.b16 %v1101
    %v3220 = vunpack.c.l.b16 %v1102
    %v3221 = vunpack.c.h.b16 %v1102
    %v3222 = vunpack.c.l.b16 %v1103
    %v3223 = vunpack.c.h.b16 %v1103
    %v3224 = vunpack.c.l.b16 %v1104
    %v3225 = vunpack.c.h.b16 %v1104
    %v3226 = vunpack.c.l.b16 %v1105
    %v3227 = vunpack.c.h.b16 %v1105
    %v3228 = vunpack.c.l.b16 %v1106
    %v3229 = vunpack.c.h.b16 %v1106
    %v3230 = vunpack.c.l.b16 %v1107
    %v3231 = vunpack.c.h.b16 %v1107
    %v3232 = vunpack.c.l.b16 %v1108
    %v3233 = vunpack.c.h.b16 %v1108
    %v3234 = vunpack.c.l.b16 %v1109
    %v3235 = vunpack.c.h.b16 %v1109
    %v3236 = vunpack.c.l.b16 %v1110
    %v3237 = vunpack.c.h.b16 %v1110
    %v3238 = vunpack.c.l.b16 %v1111
    %v3239 = vunpack.c.h.b16 %v1111
    %v3240 = vunpack.c.l.b16 %v1112
    %v3241 = vunpack.c.h.b16 %v1112
    %v3242 = vunpack.c.l.b16 %v1113
    %v3243 = vunpack.c.h.b16 %v1113
    %v3244 = vunpack.c.l.b16 %v1114
    %v3245 = vunpack.c.h.b16 %v1114
    %v3246 = vunpack.c.l.b16 %v1115
    %v3247 = vunpack.c.h.b16 %v1115
    %v3248 = vunpack.c.l.b16 %v1116
    %v3249 = vunpack.c.h.b16 %v1116
    %v3250 = vunpack.c.l.b16 %v1117
    %v3251 = vunpack.c.h.b16 %v1117
    %v3252 = vunpack.c.l.b16 %v1118
    %v3253 = vunpack.c.h.b16 %v1118
    %v3254 = vunpack.c.l.b16 %v1119
    %v3255 = vunpack.c.h.b16 %v1119
    %v3256 = vunpack.c.l.b16 %v1120
    %v3257 = vunpack.c.h.b16 %v1120
    %v3258 = vunpack.c.l.b16 %v1121
    %v3259 = vunpack.c.h.b16 %v1121
    %v3260 = vunpack.c.l.b16 %v1122
    %v3261 = vunpack.c.h.b16 %v1122
    %v3262 = vunpack.c.l.b16 %v1123
    %v3263 = vunpack.c.h.b16 %v1123
    %v3264 = vunpack.c.l.b16 %v1124
    %v3265 = vunpack.c.h.b16 %v1124
    %v3266 = vunpack.c.l.b16 %v1125
    %v3267 = vunpack.c.h.b16 %v1125
    %v3268 = vunpack.c.l.b16 %v1126
    %v3269 = vunpack.c.h.b16 %v1126
    %v3270 = vunpack.c.l.b16 %v1127
    %v3271 = vunpack.c.h.b16 %v1127
    %v3272 = vunpack.c.l.b16 %v1128
    %v3273 = vunpack.c.h.b16 %v1128
    %v3274 = vunpack.c.l.b16 %v1129
    %v3275 = vunpack.c.h.b16 %v1129
    %v3276 = vunpack.c.l.b16 %v1130
    %v3277 = vunpack.c.h.b16 %v1130
    %v3278 = vunpack.c.l.b16 %v1131
    %v3279 = vunpack.c.h.b16 %v1131
    %v3280 = vunpack.c.l.b16 %v1132
    %v3281 = vunpack.c.h.b16 %v1132
    %v3282 = vunpack.c.l.b16 %v1133
    %v3283 = vunpack.c.h.b16 %v1133
    %v3284 = vunpack.c.l.b16 %v1134
    %v3285 = vunpack.c.h.b16 %v1134
    %v3286 = vunpack.c.l.b16 %v1135
    %v3287 = vunpack.c.h.b16 %v1135
    %v3288 = vunpack.c.l.b16 %v1136
    %v3289 = vunpack.c.h.b16 %v1136
    %v3290 = vunpack.c.l.b16 %v1137
    %v3291 = vunpack.c.h.b16 %v1137
    %v3292 = vunpack.c.l.b16 %v1138
    %v3293 = vunpack.c.h.b16 %v1138
    %v3294 = vunpack.c.l.b16 %v1139
    %v3295 = vunpack.c.h.b16 %v1139
    %v3296 = vunpack.c.l.b16 %v1140
    %v3297 = vunpack.c.h.b16 %v1140
    %v3298 = vunpack.c.l.b16 %v1141
    %v3299 = vunpack.c.h.b16 %v1141
    %v3300 = vunpack.c.l.b16 %v1142
    %v3301 = vunpack.c.h.b16 %v1142
    %v3302 = vunpack.c.l.b16 %v1143
    %v3303 = vunpack.c.h.b16 %v1143
    %v3304 = vunpack.c.l.b16 %v1144
    %v3305 = vunpack.c.h.b16 %v1144
    %v3306 = vunpack.c.l.b16 %v1145
    %v3307 = vunpack.c.h.b16 %v1145
    %v3308 = vunpack.c.l.b16 %v1146
    %v3309 = vunpack.c.h.b16 %v1146
    %v3310 = vunpack.c.l.b16 %v1147
    %v3311 = vunpack.c.h.b16 %v1147
    %v3312 = vunpack.c.l.b16 %v1148
    %v3313 = vunpack.c.h.b16 %v1148
    %v3314 = vunpack.c.l.b16 %v1149
    %v3315 = vunpack.c.h.b16 %v1149
    %v3316 = vunpack.c.l.b16 %v1150
    %v3317 = vunpack.c.h.b16 %v1150
    %v3318 = vunpack.c.l.b16 %v1151
    %v3319 = vunpack.c.h.b16 %v1151
    %v3320 = vunpack.c.l.b16 %v1152
    %v3321 = vunpack.c.h.b16 %v1152
    %v3322 = vunpack.c.l.b16 %v1153
    %v3323 = vunpack.c.h.b16 %v1153
    %v3324 = vunpack.c.l.b16 %v1154
    %v3325 = vunpack.c.h.b16 %v1154
    %v3326 = vunpack.c.l.b16 %v1155
    %v3327 = vunpack.c.h.b16 %v1155
    %v3328 = vunpack.c.l.b16 %v1156
    %v3329 = vunpack.c.h.b16 %v1156
    %v3330 = vunpack.c.l.b16 %v1157
    %v3331 = vunpack.c.h.b16 %v1157
    %v3332 = vunpack.c.l.b16 %v1158
    %v3333 = vunpack.c.h.b16 %v1158
    %v3334 = vunpack.c.l.b16 %v1159
    %v3335 = vunpack.c.h.b16 %v1159
    %v3336 = vunpack.c.l.b16 %v1160
    %v3337 = vunpack.c.h.b16 %v1160
    %v3338 = vunpack.c.l.b16 %v1161
    %v3339 = vunpack.c.h.b16 %v1161
    %v3340 = vunpack.c.l.b16 %v1162
    %v3341 = vunpack.c.h.b16 %v1162
    %v3342 = vunpack.c.l.b16 %v1163
    %v3343 = vunpack.c.h.b16 %v1163
    %v3344 = vunpack.c.l.b16 %v1164
    %v3345 = vunpack.c.h.b16 %v1164
    %v3346 = vunpack.c.l.b16 %v1165
    %v3347 = vunpack.c.h.b16 %v1165
    %v3348 = vunpack.c.l.b16 %v1166
    %v3349 = vunpack.c.h.b16 %v1166
    %v3350 = vunpack.c.l.b16 %v1167
    %v3351 = vunpack.c.h.b16 %v1167
    %v3352 = vunpack.c.l.b16 %v1168
    %v3353 = vunpack.c.h.b16 %v1168
    %v3354 = vunpack.c.l.b16 %v1169
    %v3355 = vunpack.c.h.b16 %v1169
    %v3356 = vunpack.c.l.b16 %v1170
    %v3357 = vunpack.c.h.b16 %v1170
    %v3358 = vunpack.c.l.b16 %v1171
    %v3359 = vunpack.c.h.b16 %v1171
    %v3360 = vunpack.c.l.b16 %v1172
    %v3361 = vunpack.c.h.b16 %v1172
    %v3362 = vunpack.c.l.b16 %v1173
    %v3363 = vunpack.c.h.b16 %v1173
    %v3364 = vunpack.c.l.b16 %v1174
    %v3365 = vunpack.c.h.b16 %v1174
    %v3366 = vunpack.c.l.b16 %v1175
    %v3367 = vunpack.c.h.b16 %v1175
    %v3368 = vunpack.c.l.b16 %v1176
    %v3369 = vunpack.c.h.b16 %v1176
    %v3370 = vunpack.c.l.b16 %v1177
    %v3371 = vunpack.c.h.b16 %v1177
    %v3372 = vunpack.c.l.b16 %v1178
    %v3373 = vunpack.c.h.b16 %v1178
    %v3374 = vunpack.c.l.b16 %v1179
    %v3375 = vunpack.c.h.b16 %v1179
    %v3376 = vunpack.c.l.b16 %v1180
    %v3377 = vunpack.c.h.b16 %v1180
    %v3378 = vunpack.c.l.b16 %v1181
    %v3379 = vunpack.c.h.b16 %v1181
    %v3380 = vunpack.c.l.b16 %v1182
    %v3381 = vunpack.c.h.b16 %v1182
    %v3382 = vunpack.c.l.b16 %v1183
    %v3383 = vunpack.c.h.b16 %v1183
    %v3384 = vunpack.c.l.b16 %v1184
    %v3385 = vunpack.c.h.b16 %v1184
    %v3386 = vunpack.c.l.b16 %v1185
    %v3387 = vunpack.c.h.b16 %v1185
    %v3388 = vunpack.c.l.b16 %v1186
    %v3389 = vunpack.c.h.b16 %v1186
    %v3390 = vunpack.c.l.b16 %v1187
    %v3391 = vunpack.c.h.b16 %v1187
    %v3392 = vunpack.c.l.b16 %v1188
    %v3393 = vunpack.c.h.b16 %v1188
    %v3394 = vunpack.c.l.b16 %v1189
    %v3395 = vunpack.c.h.b16 %v1189
    %v3396 = vunpack.c.l.b16 %v1190
    %v3397 = vunpack.c.h.b16 %v1190
    %v3398 = vunpack.c.l.b16 %v1191
    %v3399 = vunpack.c.h.b16 %v1191
    %v3400 = vunpack.c.l.b16 %v1192
    %v3401 = vunpack.c.h.b16 %v1192
    %v3402 = vunpack.c.l.b16 %v1193
    %v3403 = vunpack.c.h.b16 %v1193
    %v3404 = vunpack.c.l.b16 %v1194
    %v3405 = vunpack.c.h.b16 %v1194
    %v3406 = vunpack.c.l.b16 %v1195
    %v3407 = vunpack.c.h.b16 %v1195
    %v3408 = vunpack.c.l.b16 %v1196
    %v3409 = vunpack.c.h.b16 %v1196
    %v3410 = vunpack.c.l.b16 %v1197
    %v3411 = vunpack.c.h.b16 %v1197
    %v3412 = vunpack.c.l.b16 %v1198
    %v3413 = vunpack.c.h.b16 %v1198
    %v3414 = vunpack.c.l.b16 %v1199
    %v3415 = vunpack.c.h.b16 %v1199
    %v3416 = vunpack.c.l.b16 %v1200
    %v3417 = vunpack.c.h.b16 %v1200
    %v3418 = vunpack.c.l.b16 %v1201
    %v3419 = vunpack.c.h.b16 %v1201
    %v3420 = vunpack.c.l.b16 %v1202
    %v3421 = vunpack.c.h.b16 %v1202
    %v3422 = vunpack.c.l.b16 %v1203
    %v3423 = vunpack.c.h.b16 %v1203
    %v3424 = vunpack.c.l.b16 %v1204
    %v3425 = vunpack.c.h.b16 %v1204
    %v3426 = vunpack.c.l.b16 %v1205
    %v3427 = vunpack.c.h.b16 %v1205
    %v3428 = vunpack.c.l.b16 %v1206
    %v3429 = vunpack.c.h.b16 %v1206
    %v3430 = vunpack.c.l.b16 %v1207
    %v3431 = vunpack.c.h.b16 %v1207
    %v3432 = vunpack.c.l.b16 %v1208
    %v3433 = vunpack.c.h.b16 %v1208
    %v3434 = vunpack.c.l.b16 %v1209
    %v3435 = vunpack.c.h.b16 %v1209
    %v3436 = vunpack.c.l.b16 %v1210
    %v3437 = vunpack.c.h.b16 %v1210
    %v3438 = vunpack.c.l.b16 %v1211
    %v3439 = vunpack.c.h.b16 %v1211
    %v3440 = vunpack.c.l.b16 %v1212
    %v3441 = vunpack.c.h.b16 %v1212
    %v3442 = vunpack.c.l.b16 %v1213
    %v3443 = vunpack.c.h.b16 %v1213
    %v3444 = vunpack.c.l.b16 %v1214
    %v3445 = vunpack.c.h.b16 %v1214
    %v3446 = vunpack.c.l.b16 %v1215
    %v3447 = vunpack.c.h.b16 %v1215
    %v3448 = vunpack.c.l.b16 %v1216
    %v3449 = vunpack.c.h.b16 %v1216
    %v3450 = vunpack.c.l.b16 %v1217
    %v3451 = vunpack.c.h.b16 %v1217
    %v3452 = vunpack.c.l.b16 %v1218
    %v3453 = vunpack.c.h.b16 %v1218
    %v3454 = vunpack.c.l.b16 %v1219
    %v3455 = vunpack.c.h.b16 %v1219
    %v3456 = vunpack.c.l.b16 %v1220
    %v3457 = vunpack.c.h.b16 %v1220
    %v3458 = vunpack.c.l.b16 %v1221
    %v3459 = vunpack.c.h.b16 %v1221
    %v3460 = vunpack.c.l.b16 %v1222
    %v3461 = vunpack.c.h.b16 %v1222
    %v3462 = vunpack.c.l.b16 %v1223
    %v3463 = vunpack.c.h.b16 %v1223
    %v3464 = vunpack.c.l.b16 %v1224
    %v3465 = vunpack.c.h.b16 %v1224
    %v3466 = vunpack.c.l.b16 %v1225
    %v3467 = vunpack.c.h.b16 %v1225
    %v3468 = vunpack.c.l.b16 %v1226
    %v3469 = vunpack.c.h.b16 %v1226
    %v3470 = vunpack.c.l.b16 %v1227
    %v3471 = vunpack.c.h.b16 %v1227
    %v3472 = vunpack.c.l.b16 %v1228
    %v3473 = vunpack.c.h.b16 %v1228
    %v3474 = vunpack.c.l.b16 %v1229
    %v3475 = vunpack.c.h.b16 %v1229
    %v3476 = vunpack.c.l.b16 %v1230
    %v3477 = vunpack.c.h.b16 %v1230
    %v3478 = vunpack.c.l.b16 %v1231
    %v3479 = vunpack.c.h.b16 %v1231
    %v3480 = vunpack.c.l.b16 %v1232
    %v3481 = vunpack.c.h.b16 %v1232
    %v3482 = vunpack.c.l.b16 %v1233
    %v3483 = vunpack.c.h.b16 %v1233
    %v3484 = vunpack.c.l.b16 %v1234
    %v3485 = vunpack.c.h.b16 %v1234
    %v3486 = vunpack.c.l.b16 %v1235
    %v3487 = vunpack.c.h.b16 %v1235
    %v3488 = vunpack.c.l.b16 %v1236
    %v3489 = vunpack.c.h.b16 %v1236
    %v3490 = vunpack.c.l.b16 %v1237
    %v3491 = vunpack.c.h.b16 %v1237
    %v3492 = vunpack.c.l.b16 %v1238
    %v3493 = vunpack.c.h.b16 %v1238
    %v3494 = vunpack.c.l.b16 %v1239
    %v3495 = vunpack.c.h.b16 %v1239
    %v3496 = vunpack.c.l.b16 %v1240
    %v3497 = vunpack.c.h.b16 %v1240
    %v3498 = vunpack.c.l.b16 %v1241
    %v3499 = vunpack.c.h.b16 %v1241
    %v3500 = vunpack.c.l.b16 %v1242
    %v3501 = vunpack.c.h.b16 %v1242
    %v3502 = vunpack.c.l.b16 %v1243
    %v3503 = vunpack.c.h.b16 %v1243
    %v3504 = vunpack.c.l.b16 %v1244
    %v3505 = vunpack.c.h.b16 %v1244
    %v3506 = vunpack.c.l.b16 %v1245
    %v3507 = vunpack.c.h.b16 %v1245
    %v3508 = vunpack.c.l.b16 %v1246
    %v3509 = vunpack.c.h.b16 %v1246
    %v3510 = vunpack.c.l.b16 %v1247
    %v3511 = vunpack.c.h.b16 %v1247
    %v3512 = vunpack.c.l.b16 %v1248
    %v3513 = vunpack.c.h.b16 %v1248
    %v3514 = vunpack.c.l.b16 %v1249
    %v3515 = vunpack.c.h.b16 %v1249
    %v3516 = vunpack.c.l.b16 %v1250
    %v3517 = vunpack.c.h.b16 %v1250
    %v3518 = vunpack.c.l.b16 %v1251
    %v3519 = vunpack.c.h.b16 %v1251
    %v3520 = vunpack.c.l.b16 %v1252
    %v3521 = vunpack.c.h.b16 %v1252
    %v3522 = vunpack.c.l.b16 %v1253
    %v3523 = vunpack.c.h.b16 %v1253
    %v3524 = vunpack.c.l.b16 %v1254
    %v3525 = vunpack.c.h.b16 %v1254
    %v3526 = vunpack.c.l.b16 %v1255
    %v3527 = vunpack.c.h.b16 %v1255
    %v3528 = vunpack.c.l.b16 %v1256
    %v3529 = vunpack.c.h.b16 %v1256
    %v3530 = vunpack.c.l.b16 %v1257
    %v3531 = vunpack.c.h.b16 %v1257
    %v3532 = vunpack.c.l.b16 %v1258
    %v3533 = vunpack.c.h.b16 %v1258
    %v3534 = vunpack.c.l.b16 %v1259
    %v3535 = vunpack.c.h.b16 %v1259
    %v3536 = vunpack.c.l.b16 %v1260
    %v3537 = vunpack.c.h.b16 %v1260
    %v3538 = vunpack.c.l.b16 %v1261
    %v3539 = vunpack.c.h.b16 %v1261
    %v3540 = vunpack.c.l.b16 %v1262
    %v3541 = vunpack.c.h.b16 %v1262
    %v3542 = vunpack.c.l.b16 %v1263
    %v3543 = vunpack.c.h.b16 %v1263
    %v3544 = vunpack.c.l.b16 %v1264
    %v3545 = vunpack.c.h.b16 %v1264
    %v3546 = vunpack.c.l.b16 %v1265
    %v3547 = vunpack.c.h.b16 %v1265
    %v3548 = vunpack.c.l.b16 %v1266
    %v3549 = vunpack.c.h.b16 %v1266
    %v3550 = vunpack.c.l.b16 %v1267
    %v3551 = vunpack.c.h.b16 %v1267
    %v3552 = vunpack.c.l.b16 %v1268
    %v3553 = vunpack.c.h.b16 %v1268
    %v3554 = vunpack.c.l.b16 %v1269
    %v3555 = vunpack.c.h.b16 %v1269
    %v3556 = vunpack.c.l.b16 %v1270
    %v3557 = vunpack.c.h.b16 %v1270
    %v3558 = vunpack.c.l.b16 %v1271
    %v3559 = vunpack.c.h.b16 %v1271
    %v3560 = vunpack.c.l.b16 %v1272
    %v3561 = vunpack.c.h.b16 %v1272
    %v3562 = vunpack.c.l.b16 %v1273
    %v3563 = vunpack.c.h.b16 %v1273
    %v3564 = vunpack.c.l.b16 %v1274
    %v3565 = vunpack.c.h.b16 %v1274
    %v3566 = vunpack.c.l.b16 %v1275
    %v3567 = vunpack.c.h.b16 %v1275
    %v3568 = vunpack.c.l.b16 %v1276
    %v3569 = vunpack.c.h.b16 %v1276
    %v3570 = vunpack.c.l.b16 %v1277
    %v3571 = vunpack.c.h.b16 %v1277
    %v3572 = vunpack.c.l.b16 %v1278
    %v3573 = vunpack.c.h.b16 %v1278
    %v3574 = vunpack.c.l.b16 %v1279
    %v3575 = vunpack.c.h.b16 %v1279
    %v3576 = vunpack.c.l.b16 %v1280
    %v3577 = vunpack.c.h.b16 %v1280
    %v3578 = vunpack.c.l.b16 %v1281
    %v3579 = vunpack.c.h.b16 %v1281
    %v3580 = vunpack.c.l.b16 %v1282
    %v3581 = vunpack.c.h.b16 %v1282
    %v3582 = vunpack.c.l.b16 %v1283
    %v3583 = vunpack.c.h.b16 %v1283
    %v3584 = vunpack.c.l.b16 %v1284
    %v3585 = vunpack.c.h.b16 %v1284
    %v3586 = vunpack.c.l.b16 %v1285
    %v3587 = vunpack.c.h.b16 %v1285
    %v3588 = vunpack.c.l.b16 %v1286
    %v3589 = vunpack.c.h.b16 %v1286
    %v3590 = vunpack.c.l.b16 %v1287
    %v3591 = vunpack.c.h.b16 %v1287
    %v3592 = vunpack.c.l.b16 %v1288
    %v3593 = vunpack.c.h.b16 %v1288
    %v3594 = vunpack.c.l.b16 %v1289
    %v3595 = vunpack.c.h.b16 %v1289
    %v3596 = vunpack.c.l.b16 %v1290
    %v3597 = vunpack.c.h.b16 %v1290
    %v3598 = vunpack.c.l.b16 %v1291
    %v3599 = vunpack.c.h.b16 %v1291
    %v3600 = vunpack.c.l.b16 %v1292
    %v3601 = vunpack.c.h.b16 %v1292
    %v3602 = vunpack.c.l.b16 %v1293
    %v3603 = vunpack.c.h.b16 %v1293
    %v3604 = vunpack.c.l.b16 %v1294
    %v3605 = vunpack.c.h.b16 %v1294
    %v3606 = vunpack.c.l.b16 %v1295
    %v3607 = vunpack.c.h.b16 %v1295
    %v3608 = vunpack.c.l.b16 %v1296
    %v3609 = vunpack.c.h.b16 %v1296
    %v3610 = vunpack.c.l.b16 %v1297
    %v3611 = vunpack.c.h.b16 %v1297
    %v3612 = vunpack.c.l.b16 %v1298
    %v3613 = vunpack.c.h.b16 %v1298
    %v3614 = vunpack.c.l.b16 %v1299
    %v3615 = vunpack.c.h.b16 %v1299
    %v3616 = vunpack.c.l.b16 %v1300
    %v3617 = vunpack.c.h.b16 %v1300
    %v3618 = vunpack.c.l.b16 %v1301
    %v3619 = vunpack.c.h.b16 %v1301
    %v3620 = vunpack.c.l.b16 %v1302
    %v3621 = vunpack.c.h.b16 %v1302
    %v3622 = vunpack.c.l.b16 %v1303
    %v3623 = vunpack.c.h.b16 %v1303
    %v3624 = vunpack.c.l.b16 %v1304
    %v3625 = vunpack.c.h.b16 %v1304
    %v3626 = vunpack.c.l.b16 %v1305
    %v3627 = vunpack.c.h.b16 %v1305
    %v3628 = vunpack.c.l.b16 %v1306
    %v3629 = vunpack.c.h.b16 %v1306
    %v3630 = vunpack.c.l.b16 %v1307
    %v3631 = vunpack.c.h.b16 %v1307
    %v3632 = vunpack.c.l.b16 %v1308
    %v3633 = vunpack.c.h.b16 %v1308
    %v3634 = vunpack.c.l.b16 %v1309
    %v3635 = vunpack.c.h.b16 %v1309
    %v3636 = vunpack.c.l.b16 %v1310
    %v3637 = vunpack.c.h.b16 %v1310
    %v3638 = vunpack.c.l.b16 %v1311
    %v3639 = vunpack.c.h.b16 %v1311
    %v3640 = vunpack.c.l.b16 %v1312
    %v3641 = vunpack.c.h.b16 %v1312
    %v3642 = vunpack.c.l.b16 %v1313
    %v3643 = vunpack.c.h.b16 %v1313
    %v3644 = vunpack.c.l.b16 %v1314
    %v3645 = vunpack.c.h.b16 %v1314
    %v3646 = vunpack.c.l.b16 %v1315
    %v3647 = vunpack.c.h.b16 %v1315
    %v3648 = vunpack.c.l.b16 %v1316
    %v3649 = vunpack.c.h.b16 %v1316
    %v3650 = vunpack.c.l.b16 %v1317
    %v3651 = vunpack.c.h.b16 %v1317
    %v3652 = vunpack.c.l.b16 %v1318
    %v3653 = vunpack.c.h.b16 %v1318
    %v3654 = vunpack.c.l.b16 %v1319
    %v3655 = vunpack.c.h.b16 %v1319
    %v3656 = vunpack.c.l.b16 %v1320
    %v3657 = vunpack.c.h.b16 %v1320
    %v3658 = vunpack.c.l.b16 %v1321
    %v3659 = vunpack.c.h.b16 %v1321
    %v3660 = vunpack.c.l.b16 %v1322
    %v3661 = vunpack.c.h.b16 %v1322
    %v3662 = vunpack.c.l.b16 %v1323
    %v3663 = vunpack.c.h.b16 %v1323
    %v3664 = vunpack.c.l.b16 %v1324
    %v3665 = vunpack.c.h.b16 %v1324
    %v3666 = vunpack.c.l.b16 %v1325
    %v3667 = vunpack.c.h.b16 %v1325
    %v3668 = vunpack.c.l.b16 %v1326
    %v3669 = vunpack.c.h.b16 %v1326
    %v3670 = vunpack.c.l.b16 %v1327
    %v3671 = vunpack.c.h.b16 %v1327
    %v3672 = vunpack.c.l.b16 %v1328
    %v3673 = vunpack.c.h.b16 %v1328
    %v3674 = vunpack.c.l.b16 %v1329
    %v3675 = vunpack.c.h.b16 %v1329
    %v3676 = vunpack.c.l.b16 %v1330
    %v3677 = vunpack.c.h.b16 %v1330
    %v3678 = vunpack.c.l.b16 %v1331
    %v3679 = vunpack.c.h.b16 %v1331
    %v3680 = vunpack.c.l.b16 %v1332
    %v3681 = vunpack.c.h.b16 %v1332
    %v3682 = vunpack.c.l.b16 %v1333
    %v3683 = vunpack.c.h.b16 %v1333
    %v3684 = vunpack.c.l.b16 %v1334
    %v3685 = vunpack.c.h.b16 %v1334
    %v3686 = vunpack.c.l.b16 %v1335
    %v3687 = vunpack.c.h.b16 %v1335
    %v3688 = vunpack.c.l.b16 %v1336
    %v3689 = vunpack.c.h.b16 %v1336
    %v3690 = vunpack.c.l.b16 %v1337
    %v3691 = vunpack.c.h.b16 %v1337
    %v3692 = vunpack.c.l.b16 %v1338
    %v3693 = vunpack.c.h.b16 %v1338
    %v3694 = vunpack.c.l.b16 %v1339
    %v3695 = vunpack.c.h.b16 %v1339
    %v3696 = vunpack.c.l.b16 %v1340
    %v3697 = vunpack.c.h.b16 %v1340
    %v3698 = vunpack.c.l.b16 %v1341
    %v3699 = vunpack.c.h.b16 %v1341
    %v3700 = vunpack.c.l.b16 %v1342
    %v3701 = vunpack.c.h.b16 %v1342
    %v3702 = vunpack.c.l.b16 %v1343
    %v3703 = vunpack.c.h.b16 %v1343
    %v3704 = vunpack.c.l.b16 %v1344
    %v3705 = vunpack.c.h.b16 %v1344
    %v3706 = vunpack.c.l.b16 %v1345
    %v3707 = vunpack.c.h.b16 %v1345
    %v3708 = vunpack.c.l.b16 %v1346
    %v3709 = vunpack.c.h.b16 %v1346
    %v3710 = vunpack.c.l.b16 %v1347
    %v3711 = vunpack.c.h.b16 %v1347
    %v3712 = vunpack.c.l.b16 %v1348
    %v3713 = vunpack.c.h.b16 %v1348
    %v3714 = vunpack.c.l.b16 %v1349
    %v3715 = vunpack.c.h.b16 %v1349
    %v3716 = vunpack.c.l.b16 %v1350
    %v3717 = vunpack.c.h.b16 %v1350
    %v3718 = vunpack.c.l.b16 %v1351
    %v3719 = vunpack.c.h.b16 %v1351
    %v3720 = vunpack.c.l.b16 %v1352
    %v3721 = vunpack.c.h.b16 %v1352
    %v3722 = vunpack.c.l.b16 %v1353
    %v3723 = vunpack.c.h.b16 %v1353
    %v3724 = vunpack.c.l.b16 %v1354
    %v3725 = vunpack.c.h.b16 %v1354
    %v3726 = vunpack.c.l.b16 %v1355
    %v3727 = vunpack.c.h.b16 %v1355
    %v3728 = vunpack.c.l.b16 %v1356
    %v3729 = vunpack.c.h.b16 %v1356
    %v3730 = vunpack.c.l.b16 %v1357
    %v3731 = vunpack.c.h.b16 %v1357
    %v3732 = vunpack.c.l.b16 %v1358
    %v3733 = vunpack.c.h.b16 %v1358
    %v3734 = vunpack.c.l.b16 %v1359
    %v3735 = vunpack.c.h.b16 %v1359
    %v3736 = vunpack.c.l.b16 %v1360
    %v3737 = vunpack.c.h.b16 %v1360
    %v3738 = vunpack.c.l.b16 %v1361
    %v3739 = vunpack.c.h.b16 %v1361
    %v3740 = vunpack.c.l.b16 %v1362
    %v3741 = vunpack.c.h.b16 %v1362
    %v3742 = vunpack.c.l.b16 %v1363
    %v3743 = vunpack.c.h.b16 %v1363
    %v3744 = vunpack.c.l.b16 %v1364
    %v3745 = vunpack.c.h.b16 %v1364
    %v3746 = vunpack.c.l.b16 %v1365
    %v3747 = vunpack.c.h.b16 %v1365
    %v3748 = vunpack.c.l.b16 %v1366
    %v3749 = vunpack.c.h.b16 %v1366
    %v3750 = vunpack.c.l.b16 %v1367
    %v3751 = vunpack.c.h.b16 %v1367
    %v3752 = vunpack.c.l.b16 %v1368
    %v3753 = vunpack.c.h.b16 %v1368
    %v3754 = vunpack.c.l.b16 %v1369
    %v3755 = vunpack.c.h.b16 %v1369
    %v3756 = vunpack.c.l.b16 %v1370
    %v3757 = vunpack.c.h.b16 %v1370
    %v3758 = vunpack.c.l.b16 %v1371
    %v3759 = vunpack.c.h.b16 %v1371
    %v3760 = vunpack.c.l.b16 %v1372
    %v3761 = vunpack.c.h.b16 %v1372
    %v3762 = vunpack.c.l.b16 %v1373
    %v3763 = vunpack.c.h.b16 %v1373
    %v3764 = vunpack.c.l.b16 %v1374
    %v3765 = vunpack.c.h.b16 %v1374
    %v3766 = vunpack.c.l.b16 %v1375
    %v3767 = vunpack.c.h.b16 %v1375
    %v3768 = vunpack.c.l.b16 %v1376
    %v3769 = vunpack.c.h.b16 %v1376
    %v3770 = vunpack.c.l.b16 %v1377
    %v3771 = vunpack.c.h.b16 %v1377
    %v3772 = vunpack.c.l.b16 %v1378
    %v3773 = vunpack.c.h.b16 %v1378
    %v3774 = vunpack.c.l.b16 %v1379
    %v3775 = vunpack.c.h.b16 %v1379
    %v3776 = vunpack.c.l.b16 %v1380
    %v3777 = vunpack.c.h.b16 %v1380
    %v3778 = vunpack.c.l.b16 %v1381
    %v3779 = vunpack.c.h.b16 %v1381
    %v3780 = vunpack.c.l.b16 %v1382
    %v3781 = vunpack.c.h.b16 %v1382
    %v3782 = vunpack.c.l.b16 %v1383
    %v3783 = vunpack.c.h.b16 %v1383
    %v3784 = vunpack.c.l.b16 %v1384
    %v3785 = vunpack.c.h.b16 %v1384
    %v3786 = vunpack.c.l.b16 %v1385
    %v3787 = vunpack.c.h.b16 %v1385
    %v3788 = vunpack.c.l.b16 %v1386
    %v3789 = vunpack.c.h.b16 %v1386
    %v3790 = vunpack.c.l.b16 %v1387
    %v3791 = vunpack.c.h.b16 %v1387
    %v3792 = vunpack.c.l.b16 %v1388
    %v3793 = vunpack.c.h.b16 %v1388
    %v3794 = vunpack.c.l.b16 %v1389
    %v3795 = vunpack.c.h.b16 %v1389
    %v3796 = vunpack.c.l.b16 %v1390
    %v3797 = vunpack.c.h.b16 %v1390
    %v3798 = vunpack.c.l.b16 %v1391
    %v3799 = vunpack.c.h.b16 %v1391
    %v3800 = vunpack.c.l.b16 %v1392
    %v3801 = vunpack.c.h.b16 %v1392
    %v3802 = vunpack.c.l.b16 %v1393
    %v3803 = vunpack.c.h.b16 %v1393
    %v3804 = vunpack.c.l.b16 %v1394
    %v3805 = vunpack.c.h.b16 %v1394
    %v3806 = vunpack.c.l.b16 %v1395
    %v3807 = vunpack.c.h.b16 %v1395
    %v3808 = vunpack.c.l.b16 %v1396
    %v3809 = vunpack.c.h.b16 %v1396
    %v3810 = vunpack.c.l.b16 %v1397
    %v3811 = vunpack.c.h.b16 %v1397
    %v3812 = vunpack.c.l.b16 %v1398
    %v3813 = vunpack.c.h.b16 %v1398
    %v3814 = vunpack.c.l.b16 %v1399
    %v3815 = vunpack.c.h.b16 %v1399
    %v3816 = vunpack.c.l.b16 %v1400
    %v3817 = vunpack.c.h.b16 %v1400
    %v3818 = vunpack.c.l.b16 %v1401
    %v3819 = vunpack.c.h.b16 %v1401
    %v3820 = vunpack.c.l.b16 %v1402
    %v3821 = vunpack.c.h.b16 %v1402
    %v3822 = vunpack.c.l.b16 %v1403
    %v3823 = vunpack.c.h.b16 %v1403
    %v3824 = vunpack.c.l.b16 %v1404
    %v3825 = vunpack.c.h.b16 %v1404
    %v3826 = vunpack.c.l.b16 %v1405
    %v3827 = vunpack.c.h.b16 %v1405
    %v3828 = vunpack.c.l.b16 %v1406
    %v3829 = vunpack.c.h.b16 %v1406
    %v3830 = vunpack.c.l.b16 %v1407
    %v3831 = vunpack.c.h.b16 %v1407
    %v3832 = vunpack.c.l.b16 %v1408
    %v3833 = vunpack.c.h.b16 %v1408
    %v3834 = vunpack.c.l.b16 %v1409
    %v3835 = vunpack.c.h.b16 %v1409
    %v3836 = vunpack.c.l.b16 %v1410
    %v3837 = vunpack.c.h.b16 %v1410
    %v3838 = vunpack.c.l.b16 %v1411
    %v3839 = vunpack.c.h.b16 %v1411
    %v3840 = vunpack.c.l.b16 %v1412
    %v3841 = vunpack.c.h.b16 %v1412
    %v3842 = vunpack.c.l.b16 %v1413
    %v3843 = vunpack.c.h.b16 %v1413
    %v3844 = vunpack.c.l.b16 %v1414
    %v3845 = vunpack.c.h.b16 %v1414
    %v3846 = vunpack.c.l.b16 %v1415
    %v3847 = vunpack.c.h.b16 %v1415
    %v3848 = vunpack.c.l.b16 %v1416
    %v3849 = vunpack.c.h.b16 %v1416
    %v3850 = vunpack.c.l.b16 %v1417
    %v3851 = vunpack.c.h.b16 %v1417
    %v3852 = vunpack.c.l.b16 %v1418
    %v3853 = vunpack.c.h.b16 %v1418
    %v3854 = vunpack.c.l.b16 %v1419
    %v3855 = vunpack.c.h.b16 %v1419
    %v3856 = vunpack.c.l.b16 %v1420
    %v3857 = vunpack.c.h.b16 %v1420
    %v3858 = vunpack.c.l.b16 %v1421
    %v3859 = vunpack.c.h.b16 %v1421
    %v3860 = vunpack.c.l.b16 %v1422
    %v3861 = vunpack.c.h.b16 %v1422
    %v3862 = vunpack.c.l.b16 %v1423
    %v3863 = vunpack.c.h.b16 %v1423
    %v3864 = vunpack.c.l.b16 %v1424
    %v3865 = vunpack.c.h.b16 %v1424
    %v3866 = vunpack.c.l.b16 %v1425
    %v3867 = vunpack.c.h.b16 %v1425
    %v3868 = vunpack.c.l.b16 %v1426
    %v3869 = vunpack.c.h.b16 %v1426
    %v3870 = vunpack.c.l.b16 %v1427
    %v3871 = vunpack.c.h.b16 %v1427
    %v3872 = vunpack.c.l.b16 %v1428
    %v3873 = vunpack.c.h.b16 %v1428
    %v3874 = vunpack.c.l.b16 %v1429
    %v3875 = vunpack.c.h.b16 %v1429
    %v3876 = vunpack.c.l.b16 %v1430
    %v3877 = vunpack.c.h.b16 %v1430
    %v3878 = vunpack.c.l.b16 %v1431
    %v3879 = vunpack.c.h.b16 %v1431
    %v3880 = vunpack.c.l.b16 %v1432
    %v3881 = vunpack.c.h.b16 %v1432
    %v3882 = vunpack.c.l.b16 %v1433
    %v3883 = vunpack.c.h.b16 %v1433
    %v3884 = vunpack.c.l.b16 %v1434
    %v3885 = vunpack.c.h.b16 %v1434
    %v3886 = vunpack.c.l.b16 %v1435
    %v3887 = vunpack.c.h.b16 %v1435
    %v3888 = vunpack.c.l.b16 %v1436
    %v3889 = vunpack.c.h.b16 %v1436
    %v3890 = vunpack.c.l.b16 %v1437
    %v3891 = vunpack.c.h.b16 %v1437
    %v3892 = vunpack.c.l.b16 %v1438
    %v3893 = vunpack.c.h.b16 %v1438
    %v3894 = vunpack.c.l.b16 %v1439
    %v3895 = vunpack.c.h.b16 %v1439
    %v3896 = vunpack.c.l.b16 %v1440
    %v3897 = vunpack.c.h.b16 %v1440
    %v3898 = vunpack.c.l.b16 %v1441
    %v3899 = vunpack.c.h.b16 %v1441
    %v3900 = vunpack.c.l.b16 %v1442
    %v3901 = vunpack.c.h.b16 %v1442
    %v3902 = vunpack.c.l.b16 %v1443
    %v3903 = vunpack.c.h.b16 %v1443
    %v3904 = vunpack.c.l.b16 %v1444
    %v3905 = vunpack.c.h.b16 %v1444
    %v3906 = vunpack.c.l.b16 %v1445
    %v3907 = vunpack.c.h.b16 %v1445
    %v3908 = vunpack.c.l.b16 %v1446
    %v3909 = vunpack.c.h.b16 %v1446
    %v3910 = vunpack.c.l.b16 %v1447
    %v3911 = vunpack.c.h.b16 %v1447
    %v3912 = vunpack.c.l.b16 %v1448
    %v3913 = vunpack.c.h.b16 %v1448
    %v3914 = vunpack.c.l.b16 %v1449
    %v3915 = vunpack.c.h.b16 %v1449
    %v3916 = vunpack.c.l.b16 %v1450
    %v3917 = vunpack.c.h.b16 %v1450
    %v3918 = vunpack.c.l.b16 %v1451
    %v3919 = vunpack.c.h.b16 %v1451
    %v3920 = vunpack.c.l.b16 %v1452
    %v3921 = vunpack.c.h.b16 %v1452
    %v3922 = vunpack.c.l.b16 %v1453
    %v3923 = vunpack.c.h.b16 %v1453
    %v3924 = vunpack.c.l.b16 %v1454
    %v3925 = vunpack.c.h.b16 %v1454
    %v3926 = vunpack.c.l.b16 %v1455
    %v3927 = vunpack.c.h.b16 %v1455
    %v3928 = vunpack.c.l.b16 %v1456
    %v3929 = vunpack.c.h.b16 %v1456
    %v3930 = vunpack.c.l.b16 %v1457
    %v3931 = vunpack.c.h.b16 %v1457
    %v3932 = vunpack.c.l.b16 %v1458
    %v3933 = vunpack.c.h.b16 %v1458
    %v3934 = vunpack.c.l.b16 %v1459
    %v3935 = vunpack.c.h.b16 %v1459
    %v3936 = vunpack.c.l.b16 %v1460
    %v3937 = vunpack.c.h.b16 %v1460
    %v3938 = vunpack.c.l.b16 %v1461
    %v3939 = vunpack.c.h.b16 %v1461
    %v3940 = vunpack.c.l.b16 %v1462
    %v3941 = vunpack.c.h.b16 %v1462
    %v3942 = vunpack.c.l.b16 %v1463
    %v3943 = vunpack.c.h.b16 %v1463
    %v3944 = vunpack.c.l.b16 %v1464
    %v3945 = vunpack.c.h.b16 %v1464
    %v3946 = vunpack.c.l.b16 %v1465
    %v3947 = vunpack.c.h.b16 %v1465
    %v3948 = vunpack.c.l.b16 %v1466
    %v3949 = vunpack.c.h.b16 %v1466
    %v3950 = vunpack.c.l.b16 %v1467
    %v3951 = vunpack.c.h.b16 %v1467
    %v3952 = vunpack.c.l.b16 %v1468
    %v3953 = vunpack.c.h.b16 %v1468
    %v3954 = vunpack.c.l.b16 %v1469
    %v3955 = vunpack.c.h.b16 %v1469
    %v3956 = vunpack.c.l.b16 %v1470
    %v3957 = vunpack.c.h.b16 %v1470
    %v3958 = vunpack.c.l.b16 %v1471
    %v3959 = vunpack.c.h.b16 %v1471
    %v3960 = vunpack.c.l.b16 %v1472
    %v3961 = vunpack.c.h.b16 %v1472
    %v3962 = vunpack.c.l.b16 %v1473
    %v3963 = vunpack.c.h.b16 %v1473
    %v3964 = vunpack.c.l.b16 %v1474
    %v3965 = vunpack.c.h.b16 %v1474
    %v3966 = vunpack.c.l.b16 %v1475
    %v3967 = vunpack.c.h.b16 %v1475
    %v3968 = vunpack.c.l.b16 %v1476
    %v3969 = vunpack.c.h.b16 %v1476
    %v3970 = vunpack.c.l.b16 %v1477
    %v3971 = vunpack.c.h.b16 %v1477
    %v3972 = vunpack.c.l.b16 %v1478
    %v3973 = vunpack.c.h.b16 %v1478
    %v3974 = vunpack.c.l.b16 %v1479
    %v3975 = vunpack.c.h.b16 %v1479
    %v3976 = vpack.c.b16 %v2314, %v2312
    %v3977 = vpack.c.b16 %v2315, %v2313
    %v3978 = vpack.c.b16 %v2318, %v2316
    %v3979 = vpack.c.b16 %v2319, %v2317
    %v3980 = vpack.c.b16 %v2322, %v2320
    %v3981 = vpack.c.b16 %v2323, %v2321
    %v3982 = vpack.c.b16 %v2326, %v2324
    %v3983 = vpack.c.b16 %v2327, %v2325
    %v3984 = vpack.c.b16 %v2330, %v2328
    %v3985 = vpack.c.b16 %v2331, %v2329
    %v3986 = vpack.c.b16 %v2334, %v2332
    %v3987 = vpack.c.b16 %v2335, %v2333
    %v3988 = vpack.c.b16 %v2338, %v2336
    %v3989 = vpack.c.b16 %v2339, %v2337
    %v3990 = vpack.c.b16 %v2342, %v2340
    %v3991 = vpack.c.b16 %v2343, %v2341
    %v3992 = vpack.c.b16 %v2346, %v2344
    %v3993 = vpack.c.b16 %v2347, %v2345
    %v3994 = vpack.c.b16 %v2350, %v2348
    %v3995 = vpack.c.b16 %v2351, %v2349
    %v3996 = vpack.c.b16 %v2354, %v2352
    %v3997 = vpack.c.b16 %v2355, %v2353
    %v3998 = vpack.c.b16 %v2358, %v2356
    %v3999 = vpack.c.b16 %v2359, %v2357
    %v4000 = vpack.c.b16 %v2362, %v2360
    %v4001 = vpack.c.b16 %v2363, %v2361
    %v4002 = vpack.c.b16 %v2366, %v2364
    %v4003 = vpack.c.b16 %v2367, %v2365
    %v4004 = vpack.c.b16 %v2370, %v2368
    %v4005 = vpack.c.b16 %v2371, %v2369
    %v4006 = vpack.c.b16 %v2374, %v2372
    %v4007 = vpack.c.b16 %v2375, %v2373
    %v4008 = vpack.c.b16 %v2378, %v2376
    %v4009 = vpack.c.b16 %v2379, %v2377
    %v4010 = vpack.c.b16 %v2382, %v2380
    %v4011 = vpack.c.b16 %v2383, %v2381
    %v4012 = vpack.c.b16 %v2386, %v2384
    %v4013 = vpack.c.b16 %v2387, %v2385
    %v4014 = vpack.c.b16 %v2390, %v2388
    %v4015 = vpack.c.b16 %v2391, %v2389
    %v4016 = vpack.c.b16 %v2394, %v2392
    %v4017 = vpack.c.b16 %v2395, %v2393
    %v4018 = vpack.c.b16 %v2398, %v2396
    %v4019 = vpack.c.b16 %v2399, %v2397
    %v4020 = vpack.c.b16 %v2402, %v2400
    %v4021 = vpack.c.b16 %v2403, %v2401
    %v4022 = vpack.c.b16 %v2406, %v2404
    %v4023 = vpack.c.b16 %v2407, %v2405
    %v4024 = vpack.c.b16 %v2410, %v2408
    %v4025 = vpack.c.b16 %v2411, %v2409
    %v4026 = vpack.c.b16 %v2414, %v2412
    %v4027 = vpack.c.b16 %v2415, %v2413
    %v4028 = vpack.c.b16 %v2418, %v2416
    %v4029 = vpack.c.b16 %v2419, %v2417
    %v4030 = vpack.c.b16 %v2422, %v2420
    %v4031 = vpack.c.b16 %v2423, %v2421
    %v4032 = vpack.c.b16 %v2426, %v2424
    %v4033 = vpack.c.b16 %v2427, %v2425
    %v4034 = vpack.c.b16 %v2430, %v2428
    %v4035 = vpack.c.b16 %v2431, %v2429
    %v4036 = vpack.c.b16 %v2434, %v2432
    %v4037 = vpack.c.b16 %v2435, %v2433
    %v4038 = vpack.c.b16 %v2438, %v2436
    %v4039 = vpack.c.b16 %v2439, %v2437
    %v4040 = vpack.c.b16 %v2442, %v2440
    %v4041 = vpack.c.b16 %v2443, %v2441
    %v4042 = vpack.c.b16 %v2446, %v2444
    %v4043 = vpack.c.b16 %v2447, %v2445
    %v4044 = vpack.c.b16 %v2450, %v2448
    %v4045 = vpack.c.b16 %v2451, %v2449
    %v4046 = vpack.c.b16 %v2454, %v2452
    %v4047 = vpack.c.b16 %v2455, %v2453
    %v4048 = vpack.c.b16 %v2458, %v2456
    %v4049 = vpack.c.b16 %v2459, %v2457
    %v4050 = vpack.c.b16 %v2462, %v2460
    %v4051 = vpack.c.b16 %v2463, %v2461
    %v4052 = vpack.c.b16 %v2466, %v2464
    %v4053 = vpack.c.b16 %v2467, %v2465
    %v4054 = vpack.c.b16 %v2470, %v2468
    %v4055 = vpack.c.b16 %v2471, %v2469
    %v4056 = vpack.c.b16 %v2474, %v2472
    %v4057 = vpack.c.b16 %v2475, %v2473
    %v4058 = vpack.c.b16 %v2478, %v2476
    %v4059 = vpack.c.b16 %v2479, %v2477
    %v4060 = vpack.c.b16 %v2482, %v2480
    %v4061 = vpack.c.b16 %v2483, %v2481
    %v4062 = vpack.c.b16 %v2486, %v2484
    %v4063 = vpack.c.b16 %v2487, %v2485
    %v4064 = vpack.c.b16 %v2490, %v2488
    %v4065 = vpack.c.b16 %v2491, %v2489
    %v4066 = vpack.c.b16 %v2494, %v2492
    %v4067 = vpack.c.b16 %v2495, %v2493
    %v4068 = vpack.c.b16 %v2498, %v2496
    %v4069 = vpack.c.b16 %v2499, %v2497
    %v4070 = vpack.c.b16 %v2502, %v2500
    %v4071 = vpack.c.b16 %v2503, %v2501
    %v4072 = vpack.c.b16 %v2506, %v2504
    %v4073 = vpack.c.b16 %v2507, %v2505
    %v4074 = vpack.c.b16 %v2510, %v2508
    %v4075 = vpack.c.b16 %v2511, %v2509
    %v4076 = vpack.c.b16 %v2514, %v2512
    %v4077 = vpack.c.b16 %v2515, %v2513
    %v4078 = vpack.c.b16 %v2518, %v2516
    %v4079 = vpack.c.b16 %v2519, %v2517
    %v4080 = vpack.c.b16 %v2522, %v2520
    %v4081 = vpack.c.b16 %v2523, %v2521
    %v4082 = vpack.c.b16 %v2526, %v2524
    %v4083 = vpack.c.b16 %v2527, %v2525
    %v4084 = vpack.c.b16 %v2530, %v2528
    %v4085 = vpack.c.b16 %v2531, %v2529
    %v4086 = vpack.c.b16 %v2534, %v2532
    %v4087 = vpack.c.b16 %v2535, %v2533
    %v4088 = vpack.c.b16 %v2538, %v2536
    %v4089 = vpack.c.b16 %v2539, %v2537
    %v4090 = vpack.c.b16 %v2542, %v2540
    %v4091 = vpack.c.b16 %v2543, %v2541
    %v4092 = vpack.c.b16 %v2546, %v2544
    %v4093 = vpack.c.b16 %v2547, %v2545
    %v4094 = vpack.c.b16 %v2550, %v2548
    %v4095 = vpack.c.b16 %v2551, %v2549
    %v4096 = vpack.c.b16 %v2554, %v2552
    %v4097 = vpack.c.b16 %v2555, %v2553
    %v4098 = vpack.c.b16 %v2558, %v2556
    %v4099 = vpack.c.b16 %v2559, %v2557
    %v4100 = vpack.c.b16 %v2562, %v2560
    %v4101 = vpack.c.b16 %v2563, %v2561
    %v4102 = vpack.c.b16 %v2566, %v2564
    %v4103 = vpack.c.b16 %v2567, %v2565
    %v4104 = vpack.c.b16 %v2570, %v2568
    %v4105 = vpack.c.b16 %v2571, %v2569
    %v4106 = vpack.c.b16 %v2574, %v2572
    %v4107 = vpack.c.b16 %v2575, %v2573
    %v4108 = vpack.c.b16 %v2578, %v2576
    %v4109 = vpack.c.b16 %v2579, %v2577
    %v4110 = vpack.c.b16 %v2582, %v2580
    %v4111 = vpack.c.b16 %v2583, %v2581
    %v4112 = vpack.c.b16 %v2586, %v2584
    %v4113 = vpack.c.b16 %v2587, %v2585
    %v4114 = vpack.c.b16 %v2590, %v2588
    %v4115 = vpack.c.b16 %v2591, %v2589
    %v4116 = vpack.c.b16 %v2594, %v2592
    %v4117 = vpack.c.b16 %v2595, %v2593
    %v4118 = vpack.c.b16 %v2598, %v2596
    %v4119 = vpack.c.b16 %v2599, %v2597
    %v4120 = vpack.c.b16 %v2602, %v2600
    %v4121 = vpack.c.b16 %v2603, %v2601
    %v4122 = vpack.c.b16 %v2606, %v2604
    %v4123 = vpack.c.b16 %v2607, %v2605
    %v4124 = vpack.c.b16 %v2610, %v2608
    %v4125 = vpack.c.b16 %v2611, %v2609
    %v4126 = vpack.c.b16 %v2614, %v2612
    %v4127 = vpack.c.b16 %v2615, %v2613
    %v4128 = vpack.c.b16 %v2618, %v2616
    %v4129 = vpack.c.b16 %v2619, %v2617
    %v4130 = vpack.c.b16 %v2622, %v2620
    %v4131 = vpack.c.b16 %v2623, %v2621
    %v4132 = vpack.c.b16 %v2626, %v2624
    %v4133 = vpack.c.b16 %v2627, %v2625
    %v4134 = vpack.c.b16 %v2630, %v2628
    %v4135 = vpack.c.b16 %v2631, %v2629
    %v4136 = vpack.c.b16 %v2634, %v2632
    %v4137 = vpack.c.b16 %v2635, %v2633
    %v4138 = vpack.c.b16 %v2638, %v2636
    %v4139 = vpack.c.b16 %v2639, %v2637
    %v4140 = vpack.c.b16 %v2642, %v2640
    %v4141 = vpack.c.b16 %v2643, %v2641
    %v4142 = vpack.c.b16 %v2646, %v2644
    %v4143 = vpack.c.b16 %v2647, %v2645
    %v4144 = vpack.c.b16 %v2650, %v2648
    %v4145 = vpack.c.b16 %v2651, %v2649
    %v4146 = vpack.c.b16 %v2654, %v2652
    %v4147 = vpack.c.b16 %v2655, %v2653
    %v4148 = vpack.c.b16 %v2658, %v2656
    %v4149 = vpack.c.b16 %v2659, %v2657
    %v4150 = vpack.c.b16 %v2662, %v2660
    %v4151 = vpack.c.b16 %v2663, %v2661
    %v4152 = vpack.c.b16 %v2666, %v2664
    %v4153 = vpack.c.b16 %v2667, %v2665
    %v4154 = vpack.c.b16 %v2670, %v2668
    %v4155 = vpack.c.b16 %v2671, %v2669
    %v4156 = vpack.c.b16 %v2674, %v2672
    %v4157 = vpack.c.b16 %v2675, %v2673
    %v4158 = vpack.c.b16 %v2678, %v2676
    %v4159 = vpack.c.b16 %v2679, %v2677
    %v4160 = vpack.c.b16 %v2682, %v2680
    %v4161 = vpack.c.b16 %v2683, %v2681
    %v4162 = vpack.c.b16 %v2686, %v2684
    %v4163 = vpack.c.b16 %v2687, %v2685
    %v4164 = vpack.c.b16 %v2690, %v2688
    %v4165 = vpack.c.b16 %v2691, %v2689
    %v4166 = vpack.c.b16 %v2694, %v2692
    %v4167 = vpack.c.b16 %v2695, %v2693
    %v4168 = vpack.c.b16 %v2698, %v2696
    %v4169 = vpack.c.b16 %v2699, %v2697
    %v4170 = vpack.c.b16 %v2702, %v2700
    %v4171 = vpack.c.b16 %v2703, %v2701
    %v4172 = vpack.c.b16 %v2706, %v2704
    %v4173 = vpack.c.b16 %v2707, %v2705
    %v4174 = vpack.c.b16 %v2710, %v2708
    %v4175 = vpack.c.b16 %v2711, %v2709
    %v4176 = vpack.c.b16 %v2714, %v2712
    %v4177 = vpack.c.b16 %v2715, %v2713
    %v4178 = vpack.c.b16 %v2718, %v2716
    %v4179 = vpack.c.b16 %v2719, %v2717
    %v4180 = vpack.c.b16 %v2722, %v2720
    %v4181 = vpack.c.b16 %v2723, %v2721
    %v4182 = vpack.c.b16 %v2726, %v2724
    %v4183 = vpack.c.b16 %v2727, %v2725
    %v4184 = vpack.c.b16 %v2730, %v2728
    %v4185 = vpack.c.b16 %v2731, %v2729
    %v4186 = vpack.c.b16 %v2734, %v2732
    %v4187 = vpack.c.b16 %v2735, %v2733
    %v4188 = vpack.c.b16 %v2738, %v2736
    %v4189 = vpack.c.b16 %v2739, %v2737
    %v4190 = vpack.c.b16 %v2742, %v2740
    %v4191 = vpack.c.b16 %v2743, %v2741
    %v4192 = vpack.c.b16 %v2746, %v2744
    %v4193 = vpack.c.b16 %v2747, %v2745
    %v4194 = vpack.c.b16 %v2750, %v2748
    %v4195 = vpack.c.b16 %v2751, %v2749
    %v4196 = vpack.c.b16 %v2754, %v2752
    %v4197 = vpack.c.b16 %v2755, %v2753
    %v4198 = vpack.c.b16 %v2758, %v2756
    %v4199 = vpack.c.b16 %v2759, %v2757
    %v4200 = vpack.c.b16 %v2762, %v2760
    %v4201 = vpack.c.b16 %v2763, %v2761
    %v4202 = vpack.c.b16 %v2766, %v2764
    %v4203 = vpack.c.b16 %v2767, %v2765
    %v4204 = vpack.c.b16 %v2770, %v2768
    %v4205 = vpack.c.b16 %v2771, %v2769
    %v4206 = vpack.c.b16 %v2774, %v2772
    %v4207 = vpack.c.b16 %v2775, %v2773
    %v4208 = vpack.c.b16 %v2778, %v2776
    %v4209 = vpack.c.b16 %v2779, %v2777
    %v4210 = vpack.c.b16 %v2782, %v2780
    %v4211 = vpack.c.b16 %v2783, %v2781
    %v4212 = vpack.c.b16 %v2786, %v2784
    %v4213 = vpack.c.b16 %v2787, %v2785
    %v4214 = vpack.c.b16 %v2790, %v2788
    %v4215 = vpack.c.b16 %v2791, %v2789
    %v4216 = vpack.c.b16 %v2794, %v2792
    %v4217 = vpack.c.b16 %v2795, %v2793
    %v4218 = vpack.c.b16 %v2798, %v2796
    %v4219 = vpack.c.b16 %v2799, %v2797
    %v4220 = vpack.c.b16 %v2802, %v2800
    %v4221 = vpack.c.b16 %v2803, %v2801
    %v4222 = vpack.c.b16 %v2806, %v2804
    %v4223 = vpack.c.b16 %v2807, %v2805
    %v4224 = vpack.c.b16 %v2810, %v2808
    %v4225 = vpack.c.b16 %v2811, %v2809
    %v4226 = vpack.c.b16 %v2814, %v2812
    %v4227 = vpack.c.b16 %v2815, %v2813
    %v4228 = vpack.c.b16 %v2818, %v2816
    %v4229 = vpack.c.b16 %v2819, %v2817
    %v4230 = vpack.c.b16 %v2822, %v2820
    %v4231 = vpack.c.b16 %v2823, %v2821
    %v4232 = vpack.c.b16 %v2826, %v2824
    %v4233 = vpack.c.b16 %v2827, %v2825
    %v4234 = vpack.c.b16 %v2830, %v2828
    %v4235 = vpack.c.b16 %v2831, %v2829
    %v4236 = vpack.c.b16 %v2834, %v2832
    %v4237 = vpack.c.b16 %v2835, %v2833
    %v4238 = vpack.c.b16 %v2838, %v2836
    %v4239 = vpack.c.b16 %v2839, %v2837
    %v4240 = vpack.c.b16 %v2842, %v2840
    %v4241 = vpack.c.b16 %v2843, %v2841
    %v4242 = vpack.c.b16 %v2846, %v2844
    %v4243 = vpack.c.b16 %v2847, %v2845
    %v4244 = vpack.c.b16 %v2850, %v2848
    %v4245 = vpack.c.b16 %v2851, %v2849
    %v4246 = vpack.c.b16 %v2854, %v2852
    %v4247 = vpack.c.b16 %v2855, %v2853
    %v4248 = vpack.c.b16 %v2858, %v2856
    %v4249 = vpack.c.b16 %v2859, %v2857
    %v4250 = vpack.c.b16 %v2862, %v2860
    %v4251 = vpack.c.b16 %v2863, %v2861
    %v4252 = vpack.c.b16 %v2866, %v2864
    %v4253 = vpack.c.b16 %v2867, %v2865
    %v4254 = vpack.c.b16 %v2870, %v2868
    %v4255 = vpack.c.b16 %v2871, %v2869
    %v4256 = vpack.c.b16 %v2874, %v2872
    %v4257 = vpack.c.b16 %v2875, %v2873
    %v4258 = vpack.c.b16 %v2878, %v2876
    %v4259 = vpack.c.b16 %v2879, %v2877
    %v4260 = vpack.c.b16 %v2882, %v2880
    %v4261 = vpack.c.b16 %v2883, %v2881
    %v4262 = vpack.c.b16 %v2886, %v2884
    %v4263 = vpack.c.b16 %v2887, %v2885
    %v4264 = vpack.c.b16 %v2890, %v2888
    %v4265 = vpack.c.b16 %v2891, %v2889
    %v4266 = vpack.c.b16 %v2894, %v2892
    %v4267 = vpack.c.b16 %v2895, %v2893
    %v4268 = vpack.c.b16 %v2898, %v2896
    %v4269 = vpack.c.b16 %v2899, %v2897
    %v4270 = vpack.c.b16 %v2902, %v2900
    %v4271 = vpack.c.b16 %v2903, %v2901
    %v4272 = vpack.c.b16 %v2906, %v2904
    %v4273 = vpack.c.b16 %v2907, %v2905
    %v4274 = vpack.c.b16 %v2910, %v2908
    %v4275 = vpack.c.b16 %v2911, %v2909
    %v4276 = vpack.c.b16 %v2914, %v2912
    %v4277 = vpack.c.b16 %v2915, %v2913
    %v4278 = vpack.c.b16 %v2918, %v2916
    %v4279 = vpack.c.b16 %v2919, %v2917
    %v4280 = vpack.c.b16 %v2922, %v2920
    %v4281 = vpack.c.b16 %v2923, %v2921
    %v4282 = vpack.c.b16 %v2926, %v2924
    %v4283 = vpack.c.b16 %v2927, %v2925
    %v4284 = vpack.c.b16 %v2930, %v2928
    %v4285 = vpack.c.b16 %v2931, %v2929
    %v4286 = vpack.c.b16 %v2934, %v2932
    %v4287 = vpack.c.b16 %v2935, %v2933
    %v4288 = vpack.c.b16 %v2938, %v2936
    %v4289 = vpack.c.b16 %v2939, %v2937
    %v4290 = vpack.c.b16 %v2942, %v2940
    %v4291 = vpack.c.b16 %v2943, %v2941
    %v4292 = vpack.c.b16 %v2946, %v2944
    %v4293 = vpack.c.b16 %v2947, %v2945
    %v4294 = vpack.c.b16 %v2950, %v2948
    %v4295 = vpack.c.b16 %v2951, %v2949
    %v4296 = vpack.c.b16 %v2954, %v2952
    %v4297 = vpack.c.b16 %v2955, %v2953
    %v4298 = vpack.c.b16 %v2958, %v2956
    %v4299 = vpack.c.b16 %v2959, %v2957
    %v4300 = vpack.c.b16 %v2962, %v2960
    %v4301 = vpack.c.b16 %v2963, %v2961
    %v4302 = vpack.c.b16 %v2966, %v2964
    %v4303 = vpack.c.b16 %v2967, %v2965
    %v4304 = vpack.c.b16 %v2970, %v2968
    %v4305 = vpack.c.b16 %v2971, %v2969
    %v4306 = vpack.c.b16 %v2974, %v2972
    %v4307 = vpack.c.b16 %v2975, %v2973
    %v4308 = vpack.c.b16 %v2978, %v2976
    %v4309 = vpack.c.b16 %v2979, %v2977
    %v4310 = vpack.c.b16 %v2982, %v2980
    %v4311 = vpack.c.b16 %v2983, %v2981
    %v4312 = vpack.c.b16 %v2986, %v2984
    %v4313 = vpack.c.b16 %v2987, %v2985
    %v4314 = vpack.c.b16 %v2990, %v2988
    %v4315 = vpack.c.b16 %v2991, %v2989
    %v4316 = vpack.c.b16 %v2994, %v2992
    %v4317 = vpack.c.b16 %v2995, %v2993
    %v4318 = vpack.c.b16 %v2998, %v2996
    %v4319 = vpack.c.b16 %v2999, %v2997
    %v4320 = vpack.c.b16 %v3002, %v3000
    %v4321 = vpack.c.b16 %v3003, %v3001
    %v4322 = vpack.c.b16 %v3006, %v3004
    %v4323 = vpack.c.b16 %v3007, %v3005
    %v4324 = vpack.c.b16 %v3010, %v3008
    %v4325 = vpack.c.b16 %v3011, %v3009
    %v4326 = vpack.c.b16 %v3014, %v3012
    %v4327 = vpack.c.b16 %v3015, %v3013
    %v4328 = vpack.c.b16 %v3018, %v3016
    %v4329 = vpack.c.b16 %v3019, %v3017
    %v4330 = vpack.c.b16 %v3022, %v3020
    %v4331 = vpack.c.b16 %v3023, %v3021
    %v4332 = vpack.c.b16 %v3026, %v3024
    %v4333 = vpack.c.b16 %v3027, %v3025
    %v4334 = vpack.c.b16 %v3030, %v3028
    %v4335 = vpack.c.b16 %v3031, %v3029
    %v4336 = vpack.c.b16 %v3034, %v3032
    %v4337 = vpack.c.b16 %v3035, %v3033
    %v4338 = vpack.c.b16 %v3038, %v3036
    %v4339 = vpack.c.b16 %v3039, %v3037
    %v4340 = vpack.c.b16 %v3042, %v3040
    %v4341 = vpack.c.b16 %v3043, %v3041
    %v4342 = vpack.c.b16 %v3046, %v3044
    %v4343 = vpack.c.b16 %v3047, %v3045
    %v4344 = vpack.c.b16 %v3050, %v3048
    %v4345 = vpack.c.b16 %v3051, %v3049
    %v4346 = vpack.c.b16 %v3054, %v3052
    %v4347 = vpack.c.b16 %v3055, %v3053
    %v4348 = vpack.c.b16 %v3058, %v3056
    %v4349 = vpack.c.b16 %v3059, %v3057
    %v4350 = vpack.c.b16 %v3062, %v3060
    %v4351 = vpack.c.b16 %v3063, %v3061
    %v4352 = vpack.c.b16 %v3066, %v3064
    %v4353 = vpack.c.b16 %v3067, %v3065
    %v4354 = vpack.c.b16 %v3070, %v3068
    %v4355 = vpack.c.b16 %v3071, %v3069
    %v4356 = vpack.c.b16 %v3074, %v3072
    %v4357 = vpack.c.b16 %v3075, %v3073
    %v4358 = vpack.c.b16 %v3078, %v3076
    %v4359 = vpack.c.b16 %v3079, %v3077
    %v4360 = vpack.c.b16 %v3082, %v3080
    %v4361 = vpack.c.b16 %v3083, %v3081
    %v4362 = vpack.c.b16 %v3086, %v3084
    %v4363 = vpack.c.b16 %v3087, %v3085
    %v4364 = vpack.c.b16 %v3090, %v3088
    %v4365 = vpack.c.b16 %v3091, %v3089
    %v4366 = vpack.c.b16 %v3094, %v3092
    %v4367 = vpack.c.b16 %v3095, %v3093
    %v4368 = vpack.c.b16 %v3098, %v3096
    %v4369 = vpack.c.b16 %v3099, %v3097
    %v4370 = vpack.c.b16 %v3102, %v3100
    %v4371 = vpack.c.b16 %v3103, %v3101
    %v4372 = vpack.c.b16 %v3106, %v3104
    %v4373 = vpack.c.b16 %v3107, %v3105
    %v4374 = vpack.c.b16 %v3110, %v3108
    %v4375 = vpack.c.b16 %v3111, %v3109
    %v4376 = vpack.c.b16 %v3114, %v3112
    %v4377 = vpack.c.b16 %v3115, %v3113
    %v4378 = vpack.c.b16 %v3118, %v3116
    %v4379 = vpack.c.b16 %v3119, %v3117
    %v4380 = vpack.c.b16 %v3122, %v3120
    %v4381 = vpack.c.b16 %v3123, %v3121
    %v4382 = vpack.c.b16 %v3126, %v3124
    %v4383 = vpack.c.b16 %v3127, %v3125
    %v4384 = vpack.c.b16 %v3130, %v3128
    %v4385 = vpack.c.b16 %v3131, %v3129
    %v4386 = vpack.c.b16 %v3134, %v3132
    %v4387 = vpack.c.b16 %v3135, %v3133
    %v4388 = vpack.c.b16 %v3138, %v3136
    %v4389 = vpack.c.b16 %v3139, %v3137
    %v4390 = vpack.c.b16 %v3142, %v3140
    %v4391 = vpack.c.b16 %v3143, %v3141
    %v4392 = vpack.c.b16 %v3146, %v3144
    %v4393 = vpack.c.b16 %v3147, %v3145
    %v4394 = vpack.c.b16 %v3150, %v3148
    %v4395 = vpack.c.b16 %v3151, %v3149
    %v4396 = vpack.c.b16 %v3154, %v3152
    %v4397 = vpack.c.b16 %v3155, %v3153
    %v4398 = vpack.c.b16 %v3158, %v3156
    %v4399 = vpack.c.b16 %v3159, %v3157
    %v4400 = vpack.c.b16 %v3162, %v3160
    %v4401 = vpack.c.b16 %v3163, %v3161
    %v4402 = vpack.c.b16 %v3166, %v3164
    %v4403 = vpack.c.b16 %v3167, %v3165
    %v4404 = vpack.c.b16 %v3170, %v3168
    %v4405 = vpack.c.b16 %v3171, %v3169
    %v4406 = vpack.c.b16 %v3174, %v3172
    %v4407 = vpack.c.b16 %v3175, %v3173
    %v4408 = vpack.c.b16 %v3178, %v3176
    %v4409 = vpack.c.b16 %v3179, %v3177
    %v4410 = vpack.c.b16 %v3182, %v3180
    %v4411 = vpack.c.b16 %v3183, %v3181
    %v4412 = vpack.c.b16 %v3186, %v3184
    %v4413 = vpack.c.b16 %v3187, %v3185
    %v4414 = vpack.c.b16 %v3190, %v3188
    %v4415 = vpack.c.b16 %v3191, %v3189
    %v4416 = vpack.c.b16 %v3194, %v3192
    %v4417 = vpack.c.b16 %v3195, %v3193
    %v4418 = vpack.c.b16 %v3198, %v3196
    %v4419 = vpack.c.b16 %v3199, %v3197
    %v4420 = vpack.c.b16 %v3202, %v3200
    %v4421 = vpack.c.b16 %v3203, %v3201
    %v4422 = vpack.c.b16 %v3206, %v3204
    %v4423 = vpack.c.b16 %v3207, %v3205
    %v4424 = vpack.c.b16 %v3210, %v3208
    %v4425 = vpack.c.b16 %v3211, %v3209
    %v4426 = vpack.c.b16 %v3214, %v3212
    %v4427 = vpack.c.b16 %v3215, %v3213
    %v4428 = vpack.c.b16 %v3218, %v3216
    %v4429 = vpack.c.b16 %v3219, %v3217
    %v4430 = vpack.c.b16 %v3222, %v3220
    %v4431 = vpack.c.b16 %v3223, %v3221
    %v4432 = vpack.c.b16 %v3226, %v3224
    %v4433 = vpack.c.b16 %v3227, %v3225
    %v4434 = vpack.c.b16 %v3230, %v3228
    %v4435 = vpack.c.b16 %v3231, %v3229
    %v4436 = vpack.c.b16 %v3234, %v3232
    %v4437 = vpack.c.b16 %v3235, %v3233
    %v4438 = vpack.c.b16 %v3238, %v3236
    %v4439 = vpack.c.b16 %v3239, %v3237
    %v4440 = vpack.c.b16 %v3242, %v3240
    %v4441 = vpack.c.b16 %v3243, %v3241
    %v4442 = vpack.c.b16 %v3246, %v3244
    %v4443 = vpack.c.b16 %v3247, %v3245
    %v4444 = vpack.c.b16 %v3250, %v3248
    %v4445 = vpack.c.b16 %v3251, %v3249
    %v4446 = vpack.c.b16 %v3254, %v3252
    %v4447 = vpack.c.b16 %v3255, %v3253
    %v4448 = vpack.c.b16 %v3258, %v3256
    %v4449 = vpack.c.b16 %v3259, %v3257
    %v4450 = vpack.c.b16 %v3262, %v3260
    %v4451 = vpack.c.b16 %v3263, %v3261
    %v4452 = vpack.c.b16 %v3266, %v3264
    %v4453 = vpack.c.b16 %v3267, %v3265
    %v4454 = vpack.c.b16 %v3270, %v3268
    %v4455 = vpack.c.b16 %v3271, %v3269
    %v4456 = vpack.c.b16 %v3274, %v3272
    %v4457 = vpack.c.b16 %v3275, %v3273
    %v4458 = vpack.c.b16 %v3278, %v3276
    %v4459 = vpack.c.b16 %v3279, %v3277
    %v4460 = vpack.c.b16 %v3282, %v3280
    %v4461 = vpack.c.b16 %v3283, %v3281
    %v4462 = vpack.c.b16 %v3286, %v3284
    %v4463 = vpack.c.b16 %v3287, %v3285
    %v4464 = vpack.c.b16 %v3290, %v3288
    %v4465 = vpack.c.b16 %v3291, %v3289
    %v4466 = vpack.c.b16 %v3294, %v3292
    %v4467 = vpack.c.b16 %v3295, %v3293
    %v4468 = vpack.c.b16 %v3298, %v3296
    %v4469 = vpack.c.b16 %v3299, %v3297
    %v4470 = vpack.c.b16 %v3302, %v3300
    %v4471 = vpack.c.b16 %v3303, %v3301
    %v4472 = vpack.c.b16 %v3306, %v3304
    %v4473 = vpack.c.b16 %v3307, %v3305
    %v4474 = vpack.c.b16 %v3310, %v3308
    %v4475 = vpack.c.b16 %v3311, %v3309
    %v4476 = vpack.c.b16 %v3314, %v3312
    %v4477 = vpack.c.b16 %v3315, %v3313
    %v4478 = vpack.c.b16 %v3318, %v3316
    %v4479 = vpack.c.b16 %v3319, %v3317
    %v4480 = vpack.c.b16 %v3322, %v3320
    %v4481 = vpack.c.b16 %v3323, %v3321
    %v4482 = vpack.c.b16 %v3326, %v3324
    %v4483 = vpack.c.b16 %v3327, %v3325
    %v4484 = vpack.c.b16 %v3330, %v3328
    %v4485 = vpack.c.b16 %v3331, %v3329
    %v4486 = vpack.c.b16 %v3334, %v3332
    %v4487 = vpack.c.b16 %v3335, %v3333
    %v4488 = vpack.c.b16 %v3338, %v3336
    %v4489 = vpack.c.b16 %v3339, %v3337
    %v4490 = vpack.c.b16 %v3342, %v3340
    %v4491 = vpack.c.b16 %v3343, %v3341
    %v4492 = vpack.c.b16 %v3346, %v3344
    %v4493 = vpack.c.b16 %v3347, %v3345
    %v4494 = vpack.c.b16 %v3350, %v3348
    %v4495 = vpack.c.b16 %v3351, %v3349
    %v4496 = vpack.c.b16 %v3354, %v3352
    %v4497 = vpack.c.b16 %v3355, %v3353
    %v4498 = vpack.c.b16 %v3358, %v3356
    %v4499 = vpack.c.b16 %v3359, %v3357
    %v4500 = vpack.c.b16 %v3362, %v3360
    %v4501 = vpack.c.b16 %v3363, %v3361
    %v4502 = vpack.c.b16 %v3366, %v3364
    %v4503 = vpack.c.b16 %v3367, %v3365
    %v4504 = vpack.c.b16 %v3370, %v3368
    %v4505 = vpack.c.b16 %v3371, %v3369
    %v4506 = vpack.c.b16 %v3374, %v3372
    %v4507 = vpack.c.b16 %v3375, %v3373
    %v4508 = vpack.c.b16 %v3378, %v3376
    %v4509 = vpack.c.b16 %v3379, %v3377
    %v4510 = vpack.c.b16 %v3382, %v3380
    %v4511 = vpack.c.b16 %v3383, %v3381
    %v4512 = vpack.c.b16 %v3386, %v3384
    %v4513 = vpack.c.b16 %v3387, %v3385
    %v4514 = vpack.c.b16 %v3390, %v3388
    %v4515 = vpack.c.b16 %v3391, %v3389
    %v4516 = vpack.c.b16 %v3394, %v3392
    %v4517 = vpack.c.b16 %v3395, %v3393
    %v4518 = vpack.c.b16 %v3398, %v3396
    %v4519 = vpack.c.b16 %v3399, %v3397
    %v4520 = vpack.c.b16 %v3402, %v3400
    %v4521 = vpack.c.b16 %v3403, %v3401
    %v4522 = vpack.c.b16 %v3406, %v3404
    %v4523 = vpack.c.b16 %v3407, %v3405
    %v4524 = vpack.c.b16 %v3410, %v3408
    %v4525 = vpack.c.b16 %v3411, %v3409
    %v4526 = vpack.c.b16 %v3414, %v3412
    %v4527 = vpack.c.b16 %v3415, %v3413
    %v4528 = vpack.c.b16 %v3418, %v3416
    %v4529 = vpack.c.b16 %v3419, %v3417
    %v4530 = vpack.c.b16 %v3422, %v3420
    %v4531 = vpack.c.b16 %v3423, %v3421
    %v4532 = vpack.c.b16 %v3426, %v3424
    %v4533 = vpack.c.b16 %v3427, %v3425
    %v4534 = vpack.c.b16 %v3430, %v3428
    %v4535 = vpack.c.b16 %v3431, %v3429
    %v4536 = vpack.c.b16 %v3434, %v3432
    %v4537 = vpack.c.b16 %v3435, %v3433
    %v4538 = vpack.c.b16 %v3438, %v3436
    %v4539 = vpack.c.b16 %v3439, %v3437
    %v4540 = vpack.c.b16 %v3442, %v3440
    %v4541 = vpack.c.b16 %v3443, %v3441
    %v4542 = vpack.c.b16 %v3446, %v3444
    %v4543 = vpack.c.b16 %v3447, %v3445
    %v4544 = vpack.c.b16 %v3450, %v3448
    %v4545 = vpack.c.b16 %v3451, %v3449
    %v4546 = vpack.c.b16 %v3454, %v3452
    %v4547 = vpack.c.b16 %v3455, %v3453
    %v4548 = vpack.c.b16 %v3458, %v3456
    %v4549 = vpack.c.b16 %v3459, %v3457
    %v4550 = vpack.c.b16 %v3462, %v3460
    %v4551 = vpack.c.b16 %v3463, %v3461
    %v4552 = vpack.c.b16 %v3466, %v3464
    %v4553 = vpack.c.b16 %v3467, %v3465
    %v4554 = vpack.c.b16 %v3470, %v3468
    %v4555 = vpack.c.b16 %v3471, %v3469
    %v4556 = vpack.c.b16 %v3474, %v3472
    %v4557 = vpack.c.b16 %v3475, %v3473
    %v4558 = vpack.c.b16 %v3478, %v3476
    %v4559 = vpack.c.b16 %v3479, %v3477
    %v4560 = vpack.c.b16 %v3482, %v3480
    %v4561 = vpack.c.b16 %v3483, %v3481
    %v4562 = vpack.c.b16 %v3486, %v3484
    %v4563 = vpack.c.b16 %v3487, %v3485
    %v4564 = vpack.c.b16 %v3490, %v3488
    %v4565 = vpack.c.b16 %v3491, %v3489
    %v4566 = vpack.c.b16 %v3494, %v3492
    %v4567 = vpack.c.b16 %v3495, %v3493
    %v4568 = vpack.c.b16 %v3498, %v3496
    %v4569 = vpack.c.b16 %v3499, %v3497
    %v4570 = vpack.c.b16 %v3502, %v3500
    %v4571 = vpack.c.b16 %v3503, %v3501
    %v4572 = vpack.c.b16 %v3506, %v3504
    %v4573 = vpack.c.b16 %v3507, %v3505
    %v4574 = vpack.c.b16 %v3510, %v3508
    %v4575 = vpack.c.b16 %v3511, %v3509
    %v4576 = vpack.c.b16 %v3514, %v3512
    %v4577 = vpack.c.b16 %v3515, %v3513
    %v4578 = vpack.c.b16 %v3518, %v3516
    %v4579 = vpack.c.b16 %v3519, %v3517
    %v4580 = vpack.c.b16 %v3522, %v3520
    %v4581 = vpack.c.b16 %v3523, %v3521
    %v4582 = vpack.c.b16 %v3526, %v3524
    %v4583 = vpack.c.b16 %v3527, %v3525
    %v4584 = vpack.c.b16 %v3530, %v3528
    %v4585 = vpack.c.b16 %v3531, %v3529
    %v4586 = vpack.c.b16 %v3534, %v3532
    %v4587 = vpack.c.b16 %v3535, %v3533
    %v4588 = vpack.c.b16 %v3538, %v3536
    %v4589 = vpack.c.b16 %v3539, %v3537
    %v4590 = vpack.c.b16 %v3542, %v3540
    %v4591 = vpack.c.b16 %v3543, %v3541
    %v4592 = vpack.c.b16 %v3546, %v3544
    %v4593 = vpack.c.b16 %v3547, %v3545
    %v4594 = vpack.c.b16 %v3550, %v3548
    %v4595 = vpack.c.b16 %v3551, %v3549
    %v4596 = vpack.c.b16 %v3554, %v3552
    %v4597 = vpack.c.b16 %v3555, %v3553
    %v4598 = vpack.c.b16 %v3558, %v3556
    %v4599 = vpack.c.b16 %v3559, %v3557
    %v4600 = vpack.c.b16 %v3562, %v3560
    %v4601 = vpack.c.b16 %v3563, %v3561
    %v4602 = vpack.c.b16 %v3566, %v3564
    %v4603 = vpack.c.b16 %v3567, %v3565
    %v4604 = vpack.c.b16 %v3570, %v3568
    %v4605 = vpack.c.b16 %v3571, %v3569
    %v4606 = vpack.c.b16 %v3574, %v3572
    %v4607 = vpack.c.b16 %v3575, %v3573
    %v4608 = vpack.c.b16 %v3578, %v3576
    %v4609 = vpack.c.b16 %v3579, %v3577
    %v4610 = vpack.c.b16 %v3582, %v3580
    %v4611 = vpack.c.b16 %v3583, %v3581
    %v4612 = vpack.c.b16 %v3586, %v3584
    %v4613 = vpack.c.b16 %v3587, %v3585
    %v4614 = vpack.c.b16 %v3590, %v3588
    %v4615 = vpack.c.b16 %v3591, %v3589
    %v4616 = vpack.c.b16 %v3594, %v3592
    %v4617 = vpack.c.b16 %v3595, %v3593
    %v4618 = vpack.c.b16 %v3598, %v3596
    %v4619 = vpack.c.b16 %v3599, %v3597
    %v4620 = vpack.c.b16 %v3602, %v3600
    %v4621 = vpack.c.b16 %v3603, %v3601
    %v4622 = vpack.c.b16 %v3606, %v3604
    %v4623 = vpack.c.b16 %v3607, %v3605
    %v4624 = vpack.c.b16 %v3610, %v3608
    %v4625 = vpack.c.b16 %v3611, %v3609
    %v4626 = vpack.c.b16 %v3614, %v3612
    %v4627 = vpack.c.b16 %v3615, %v3613
    %v4628 = vpack.c.b16 %v3618, %v3616
    %v4629 = vpack.c.b16 %v3619, %v3617
    %v4630 = vpack.c.b16 %v3622, %v3620
    %v4631 = vpack.c.b16 %v3623, %v3621
    %v4632 = vpack.c.b16 %v3626, %v3624
    %v4633 = vpack.c.b16 %v3627, %v3625
    %v4634 = vpack.c.b16 %v3630, %v3628
    %v4635 = vpack.c.b16 %v3631, %v3629
    %v4636 = vpack.c.b16 %v3634, %v3632
    %v4637 = vpack.c.b16 %v3635, %v3633
    %v4638 = vpack.c.b16 %v3638, %v3636
    %v4639 = vpack.c.b16 %v3639, %v3637
    %v4640 = vpack.c.b16 %v3642, %v3640
    %v4641 = vpack.c.b16 %v3643, %v3641
    %v4642 = vpack.c.b16 %v3646, %v3644
    %v4643 = vpack.c.b16 %v3647, %v3645
    %v4644 = vpack.c.b16 %v3650, %v3648
    %v4645 = vpack.c.b16 %v3651, %v3649
    %v4646 = vpack.c.b16 %v3654, %v3652
    %v4647 = vpack.c.b16 %v3655, %v3653
    %v4648 = vpack.c.b16 %v3658, %v3656
    %v4649 = vpack.c.b16 %v3659, %v3657
    %v4650 = vpack.c.b16 %v3662, %v3660
    %v4651 = vpack.c.b16 %v3663, %v3661
    %v4652 = vpack.c.b16 %v3666, %v3664
    %v4653 = vpack.c.b16 %v3667, %v3665
    %v4654 = vpack.c.b16 %v3670, %v3668
    %v4655 = vpack.c.b16 %v3671, %v3669
    %v4656 = vpack.c.b16 %v3674, %v3672
    %v4657 = vpack.c.b16 %v3675, %v3673
    %v4658 = vpack.c.b16 %v3678, %v3676
    %v4659 = vpack.c.b16 %v3679, %v3677
    %v4660 = vpack.c.b16 %v3682, %v3680
    %v4661 = vpack.c.b16 %v3683, %v3681
    %v4662 = vpack.c.b16 %v3686, %v3684
    %v4663 = vpack.c.b16 %v3687, %v3685
    %v4664 = vpack.c.b16 %v3690, %v3688
    %v4665 = vpack.c.b16 %v3691, %v3689
    %v4666 = vpack.c.b16 %v3694, %v3692
    %v4667 = vpack.c.b16 %v3695, %v3693
    %v4668 = vpack.c.b16 %v3698, %v3696
    %v4669 = vpack.c.b16 %v3699, %v3697
    %v4670 = vpack.c.b16 %v3702, %v3700
    %v4671 = vpack.c.b16 %v3703, %v3701
    %v4672 = vpack.c.b16 %v3706, %v3704
    %v4673 = vpack.c.b16 %v3707, %v3705
    %v4674 = vpack.c.b16 %v3710, %v3708
    %v4675 = vpack.c.b16 %v3711, %v3709
    %v4676 = vpack.c.b16 %v3714, %v3712
    %v4677 = vpack.c.b16 %v3715, %v3713
    %v4678 = vpack.c.b16 %v3718, %v3716
    %v4679 = vpack.c.b16 %v3719, %v3717
    %v4680 = vpack.c.b16 %v3722, %v3720
    %v4681 = vpack.c.b16 %v3723, %v3721
    %v4682 = vpack.c.b16 %v3726, %v3724
    %v4683 = vpack.c.b16 %v3727, %v3725
    %v4684 = vpack.c.b16 %v3730, %v3728
    %v4685 = vpack.c.b16 %v3731, %v3729
    %v4686 = vpack.c.b16 %v3734, %v3732
    %v4687 = vpack.c.b16 %v3735, %v3733
    %v4688 = vpack.c.b16 %v3738, %v3736
    %v4689 = vpack.c.b16 %v3739, %v3737
    %v4690 = vpack.c.b16 %v3742, %v3740
    %v4691 = vpack.c.b16 %v3743, %v3741
    %v4692 = vpack.c.b16 %v3746, %v3744
    %v4693 = vpack.c.b16 %v3747, %v3745
    %v4694 = vpack.c.b16 %v3750, %v3748
    %v4695 = vpack.c.b16 %v3751, %v3749
    %v4696 = vpack.c.b16 %v3754, %v3752
    %v4697 = vpack.c.b16 %v3755, %v3753
    %v4698 = vpack.c.b16 %v3758, %v3756
    %v4699 = vpack.c.b16 %v3759, %v3757
    %v4700 = vpack.c.b16 %v3762, %v3760
    %v4701 = vpack.c.b16 %v3763, %v3761
    %v4702 = vpack.c.b16 %v3766, %v3764
    %v4703 = vpack.c.b16 %v3767, %v3765
    %v4704 = vpack.c.b16 %v3770, %v3768
    %v4705 = vpack.c.b16 %v3771, %v3769
    %v4706 = vpack.c.b16 %v3774, %v3772
    %v4707 = vpack.c.b16 %v3775, %v3773
    %v4708 = vpack.c.b16 %v3778, %v3776
    %v4709 = vpack.c.b16 %v3779, %v3777
    %v4710 = vpack.c.b16 %v3782, %v3780
    %v4711 = vpack.c.b16 %v3783, %v3781
    %v4712 = vpack.c.b16 %v3786, %v3784
    %v4713 = vpack.c.b16 %v3787, %v3785
    %v4714 = vpack.c.b16 %v3790, %v3788
    %v4715 = vpack.c.b16 %v3791, %v3789
    %v4716 = vpack.c.b16 %v3794, %v3792
    %v4717 = vpack.c.b16 %v3795, %v3793
    %v4718 = vpack.c.b16 %v3798, %v3796
    %v4719 = vpack.c.b16 %v3799, %v3797
    %v4720 = vpack.c.b16 %v3802, %v3800
    %v4721 = vpack.c.b16 %v3803, %v3801
    %v4722 = vpack.c.b16 %v3806, %v3804
    %v4723 = vpack.c.b16 %v3807, %v3805
    %v4724 = vpack.c.b16 %v3810, %v3808
    %v4725 = vpack.c.b16 %v3811, %v3809
    %v4726 = vpack.c.b16 %v3814, %v3812
    %v4727 = vpack.c.b16 %v3815, %v3813
    %v4728 = vpack.c.b16 %v3818, %v3816
    %v4729 = vpack.c.b16 %v3819, %v3817
    %v4730 = vpack.c.b16 %v3822, %v3820
    %v4731 = vpack.c.b16 %v3823, %v3821
    %v4732 = vpack.c.b16 %v3826, %v3824
    %v4733 = vpack.c.b16 %v3827, %v3825
    %v4734 = vpack.c.b16 %v3830, %v3828
    %v4735 = vpack.c.b16 %v3831, %v3829
    %v4736 = vpack.c.b16 %v3834, %v3832
    %v4737 = vpack.c.b16 %v3835, %v3833
    %v4738 = vpack.c.b16 %v3838, %v3836
    %v4739 = vpack.c.b16 %v3839, %v3837
    %v4740 = vpack.c.b16 %v3842, %v3840
    %v4741 = vpack.c.b16 %v3843, %v3841
    %v4742 = vpack.c.b16 %v3846, %v3844
    %v4743 = vpack.c.b16 %v3847, %v3845
    %v4744 = vpack.c.b16 %v3850, %v3848
    %v4745 = vpack.c.b16 %v3851, %v3849
    %v4746 = vpack.c.b16 %v3854, %v3852
    %v4747 = vpack.c.b16 %v3855, %v3853
    %v4748 = vpack.c.b16 %v3858, %v3856
    %v4749 = vpack.c.b16 %v3859, %v3857
    %v4750 = vpack.c.b16 %v3862, %v3860
    %v4751 = vpack.c.b16 %v3863, %v3861
    %v4752 = vpack.c.b16 %v3866, %v3864
    %v4753 = vpack.c.b16 %v3867, %v3865
    %v4754 = vpack.c.b16 %v3870, %v3868
    %v4755 = vpack.c.b16 %v3871, %v3869
    %v4756 = vpack.c.b16 %v3874, %v3872
    %v4757 = vpack.c.b16 %v3875, %v3873
    %v4758 = vpack.c.b16 %v3878, %v3876
    %v4759 = vpack.c.b16 %v3879, %v3877
    %v4760 = vpack.c.b16 %v3882, %v3880
    %v4761 = vpack.c.b16 %v3883, %v3881
    %v4762 = vpack.c.b16 %v3886, %v3884
    %v4763 = vpack.c.b16 %v3887, %v3885
    %v4764 = vpack.c.b16 %v3890, %v3888
    %v4765 = vpack.c.b16 %v3891, %v3889
    %v4766 = vpack.c.b16 %v3894, %v3892
    %v4767 = vpack.c.b16 %v3895, %v3893
    %v4768 = vpack.c.b16 %v3898, %v3896
    %v4769 = vpack.c.b16 %v3899, %v3897
    %v4770 = vpack.c.b16 %v3902, %v3900
    %v4771 = vpack.c.b16 %v3903, %v3901
    %v4772 = vpack.c.b16 %v3906, %v3904
    %v4773 = vpack.c.b16 %v3907, %v3905
    %v4774 = vpack.c.b16 %v3910, %v3908
    %v4775 = vpack.c.b16 %v3911, %v3909
    %v4776 = vpack.c.b16 %v3914, %v3912
    %v4777 = vpack.c.b16 %v3915, %v3913
    %v4778 = vpack.c.b16 %v3918, %v3916
    %v4779 = vpack.c.b16 %v3919, %v3917
    %v4780 = vpack.c.b16 %v3922, %v3920
    %v4781 = vpack.c.b16 %v3923, %v3921
    %v4782 = vpack.c.b16 %v3926, %v3924
    %v4783 = vpack.c.b16 %v3927, %v3925
    %v4784 = vpack.c.b16 %v3930, %v3928
    %v4785 = vpack.c.b16 %v3931, %v3929
    %v4786 = vpack.c.b16 %v3934, %v3932
    %v4787 = vpack.c.b16 %v3935, %v3933
    %v4788 = vpack.c.b16 %v3938, %v3936
    %v4789 = vpack.c.b16 %v3939, %v3937
    %v4790 = vpack.c.b16 %v3942, %v3940
    %v4791 = vpack.c.b16 %v3943, %v3941
    %v4792 = vpack.c.b16 %v3946, %v3944
    %v4793 = vpack.c.b16 %v3947, %v3945
    %v4794 = vpack.c.b16 %v3950, %v3948
    %v4795 = vpack.c.b16 %v3951, %v3949
    %v4796 = vpack.c.b16 %v3954, %v3952
    %v4797 = vpack.c.b16 %v3955, %v3953
    %v4798 = vpack.c.b16 %v3958, %v3956
    %v4799 = vpack.c.b16 %v3959, %v3957
    %v4800 = vpack.c.b16 %v3962, %v3960
    %v4801 = vpack.c.b16 %v3963, %v3961
    %v4802 = vpack.c.b16 %v3966, %v3964
    %v4803 = vpack.c.b16 %v3967, %v3965
    %v4804 = vpack.c.b16 %v3970, %v3968
    %v4805 = vpack.c.b16 %v3971, %v3969
    %v4806 = vpack.c.b16 %v3974, %v3972
    %v4807 = vpack.c.b16 %v3975, %v3973
    %5640 = vmatpush.bf16.msra.mxu0 %v3990
    %5641 = vmatpush.bf16.msra.mxu0 %v3988
    %5642 = vmatpush.bf16.msra.mxu0 %v3986
    %5643 = vmatpush.bf16.msra.mxu0 %v3984
    %5644 = vmatpush.bf16.msra.mxu0 %v3982
    %5645 = vmatpush.bf16.msra.mxu0 %v3980
    %5646 = vmatpush.bf16.msra.mxu0 %v3978
    %5647 = vmatpush.bf16.msra.mxu0 %v3976
    %5648 = vmatmul.bf16.gmra.mxu0 %v596
    %v5649 = vpop.f32.mrf.mxu0
    %v5650 = vadd.f32 0.0, %v5649
    %v5651 = vpop.f32.mrf.mxu0
    %5652 = vdwg.mxu0
    %5653 = vmatpush.bf16.msra.mxu0 %v4006
    %5654 = vmatpush.bf16.msra.mxu0 %v4004
    %5655 = vmatpush.bf16.msra.mxu0 %v4002
    %5656 = vmatpush.bf16.msra.mxu0 %v4000
    %5657 = vmatpush.bf16.msra.mxu0 %v3998
    %5658 = vmatpush.bf16.msra.mxu0 %v3996
    %5659 = vmatpush.bf16.msra.mxu0 %v3994
    %5660 = vmatpush.bf16.msra.mxu0 %v3992
    %5661 = vmatmul.bf16.gmra.mxu0 %v597
    %v5662 = vpop.f32.mrf.mxu0
    %v5663 = vadd.f32 %v5650, %v5662
    %v5664 = vpop.f32.mrf.mxu0
    %5665 = vdwg.mxu0
    %5666 = vmatpush.bf16.msra.mxu0 %v4022
    %5667 = vmatpush.bf16.msra.mxu0 %v4020
    %5668 = vmatpush.bf16.msra.mxu0 %v4018
    %5669 = vmatpush.bf16.msra.mxu0 %v4016
    %5670 = vmatpush.bf16.msra.mxu0 %v4014
    %5671 = vmatpush.bf16.msra.mxu0 %v4012
    %5672 = vmatpush.bf16.msra.mxu0 %v4010
    %5673 = vmatpush.bf16.msra.mxu0 %v4008
    %5674 = vmatmul.bf16.gmra.mxu0 %v598
    %v5675 = vpop.f32.mrf.mxu0
    %v5676 = vadd.f32 %v5663, %v5675
    %v5677 = vpop.f32.mrf.mxu0
    %5678 = vdwg.mxu0
    %5679 = vmatpush.bf16.msra.mxu0 %v4038
    %5680 = vmatpush.bf16.msra.mxu0 %v4036
    %5681 = vmatpush.bf16.msra.mxu0 %v4034
    %5682 = vmatpush.bf16.msra.mxu0 %v4032
    %5683 = vmatpush.bf16.msra.mxu0 %v4030
    %5684 = vmatpush.bf16.msra.mxu0 %v4028
    %5685 = vmatpush.bf16.msra.mxu0 %v4026
    %5686 = vmatpush.bf16.msra.mxu0 %v4024
    %5687 = vmatmul.bf16.gmra.mxu0 %v599
    %v5688 = vpop.f32.mrf.mxu0
    %v5689 = vadd.f32 %v5676, %v5688
    %v5690 = vpop.f32.mrf.mxu0
    %5691 = vdwg.mxu0
    %5692 = vmatpush.bf16.msra.mxu0 %v4054
    %5693 = vmatpush.bf16.msra.mxu0 %v4052
    %5694 = vmatpush.bf16.msra.mxu0 %v4050
    %5695 = vmatpush.bf16.msra.mxu0 %v4048
    %5696 = vmatpush.bf16.msra.mxu0 %v4046
    %5697 = vmatpush.bf16.msra.mxu0 %v4044
    %5698 = vmatpush.bf16.msra.mxu0 %v4042
    %5699 = vmatpush.bf16.msra.mxu0 %v4040
    %5700 = vmatmul.bf16.gmra.mxu0 %v600
    %v5701 = vpop.f32.mrf.mxu0
    %v5702 = vadd.f32 %v5689, %v5701
    %v5703 = vpop.f32.mrf.mxu0
    %5704 = vdwg.mxu0
    %5705 = vmatpush.bf16.msra.mxu0 %v4070
    %5706 = vmatpush.bf16.msra.mxu0 %v4068
    %5707 = vmatpush.bf16.msra.mxu0 %v4066
    %5708 = vmatpush.bf16.msra.mxu0 %v4064
    %5709 = vmatpush.bf16.msra.mxu0 %v4062
    %5710 = vmatpush.bf16.msra.mxu0 %v4060
    %5711 = vmatpush.bf16.msra.mxu0 %v4058
    %5712 = vmatpush.bf16.msra.mxu0 %v4056
    %5713 = vmatmul.bf16.gmra.mxu0 %v601
    %v5714 = vpop.f32.mrf.mxu0
    %v5715 = vadd.f32 %v5702, %v5714
    %v5716 = vpop.f32.mrf.mxu0
    %5717 = vdwg.mxu0
    %5718 = vmatpush.bf16.msra.mxu0 %v4086
    %5719 = vmatpush.bf16.msra.mxu0 %v4084
    %5720 = vmatpush.bf16.msra.mxu0 %v4082
    %5721 = vmatpush.bf16.msra.mxu0 %v4080
    %5722 = vmatpush.bf16.msra.mxu0 %v4078
    %5723 = vmatpush.bf16.msra.mxu0 %v4076
    %5724 = vmatpush.bf16.msra.mxu0 %v4074
    %5725 = vmatpush.bf16.msra.mxu0 %v4072
    %5726 = vmatmul.bf16.gmra.mxu0 %v602
    %v5727 = vpop.f32.mrf.mxu0
    %v5728 = vadd.f32 %v5715, %v5727
    %v5729 = vpop.f32.mrf.mxu0
    %5730 = vdwg.mxu0
    %5731 = vmatpush.bf16.msra.mxu0 %v4102
    %5732 = vmatpush.bf16.msra.mxu0 %v4100
    %5733 = vmatpush.bf16.msra.mxu0 %v4098
    %5734 = vmatpush.bf16.msra.mxu0 %v4096
    %5735 = vmatpush.bf16.msra.mxu0 %v4094
    %5736 = vmatpush.bf16.msra.mxu0 %v4092
    %5737 = vmatpush.bf16.msra.mxu0 %v4090
    %5738 = vmatpush.bf16.msra.mxu0 %v4088
    %5739 = vmatmul.bf16.gmra.mxu0 %v603
    %v5740 = vpop.f32.mrf.mxu0
    %v5741 = vadd.f32 %v5728, %v5740
    %v5742 = vpop.f32.mrf.mxu0
    %5743 = vdwg.mxu0
    %5744 = vmatpush.bf16.msra.mxu0 %v4118
    %5745 = vmatpush.bf16.msra.mxu0 %v4116
    %5746 = vmatpush.bf16.msra.mxu0 %v4114
    %5747 = vmatpush.bf16.msra.mxu0 %v4112
    %5748 = vmatpush.bf16.msra.mxu0 %v4110
    %5749 = vmatpush.bf16.msra.mxu0 %v4108
    %5750 = vmatpush.bf16.msra.mxu0 %v4106
    %5751 = vmatpush.bf16.msra.mxu0 %v4104
    %5752 = vmatmul.bf16.gmra.mxu0 %v604
    %v5753 = vpop.f32.mrf.mxu0
    %v5754 = vadd.f32 %v5741, %v5753
    %v5755 = vpop.f32.mrf.mxu0
    %5756 = vdwg.mxu0
    %5757 = vmatpush.bf16.msra.mxu0 %v4134
    %5758 = vmatpush.bf16.msra.mxu0 %v4132
    %5759 = vmatpush.bf16.msra.mxu0 %v4130
    %5760 = vmatpush.bf16.msra.mxu0 %v4128
    %5761 = vmatpush.bf16.msra.mxu0 %v4126
    %5762 = vmatpush.bf16.msra.mxu0 %v4124
    %5763 = vmatpush.bf16.msra.mxu0 %v4122
    %5764 = vmatpush.bf16.msra.mxu0 %v4120
    %5765 = vmatmul.bf16.gmra.mxu0 %v605
    %v5766 = vpop.f32.mrf.mxu0
    %v5767 = vadd.f32 %v5754, %v5766
    %v5768 = vpop.f32.mrf.mxu0
    %5769 = vdwg.mxu0
    %5770 = vmatpush.bf16.msra.mxu0 %v4150
    %5771 = vmatpush.bf16.msra.mxu0 %v4148
    %5772 = vmatpush.bf16.msra.mxu0 %v4146
    %5773 = vmatpush.bf16.msra.mxu0 %v4144
    %5774 = vmatpush.bf16.msra.mxu0 %v4142
    %5775 = vmatpush.bf16.msra.mxu0 %v4140
    %5776 = vmatpush.bf16.msra.mxu0 %v4138
    %5777 = vmatpush.bf16.msra.mxu0 %v4136
    %5778 = vmatmul.bf16.gmra.mxu0 %v606
    %v5779 = vpop.f32.mrf.mxu0
    %v5780 = vadd.f32 %v5767, %v5779
    %v5781 = vpop.f32.mrf.mxu0
    %5782 = vdwg.mxu0
    %5783 = vmatpush.bf16.msra.mxu0 %v4166
    %5784 = vmatpush.bf16.msra.mxu0 %v4164
    %5785 = vmatpush.bf16.msra.mxu0 %v4162
    %5786 = vmatpush.bf16.msra.mxu0 %v4160
    %5787 = vmatpush.bf16.msra.mxu0 %v4158
    %5788 = vmatpush.bf16.msra.mxu0 %v4156
    %5789 = vmatpush.bf16.msra.mxu0 %v4154
    %5790 = vmatpush.bf16.msra.mxu0 %v4152
    %5791 = vmatmul.bf16.gmra.mxu0 %v607
    %v5792 = vpop.f32.mrf.mxu0
    %v5793 = vadd.f32 %v5780, %v5792
    %v5794 = vpop.f32.mrf.mxu0
    %5795 = vdwg.mxu0
    %5796 = vmatpush.bf16.msra.mxu0 %v4182
    %5797 = vmatpush.bf16.msra.mxu0 %v4180
    %5798 = vmatpush.bf16.msra.mxu0 %v4178
    %5799 = vmatpush.bf16.msra.mxu0 %v4176
    %5800 = vmatpush.bf16.msra.mxu0 %v4174
    %5801 = vmatpush.bf16.msra.mxu0 %v4172
    %5802 = vmatpush.bf16.msra.mxu0 %v4170
    %5803 = vmatpush.bf16.msra.mxu0 %v4168
    %5804 = vmatmul.bf16.gmra.mxu0 %v608
    %v5805 = vpop.f32.mrf.mxu0
    %v5806 = vadd.f32 %v5793, %v5805
    %v5807 = vpop.f32.mrf.mxu0
    %5808 = vdwg.mxu0
    %5809 = vmatpush.bf16.msra.mxu0 %v4198
    %5810 = vmatpush.bf16.msra.mxu0 %v4196
    %5811 = vmatpush.bf16.msra.mxu0 %v4194
    %5812 = vmatpush.bf16.msra.mxu0 %v4192
    %5813 = vmatpush.bf16.msra.mxu0 %v4190
    %5814 = vmatpush.bf16.msra.mxu0 %v4188
    %5815 = vmatpush.bf16.msra.mxu0 %v4186
    %5816 = vmatpush.bf16.msra.mxu0 %v4184
    %5817 = vmatmul.bf16.gmra.mxu0 %v609
    %v5818 = vpop.f32.mrf.mxu0
    %v5819 = vadd.f32 %v5806, %v5818
    %v5820 = vpop.f32.mrf.mxu0
    %5821 = vdwg.mxu0
    %5822 = vmatpush.bf16.msra.mxu0 %v4214
    %5823 = vmatpush.bf16.msra.mxu0 %v4212
    %5824 = vmatpush.bf16.msra.mxu0 %v4210
    %5825 = vmatpush.bf16.msra.mxu0 %v4208
    %5826 = vmatpush.bf16.msra.mxu0 %v4206
    %5827 = vmatpush.bf16.msra.mxu0 %v4204
    %5828 = vmatpush.bf16.msra.mxu0 %v4202
    %5829 = vmatpush.bf16.msra.mxu0 %v4200
    %5830 = vmatmul.bf16.gmra.mxu0 %v610
    %v5831 = vpop.f32.mrf.mxu0
    %v5832 = vadd.f32 %v5819, %v5831
    %v5833 = vpop.f32.mrf.mxu0
    %5834 = vdwg.mxu0
    %5835 = vmatpush.bf16.msra.mxu0 %v4230
    %5836 = vmatpush.bf16.msra.mxu0 %v4228
    %5837 = vmatpush.bf16.msra.mxu0 %v4226
    %5838 = vmatpush.bf16.msra.mxu0 %v4224
    %5839 = vmatpush.bf16.msra.mxu0 %v4222
    %5840 = vmatpush.bf16.msra.mxu0 %v4220
    %5841 = vmatpush.bf16.msra.mxu0 %v4218
    %5842 = vmatpush.bf16.msra.mxu0 %v4216
    %5843 = vmatmul.bf16.gmra.mxu0 %v611
    %v5844 = vpop.f32.mrf.mxu0
    %v5845 = vadd.f32 %v5832, %v5844
    %v5846 = vpop.f32.mrf.mxu0
    %5847 = vdwg.mxu0
    %5848 = vmatpush.bf16.msra.mxu0 %v4246
    %5849 = vmatpush.bf16.msra.mxu0 %v4244
    %5850 = vmatpush.bf16.msra.mxu0 %v4242
    %5851 = vmatpush.bf16.msra.mxu0 %v4240
    %5852 = vmatpush.bf16.msra.mxu0 %v4238
    %5853 = vmatpush.bf16.msra.mxu0 %v4236
    %5854 = vmatpush.bf16.msra.mxu0 %v4234
    %5855 = vmatpush.bf16.msra.mxu0 %v4232
    %5856 = vmatmul.bf16.gmra.mxu0 %v612
    %v5857 = vpop.f32.mrf.mxu0
    %v5858 = vadd.f32 %v5845, %v5857
    %v5859 = vpop.f32.mrf.mxu0
    %5860 = vdwg.mxu0
    %5861 = vmatpush.bf16.msra.mxu0 %v4262
    %5862 = vmatpush.bf16.msra.mxu0 %v4260
    %5863 = vmatpush.bf16.msra.mxu0 %v4258
    %5864 = vmatpush.bf16.msra.mxu0 %v4256
    %5865 = vmatpush.bf16.msra.mxu0 %v4254
    %5866 = vmatpush.bf16.msra.mxu0 %v4252
    %5867 = vmatpush.bf16.msra.mxu0 %v4250
    %5868 = vmatpush.bf16.msra.mxu0 %v4248
    %5869 = vmatmul.bf16.gmra.mxu0 %v613
    %v5870 = vpop.f32.mrf.mxu0
    %v5871 = vadd.f32 %v5858, %v5870
    %v5872 = vpop.f32.mrf.mxu0
    %5873 = vdwg.mxu0
    %5874 = vmatpush.bf16.msra.mxu0 %v4278
    %5875 = vmatpush.bf16.msra.mxu0 %v4276
    %5876 = vmatpush.bf16.msra.mxu0 %v4274
    %5877 = vmatpush.bf16.msra.mxu0 %v4272
    %5878 = vmatpush.bf16.msra.mxu0 %v4270
    %5879 = vmatpush.bf16.msra.mxu0 %v4268
    %5880 = vmatpush.bf16.msra.mxu0 %v4266
    %5881 = vmatpush.bf16.msra.mxu0 %v4264
    %5882 = vmatmul.bf16.gmra.mxu0 %v614
    %v5883 = vpop.f32.mrf.mxu0
    %v5884 = vadd.f32 %v5871, %v5883
    %v5885 = vpop.f32.mrf.mxu0
    %5886 = vdwg.mxu0
    %5887 = vmatpush.bf16.msra.mxu0 %v4294
    %5888 = vmatpush.bf16.msra.mxu0 %v4292
    %5889 = vmatpush.bf16.msra.mxu0 %v4290
    %5890 = vmatpush.bf16.msra.mxu0 %v4288
    %5891 = vmatpush.bf16.msra.mxu0 %v4286
    %5892 = vmatpush.bf16.msra.mxu0 %v4284
    %5893 = vmatpush.bf16.msra.mxu0 %v4282
    %5894 = vmatpush.bf16.msra.mxu0 %v4280
    %5895 = vmatmul.bf16.gmra.mxu0 %v615
    %v5896 = vpop.f32.mrf.mxu0
    %v5897 = vadd.f32 %v5884, %v5896
    %v5898 = vpop.f32.mrf.mxu0
    %5899 = vdwg.mxu0
    %5900 = vmatpush.bf16.msra.mxu0 %v4310
    %5901 = vmatpush.bf16.msra.mxu0 %v4308
    %5902 = vmatpush.bf16.msra.mxu0 %v4306
    %5903 = vmatpush.bf16.msra.mxu0 %v4304
    %5904 = vmatpush.bf16.msra.mxu0 %v4302
    %5905 = vmatpush.bf16.msra.mxu0 %v4300
    %5906 = vmatpush.bf16.msra.mxu0 %v4298
    %5907 = vmatpush.bf16.msra.mxu0 %v4296
    %5908 = vmatmul.bf16.gmra.mxu0 %v616
    %v5909 = vpop.f32.mrf.mxu0
    %v5910 = vadd.f32 %v5897, %v5909
    %v5911 = vpop.f32.mrf.mxu0
    %5912 = vdwg.mxu0
    %5913 = vmatpush.bf16.msra.mxu0 %v4326
    %5914 = vmatpush.bf16.msra.mxu0 %v4324
    %5915 = vmatpush.bf16.msra.mxu0 %v4322
    %5916 = vmatpush.bf16.msra.mxu0 %v4320
    %5917 = vmatpush.bf16.msra.mxu0 %v4318
    %5918 = vmatpush.bf16.msra.mxu0 %v4316
    %5919 = vmatpush.bf16.msra.mxu0 %v4314
    %5920 = vmatpush.bf16.msra.mxu0 %v4312
    %5921 = vmatmul.bf16.gmra.mxu0 %v617
    %v5922 = vpop.f32.mrf.mxu0
    %v5923 = vadd.f32 %v5910, %v5922
    %v5924 = vpop.f32.mrf.mxu0
    %5925 = vdwg.mxu0
    %5926 = vmatpush.bf16.msra.mxu0 %v4342
    %5927 = vmatpush.bf16.msra.mxu0 %v4340
    %5928 = vmatpush.bf16.msra.mxu0 %v4338
    %5929 = vmatpush.bf16.msra.mxu0 %v4336
    %5930 = vmatpush.bf16.msra.mxu0 %v4334
    %5931 = vmatpush.bf16.msra.mxu0 %v4332
    %5932 = vmatpush.bf16.msra.mxu0 %v4330
    %5933 = vmatpush.bf16.msra.mxu0 %v4328
    %5934 = vmatmul.bf16.gmra.mxu0 %v618
    %v5935 = vpop.f32.mrf.mxu0
    %v5936 = vadd.f32 %v5923, %v5935
    %v5937 = vpop.f32.mrf.mxu0
    %5938 = vdwg.mxu0
    %5939 = vmatpush.bf16.msra.mxu0 %v4358
    %5940 = vmatpush.bf16.msra.mxu0 %v4356
    %5941 = vmatpush.bf16.msra.mxu0 %v4354
    %5942 = vmatpush.bf16.msra.mxu0 %v4352
    %5943 = vmatpush.bf16.msra.mxu0 %v4350
    %5944 = vmatpush.bf16.msra.mxu0 %v4348
    %5945 = vmatpush.bf16.msra.mxu0 %v4346
    %5946 = vmatpush.bf16.msra.mxu0 %v4344
    %5947 = vmatmul.bf16.gmra.mxu0 %v619
    %v5948 = vpop.f32.mrf.mxu0
    %v5949 = vadd.f32 %v5936, %v5948
    %v5950 = vpop.f32.mrf.mxu0
    %5951 = vdwg.mxu0
    %5952 = vmatpush.bf16.msra.mxu0 %v4374
    %5953 = vmatpush.bf16.msra.mxu0 %v4372
    %5954 = vmatpush.bf16.msra.mxu0 %v4370
    %5955 = vmatpush.bf16.msra.mxu0 %v4368
    %5956 = vmatpush.bf16.msra.mxu0 %v4366
    %5957 = vmatpush.bf16.msra.mxu0 %v4364
    %5958 = vmatpush.bf16.msra.mxu0 %v4362
    %5959 = vmatpush.bf16.msra.mxu0 %v4360
    %5960 = vmatmul.bf16.gmra.mxu0 %v620
    %v5961 = vpop.f32.mrf.mxu0
    %v5962 = vadd.f32 %v5949, %v5961
    %v5963 = vpop.f32.mrf.mxu0
    %5964 = vdwg.mxu0
    %5965 = vmatpush.bf16.msra.mxu0 %v4390
    %5966 = vmatpush.bf16.msra.mxu0 %v4388
    %5967 = vmatpush.bf16.msra.mxu0 %v4386
    %5968 = vmatpush.bf16.msra.mxu0 %v4384
    %5969 = vmatpush.bf16.msra.mxu0 %v4382
    %5970 = vmatpush.bf16.msra.mxu0 %v4380
    %5971 = vmatpush.bf16.msra.mxu0 %v4378
    %5972 = vmatpush.bf16.msra.mxu0 %v4376
    %5973 = vmatmul.bf16.gmra.mxu0 %v621
    %v5974 = vpop.f32.mrf.mxu0
    %v5975 = vadd.f32 %v5962, %v5974
    %v5976 = vpop.f32.mrf.mxu0
    %5977 = vdwg.mxu0
    %5978 = vmatpush.bf16.msra.mxu0 %v4406
    %5979 = vmatpush.bf16.msra.mxu0 %v4404
    %5980 = vmatpush.bf16.msra.mxu0 %v4402
    %5981 = vmatpush.bf16.msra.mxu0 %v4400
    %5982 = vmatpush.bf16.msra.mxu0 %v4398
    %5983 = vmatpush.bf16.msra.mxu0 %v4396
    %5984 = vmatpush.bf16.msra.mxu0 %v4394
    %5985 = vmatpush.bf16.msra.mxu0 %v4392
    %5986 = vmatmul.bf16.gmra.mxu0 %v622
    %v5987 = vpop.f32.mrf.mxu0
    %v5988 = vadd.f32 %v5975, %v5987
    %v5989 = vpop.f32.mrf.mxu0
    %5990 = vdwg.mxu0
    %5991 = vmatpush.bf16.msra.mxu0 %v4422
    %5992 = vmatpush.bf16.msra.mxu0 %v4420
    %5993 = vmatpush.bf16.msra.mxu0 %v4418
    %5994 = vmatpush.bf16.msra.mxu0 %v4416
    %5995 = vmatpush.bf16.msra.mxu0 %v4414
    %5996 = vmatpush.bf16.msra.mxu0 %v4412
    %5997 = vmatpush.bf16.msra.mxu0 %v4410
    %5998 = vmatpush.bf16.msra.mxu0 %v4408
    %5999 = vmatmul.bf16.gmra.mxu0 %v623
    %v6000 = vpop.f32.mrf.mxu0
    %v6001 = vadd.f32 %v5988, %v6000
    %v6002 = vpop.f32.mrf.mxu0
    %6003 = vdwg.mxu0
    %6004 = vmatpush.bf16.msra.mxu0 %v4438
    %6005 = vmatpush.bf16.msra.mxu0 %v4436
    %6006 = vmatpush.bf16.msra.mxu0 %v4434
    %6007 = vmatpush.bf16.msra.mxu0 %v4432
    %6008 = vmatpush.bf16.msra.mxu0 %v4430
    %6009 = vmatpush.bf16.msra.mxu0 %v4428
    %6010 = vmatpush.bf16.msra.mxu0 %v4426
    %6011 = vmatpush.bf16.msra.mxu0 %v4424
    %6012 = vmatmul.bf16.gmra.mxu0 %v624
    %v6013 = vpop.f32.mrf.mxu0
    %v6014 = vadd.f32 %v6001, %v6013
    %v6015 = vpop.f32.mrf.mxu0
    %6016 = vdwg.mxu0
    %6017 = vmatpush.bf16.msra.mxu0 %v4454
    %6018 = vmatpush.bf16.msra.mxu0 %v4452
    %6019 = vmatpush.bf16.msra.mxu0 %v4450
    %6020 = vmatpush.bf16.msra.mxu0 %v4448
    %6021 = vmatpush.bf16.msra.mxu0 %v4446
    %6022 = vmatpush.bf16.msra.mxu0 %v4444
    %6023 = vmatpush.bf16.msra.mxu0 %v4442
    %6024 = vmatpush.bf16.msra.mxu0 %v4440
    %6025 = vmatmul.bf16.gmra.mxu0 %v625
    %v6026 = vpop.f32.mrf.mxu0
    %v6027 = vadd.f32 %v6014, %v6026
    %v6028 = vpop.f32.mrf.mxu0
    %6029 = vdwg.mxu0
    %6030 = vmatpush.bf16.msra.mxu0 %v4470
    %6031 = vmatpush.bf16.msra.mxu0 %v4468
    %6032 = vmatpush.bf16.msra.mxu0 %v4466
    %6033 = vmatpush.bf16.msra.mxu0 %v4464
    %6034 = vmatpush.bf16.msra.mxu0 %v4462
    %6035 = vmatpush.bf16.msra.mxu0 %v4460
    %6036 = vmatpush.bf16.msra.mxu0 %v4458
    %6037 = vmatpush.bf16.msra.mxu0 %v4456
    %6038 = vmatmul.bf16.gmra.mxu0 %v626
    %v6039 = vpop.f32.mrf.mxu0
    %v6040 = vadd.f32 %v6027, %v6039
    %v6041 = vpop.f32.mrf.mxu0
    %6042 = vdwg.mxu0
    %6043 = vmatpush.bf16.msra.mxu0 %v4486
    %6044 = vmatpush.bf16.msra.mxu0 %v4484
    %6045 = vmatpush.bf16.msra.mxu0 %v4482
    %6046 = vmatpush.bf16.msra.mxu0 %v4480
    %6047 = vmatpush.bf16.msra.mxu0 %v4478
    %6048 = vmatpush.bf16.msra.mxu0 %v4476
    %6049 = vmatpush.bf16.msra.mxu0 %v4474
    %6050 = vmatpush.bf16.msra.mxu0 %v4472
    %6051 = vmatmul.bf16.gmra.mxu0 %v627
    %v6052 = vpop.f32.mrf.mxu0
    %v6053 = vadd.f32 %v6040, %v6052
    %v6054 = vpop.f32.mrf.mxu0
    %6055 = vdwg.mxu0
    %6056 = vmatpush.bf16.msra.mxu0 %v4502
    %6057 = vmatpush.bf16.msra.mxu0 %v4500
    %6058 = vmatpush.bf16.msra.mxu0 %v4498
    %6059 = vmatpush.bf16.msra.mxu0 %v4496
    %6060 = vmatpush.bf16.msra.mxu0 %v4494
    %6061 = vmatpush.bf16.msra.mxu0 %v4492
    %6062 = vmatpush.bf16.msra.mxu0 %v4490
    %6063 = vmatpush.bf16.msra.mxu0 %v4488
    %6064 = vmatmul.bf16.gmra.mxu0 %v628
    %v6065 = vpop.f32.mrf.mxu0
    %v6066 = vadd.f32 %v6053, %v6065
    %v6067 = vpop.f32.mrf.mxu0
    %6068 = vdwg.mxu0
    %6069 = vmatpush.bf16.msra.mxu0 %v4518
    %6070 = vmatpush.bf16.msra.mxu0 %v4516
    %6071 = vmatpush.bf16.msra.mxu0 %v4514
    %6072 = vmatpush.bf16.msra.mxu0 %v4512
    %6073 = vmatpush.bf16.msra.mxu0 %v4510
    %6074 = vmatpush.bf16.msra.mxu0 %v4508
    %6075 = vmatpush.bf16.msra.mxu0 %v4506
    %6076 = vmatpush.bf16.msra.mxu0 %v4504
    %6077 = vmatmul.bf16.gmra.mxu0 %v629
    %v6078 = vpop.f32.mrf.mxu0
    %v6079 = vadd.f32 %v6066, %v6078
    %v6080 = vpop.f32.mrf.mxu0
    %6081 = vdwg.mxu0
    %6082 = vmatpush.bf16.msra.mxu0 %v4534
    %6083 = vmatpush.bf16.msra.mxu0 %v4532
    %6084 = vmatpush.bf16.msra.mxu0 %v4530
    %6085 = vmatpush.bf16.msra.mxu0 %v4528
    %6086 = vmatpush.bf16.msra.mxu0 %v4526
    %6087 = vmatpush.bf16.msra.mxu0 %v4524
    %6088 = vmatpush.bf16.msra.mxu0 %v4522
    %6089 = vmatpush.bf16.msra.mxu0 %v4520
    %6090 = vmatmul.bf16.gmra.mxu0 %v630
    %v6091 = vpop.f32.mrf.mxu0
    %v6092 = vadd.f32 %v6079, %v6091
    %v6093 = vpop.f32.mrf.mxu0
    %6094 = vdwg.mxu0
    %6095 = vmatpush.bf16.msra.mxu0 %v4550
    %6096 = vmatpush.bf16.msra.mxu0 %v4548
    %6097 = vmatpush.bf16.msra.mxu0 %v4546
    %6098 = vmatpush.bf16.msra.mxu0 %v4544
    %6099 = vmatpush.bf16.msra.mxu0 %v4542
    %6100 = vmatpush.bf16.msra.mxu0 %v4540
    %6101 = vmatpush.bf16.msra.mxu0 %v4538
    %6102 = vmatpush.bf16.msra.mxu0 %v4536
    %6103 = vmatmul.bf16.gmra.mxu0 %v631
    %v6104 = vpop.f32.mrf.mxu0
    %v6105 = vadd.f32 %v6092, %v6104
    %v6106 = vpop.f32.mrf.mxu0
    %6107 = vdwg.mxu0
    %6108 = vmatpush.bf16.msra.mxu0 %v4566
    %6109 = vmatpush.bf16.msra.mxu0 %v4564
    %6110 = vmatpush.bf16.msra.mxu0 %v4562
    %6111 = vmatpush.bf16.msra.mxu0 %v4560
    %6112 = vmatpush.bf16.msra.mxu0 %v4558
    %6113 = vmatpush.bf16.msra.mxu0 %v4556
    %6114 = vmatpush.bf16.msra.mxu0 %v4554
    %6115 = vmatpush.bf16.msra.mxu0 %v4552
    %6116 = vmatmul.bf16.gmra.mxu0 %v632
    %v6117 = vpop.f32.mrf.mxu0
    %v6118 = vadd.f32 %v6105, %v6117
    %v6119 = vpop.f32.mrf.mxu0
    %6120 = vdwg.mxu0
    %6121 = vmatpush.bf16.msra.mxu0 %v4582
    %6122 = vmatpush.bf16.msra.mxu0 %v4580
    %6123 = vmatpush.bf16.msra.mxu0 %v4578
    %6124 = vmatpush.bf16.msra.mxu0 %v4576
    %6125 = vmatpush.bf16.msra.mxu0 %v4574
    %6126 = vmatpush.bf16.msra.mxu0 %v4572
    %6127 = vmatpush.bf16.msra.mxu0 %v4570
    %6128 = vmatpush.bf16.msra.mxu0 %v4568
    %6129 = vmatmul.bf16.gmra.mxu0 %v633
    %v6130 = vpop.f32.mrf.mxu0
    %v6131 = vadd.f32 %v6118, %v6130
    %v6132 = vpop.f32.mrf.mxu0
    %6133 = vdwg.mxu0
    %6134 = vmatpush.bf16.msra.mxu0 %v4598
    %6135 = vmatpush.bf16.msra.mxu0 %v4596
    %6136 = vmatpush.bf16.msra.mxu0 %v4594
    %6137 = vmatpush.bf16.msra.mxu0 %v4592
    %6138 = vmatpush.bf16.msra.mxu0 %v4590
    %6139 = vmatpush.bf16.msra.mxu0 %v4588
    %6140 = vmatpush.bf16.msra.mxu0 %v4586
    %6141 = vmatpush.bf16.msra.mxu0 %v4584
    %6142 = vmatmul.bf16.gmra.mxu0 %v634
    %v6143 = vpop.f32.mrf.mxu0
    %v6144 = vadd.f32 %v6131, %v6143
    %v6145 = vpop.f32.mrf.mxu0
    %6146 = vdwg.mxu0
    %6147 = vmatpush.bf16.msra.mxu0 %v4614
    %6148 = vmatpush.bf16.msra.mxu0 %v4612
    %6149 = vmatpush.bf16.msra.mxu0 %v4610
    %6150 = vmatpush.bf16.msra.mxu0 %v4608
    %6151 = vmatpush.bf16.msra.mxu0 %v4606
    %6152 = vmatpush.bf16.msra.mxu0 %v4604
    %6153 = vmatpush.bf16.msra.mxu0 %v4602
    %6154 = vmatpush.bf16.msra.mxu0 %v4600
    %6155 = vmatmul.bf16.gmra.mxu0 %v635
    %v6156 = vpop.f32.mrf.mxu0
    %v6157 = vadd.f32 %v6144, %v6156
    %v6158 = vpop.f32.mrf.mxu0
    %6159 = vdwg.mxu0
    %6160 = vmatpush.bf16.msra.mxu0 %v4630
    %6161 = vmatpush.bf16.msra.mxu0 %v4628
    %6162 = vmatpush.bf16.msra.mxu0 %v4626
    %6163 = vmatpush.bf16.msra.mxu0 %v4624
    %6164 = vmatpush.bf16.msra.mxu0 %v4622
    %6165 = vmatpush.bf16.msra.mxu0 %v4620
    %6166 = vmatpush.bf16.msra.mxu0 %v4618
    %6167 = vmatpush.bf16.msra.mxu0 %v4616
    %6168 = vmatmul.bf16.gmra.mxu0 %v636
    %v6169 = vpop.f32.mrf.mxu0
    %v6170 = vadd.f32 %v6157, %v6169
    %v6171 = vpop.f32.mrf.mxu0
    %6172 = vdwg.mxu0
    %6173 = vmatpush.bf16.msra.mxu0 %v4646
    %6174 = vmatpush.bf16.msra.mxu0 %v4644
    %6175 = vmatpush.bf16.msra.mxu0 %v4642
    %6176 = vmatpush.bf16.msra.mxu0 %v4640
    %6177 = vmatpush.bf16.msra.mxu0 %v4638
    %6178 = vmatpush.bf16.msra.mxu0 %v4636
    %6179 = vmatpush.bf16.msra.mxu0 %v4634
    %6180 = vmatpush.bf16.msra.mxu0 %v4632
    %6181 = vmatmul.bf16.gmra.mxu0 %v637
    %v6182 = vpop.f32.mrf.mxu0
    %v6183 = vadd.f32 %v6170, %v6182
    %v6184 = vpop.f32.mrf.mxu0
    %6185 = vdwg.mxu0
    %6186 = vmatpush.bf16.msra.mxu0 %v4662
    %6187 = vmatpush.bf16.msra.mxu0 %v4660
    %6188 = vmatpush.bf16.msra.mxu0 %v4658
    %6189 = vmatpush.bf16.msra.mxu0 %v4656
    %6190 = vmatpush.bf16.msra.mxu0 %v4654
    %6191 = vmatpush.bf16.msra.mxu0 %v4652
    %6192 = vmatpush.bf16.msra.mxu0 %v4650
    %6193 = vmatpush.bf16.msra.mxu0 %v4648
    %6194 = vmatmul.bf16.gmra.mxu0 %v638
    %v6195 = vpop.f32.mrf.mxu0
    %v6196 = vadd.f32 %v6183, %v6195
    %v6197 = vpop.f32.mrf.mxu0
    %6198 = vdwg.mxu0
    %6199 = vmatpush.bf16.msra.mxu0 %v4678
    %6200 = vmatpush.bf16.msra.mxu0 %v4676
    %6201 = vmatpush.bf16.msra.mxu0 %v4674
    %6202 = vmatpush.bf16.msra.mxu0 %v4672
    %6203 = vmatpush.bf16.msra.mxu0 %v4670
    %6204 = vmatpush.bf16.msra.mxu0 %v4668
    %6205 = vmatpush.bf16.msra.mxu0 %v4666
    %6206 = vmatpush.bf16.msra.mxu0 %v4664
    %6207 = vmatmul.bf16.gmra.mxu0 %v639
    %v6208 = vpop.f32.mrf.mxu0
    %v6209 = vadd.f32 %v6196, %v6208
    %v6210 = vpop.f32.mrf.mxu0
    %6211 = vdwg.mxu0
    %6212 = vmatpush.bf16.msra.mxu0 %v4694
    %6213 = vmatpush.bf16.msra.mxu0 %v4692
    %6214 = vmatpush.bf16.msra.mxu0 %v4690
    %6215 = vmatpush.bf16.msra.mxu0 %v4688
    %6216 = vmatpush.bf16.msra.mxu0 %v4686
    %6217 = vmatpush.bf16.msra.mxu0 %v4684
    %6218 = vmatpush.bf16.msra.mxu0 %v4682
    %6219 = vmatpush.bf16.msra.mxu0 %v4680
    %6220 = vmatmul.bf16.gmra.mxu0 %v640
    %v6221 = vpop.f32.mrf.mxu0
    %v6222 = vadd.f32 %v6209, %v6221
    %v6223 = vpop.f32.mrf.mxu0
    %6224 = vdwg.mxu0
    %6225 = vmatpush.bf16.msra.mxu0 %v4710
    %6226 = vmatpush.bf16.msra.mxu0 %v4708
    %6227 = vmatpush.bf16.msra.mxu0 %v4706
    %6228 = vmatpush.bf16.msra.mxu0 %v4704
    %6229 = vmatpush.bf16.msra.mxu0 %v4702
    %6230 = vmatpush.bf16.msra.mxu0 %v4700
    %6231 = vmatpush.bf16.msra.mxu0 %v4698
    %6232 = vmatpush.bf16.msra.mxu0 %v4696
    %6233 = vmatmul.bf16.gmra.mxu0 %v641
    %v6234 = vpop.f32.mrf.mxu0
    %v6235 = vadd.f32 %v6222, %v6234
    %v6236 = vpop.f32.mrf.mxu0
    %6237 = vdwg.mxu0
    %6238 = vmatpush.bf16.msra.mxu0 %v4726
    %6239 = vmatpush.bf16.msra.mxu0 %v4724
    %6240 = vmatpush.bf16.msra.mxu0 %v4722
    %6241 = vmatpush.bf16.msra.mxu0 %v4720
    %6242 = vmatpush.bf16.msra.mxu0 %v4718
    %6243 = vmatpush.bf16.msra.mxu0 %v4716
    %6244 = vmatpush.bf16.msra.mxu0 %v4714
    %6245 = vmatpush.bf16.msra.mxu0 %v4712
    %6246 = vmatmul.bf16.gmra.mxu0 %v642
    %v6247 = vpop.f32.mrf.mxu0
    %v6248 = vadd.f32 %v6235, %v6247
    %v6249 = vpop.f32.mrf.mxu0
    %6250 = vdwg.mxu0
    %6251 = vmatpush.bf16.msra.mxu0 %v4742
    %6252 = vmatpush.bf16.msra.mxu0 %v4740
    %6253 = vmatpush.bf16.msra.mxu0 %v4738
    %6254 = vmatpush.bf16.msra.mxu0 %v4736
    %6255 = vmatpush.bf16.msra.mxu0 %v4734
    %6256 = vmatpush.bf16.msra.mxu0 %v4732
    %6257 = vmatpush.bf16.msra.mxu0 %v4730
    %6258 = vmatpush.bf16.msra.mxu0 %v4728
    %6259 = vmatmul.bf16.gmra.mxu0 %v643
    %v6260 = vpop.f32.mrf.mxu0
    %v6261 = vadd.f32 %v6248, %v6260
    %v6262 = vpop.f32.mrf.mxu0
    %6263 = vdwg.mxu0
    %6264 = vmatpush.bf16.msra.mxu0 %v4758
    %6265 = vmatpush.bf16.msra.mxu0 %v4756
    %6266 = vmatpush.bf16.msra.mxu0 %v4754
    %6267 = vmatpush.bf16.msra.mxu0 %v4752
    %6268 = vmatpush.bf16.msra.mxu0 %v4750
    %6269 = vmatpush.bf16.msra.mxu0 %v4748
    %6270 = vmatpush.bf16.msra.mxu0 %v4746
    %6271 = vmatpush.bf16.msra.mxu0 %v4744
    %6272 = vmatmul.bf16.gmra.mxu0 %v644
    %v6273 = vpop.f32.mrf.mxu0
    %v6274 = vadd.f32 %v6261, %v6273
    %v6275 = vpop.f32.mrf.mxu0
    %6276 = vdwg.mxu0
    %6277 = vmatpush.bf16.msra.mxu0 %v4774
    %6278 = vmatpush.bf16.msra.mxu0 %v4772
    %6279 = vmatpush.bf16.msra.mxu0 %v4770
    %6280 = vmatpush.bf16.msra.mxu0 %v4768
    %6281 = vmatpush.bf16.msra.mxu0 %v4766
    %6282 = vmatpush.bf16.msra.mxu0 %v4764
    %6283 = vmatpush.bf16.msra.mxu0 %v4762
    %6284 = vmatpush.bf16.msra.mxu0 %v4760
    %6285 = vmatmul.bf16.gmra.mxu0 %v645
    %v6286 = vpop.f32.mrf.mxu0
    %v6287 = vadd.f32 %v6274, %v6286
    %v6288 = vpop.f32.mrf.mxu0
    %6289 = vdwg.mxu0
    %6290 = vmatpush.bf16.msra.mxu0 %v4790
    %6291 = vmatpush.bf16.msra.mxu0 %v4788
    %6292 = vmatpush.bf16.msra.mxu0 %v4786
    %6293 = vmatpush.bf16.msra.mxu0 %v4784
    %6294 = vmatpush.bf16.msra.mxu0 %v4782
    %6295 = vmatpush.bf16.msra.mxu0 %v4780
    %6296 = vmatpush.bf16.msra.mxu0 %v4778
    %6297 = vmatpush.bf16.msra.mxu0 %v4776
    %6298 = vmatmul.bf16.gmra.mxu0 %v646
    %v6299 = vpop.f32.mrf.mxu0
    %v6300 = vadd.f32 %v6287, %v6299
    %v6301 = vpop.f32.mrf.mxu0
    %6302 = vdwg.mxu0
    %6303 = vmatpush.bf16.msra.mxu0 %v4806
    %6304 = vmatpush.bf16.msra.mxu0 %v4804
    %6305 = vmatpush.bf16.msra.mxu0 %v4802
    %6306 = vmatpush.bf16.msra.mxu0 %v4800
    %6307 = vmatpush.bf16.msra.mxu0 %v4798
    %6308 = vmatpush.bf16.msra.mxu0 %v4796
    %6309 = vmatpush.bf16.msra.mxu0 %v4794
    %6310 = vmatpush.bf16.msra.mxu0 %v4792
    %6311 = vmatmul.bf16.gmra.mxu0 %v647
    %v6312 = vpop.f32.mrf.mxu0
    %v6313 = vadd.f32 %v6300, %v6312
    %v6314 = vpop.f32.mrf.mxu0
    %6315 = vdwg.mxu0
    %6316 = vmatpush.bf16.msra.mxu0 %v3991
    %6317 = vmatpush.bf16.msra.mxu0 %v3989
    %6318 = vmatpush.bf16.msra.mxu0 %v3987
    %6319 = vmatpush.bf16.msra.mxu0 %v3985
    %6320 = vmatpush.bf16.msra.mxu0 %v3983
    %6321 = vmatpush.bf16.msra.mxu0 %v3981
    %6322 = vmatpush.bf16.msra.mxu0 %v3979
    %6323 = vmatpush.bf16.msra.mxu0 %v3977
    %6324 = vmatmul.bf16.gmra.mxu0 %v596
    %v6325 = vpop.f32.mrf.mxu0
    %v6326 = vadd.f32 0.0, %v6325
    %v6327 = vpop.f32.mrf.mxu0
    %6328 = vdwg.mxu0
    %6329 = vmatpush.bf16.msra.mxu0 %v4007
    %6330 = vmatpush.bf16.msra.mxu0 %v4005
    %6331 = vmatpush.bf16.msra.mxu0 %v4003
    %6332 = vmatpush.bf16.msra.mxu0 %v4001
    %6333 = vmatpush.bf16.msra.mxu0 %v3999
    %6334 = vmatpush.bf16.msra.mxu0 %v3997
    %6335 = vmatpush.bf16.msra.mxu0 %v3995
    %6336 = vmatpush.bf16.msra.mxu0 %v3993
    %6337 = vmatmul.bf16.gmra.mxu0 %v597
    %v6338 = vpop.f32.mrf.mxu0
    %v6339 = vadd.f32 %v6326, %v6338
    %v6340 = vpop.f32.mrf.mxu0
    %6341 = vdwg.mxu0
    %6342 = vmatpush.bf16.msra.mxu0 %v4023
    %6343 = vmatpush.bf16.msra.mxu0 %v4021
    %6344 = vmatpush.bf16.msra.mxu0 %v4019
    %6345 = vmatpush.bf16.msra.mxu0 %v4017
    %6346 = vmatpush.bf16.msra.mxu0 %v4015
    %6347 = vmatpush.bf16.msra.mxu0 %v4013
    %6348 = vmatpush.bf16.msra.mxu0 %v4011
    %6349 = vmatpush.bf16.msra.mxu0 %v4009
    %6350 = vmatmul.bf16.gmra.mxu0 %v598
    %v6351 = vpop.f32.mrf.mxu0
    %v6352 = vadd.f32 %v6339, %v6351
    %v6353 = vpop.f32.mrf.mxu0
    %6354 = vdwg.mxu0
    %6355 = vmatpush.bf16.msra.mxu0 %v4039
    %6356 = vmatpush.bf16.msra.mxu0 %v4037
    %6357 = vmatpush.bf16.msra.mxu0 %v4035
    %6358 = vmatpush.bf16.msra.mxu0 %v4033
    %6359 = vmatpush.bf16.msra.mxu0 %v4031
    %6360 = vmatpush.bf16.msra.mxu0 %v4029
    %6361 = vmatpush.bf16.msra.mxu0 %v4027
    %6362 = vmatpush.bf16.msra.mxu0 %v4025
    %6363 = vmatmul.bf16.gmra.mxu0 %v599
    %v6364 = vpop.f32.mrf.mxu0
    %v6365 = vadd.f32 %v6352, %v6364
    %v6366 = vpop.f32.mrf.mxu0
    %6367 = vdwg.mxu0
    %6368 = vmatpush.bf16.msra.mxu0 %v4055
    %6369 = vmatpush.bf16.msra.mxu0 %v4053
    %6370 = vmatpush.bf16.msra.mxu0 %v4051
    %6371 = vmatpush.bf16.msra.mxu0 %v4049
    %6372 = vmatpush.bf16.msra.mxu0 %v4047
    %6373 = vmatpush.bf16.msra.mxu0 %v4045
    %6374 = vmatpush.bf16.msra.mxu0 %v4043
    %6375 = vmatpush.bf16.msra.mxu0 %v4041
    %6376 = vmatmul.bf16.gmra.mxu0 %v600
    %v6377 = vpop.f32.mrf.mxu0
    %v6378 = vadd.f32 %v6365, %v6377
    %v6379 = vpop.f32.mrf.mxu0
    %6380 = vdwg.mxu0
    %6381 = vmatpush.bf16.msra.mxu0 %v4071
    %6382 = vmatpush.bf16.msra.mxu0 %v4069
    %6383 = vmatpush.bf16.msra.mxu0 %v4067
    %6384 = vmatpush.bf16.msra.mxu0 %v4065
    %6385 = vmatpush.bf16.msra.mxu0 %v4063
    %6386 = vmatpush.bf16.msra.mxu0 %v4061
    %6387 = vmatpush.bf16.msra.mxu0 %v4059
    %6388 = vmatpush.bf16.msra.mxu0 %v4057
    %6389 = vmatmul.bf16.gmra.mxu0 %v601
    %v6390 = vpop.f32.mrf.mxu0
    %v6391 = vadd.f32 %v6378, %v6390
    %v6392 = vpop.f32.mrf.mxu0
    %6393 = vdwg.mxu0
    %6394 = vmatpush.bf16.msra.mxu0 %v4087
    %6395 = vmatpush.bf16.msra.mxu0 %v4085
    %6396 = vmatpush.bf16.msra.mxu0 %v4083
    %6397 = vmatpush.bf16.msra.mxu0 %v4081
    %6398 = vmatpush.bf16.msra.mxu0 %v4079
    %6399 = vmatpush.bf16.msra.mxu0 %v4077
    %6400 = vmatpush.bf16.msra.mxu0 %v4075
    %6401 = vmatpush.bf16.msra.mxu0 %v4073
    %6402 = vmatmul.bf16.gmra.mxu0 %v602
    %v6403 = vpop.f32.mrf.mxu0
    %v6404 = vadd.f32 %v6391, %v6403
    %v6405 = vpop.f32.mrf.mxu0
    %6406 = vdwg.mxu0
    %6407 = vmatpush.bf16.msra.mxu0 %v4103
    %6408 = vmatpush.bf16.msra.mxu0 %v4101
    %6409 = vmatpush.bf16.msra.mxu0 %v4099
    %6410 = vmatpush.bf16.msra.mxu0 %v4097
    %6411 = vmatpush.bf16.msra.mxu0 %v4095
    %6412 = vmatpush.bf16.msra.mxu0 %v4093
    %6413 = vmatpush.bf16.msra.mxu0 %v4091
    %6414 = vmatpush.bf16.msra.mxu0 %v4089
    %6415 = vmatmul.bf16.gmra.mxu0 %v603
    %v6416 = vpop.f32.mrf.mxu0
    %v6417 = vadd.f32 %v6404, %v6416
    %v6418 = vpop.f32.mrf.mxu0
    %6419 = vdwg.mxu0
    %6420 = vmatpush.bf16.msra.mxu0 %v4119
    %6421 = vmatpush.bf16.msra.mxu0 %v4117
    %6422 = vmatpush.bf16.msra.mxu0 %v4115
    %6423 = vmatpush.bf16.msra.mxu0 %v4113
    %6424 = vmatpush.bf16.msra.mxu0 %v4111
    %6425 = vmatpush.bf16.msra.mxu0 %v4109
    %6426 = vmatpush.bf16.msra.mxu0 %v4107
    %6427 = vmatpush.bf16.msra.mxu0 %v4105
    %6428 = vmatmul.bf16.gmra.mxu0 %v604
    %v6429 = vpop.f32.mrf.mxu0
    %v6430 = vadd.f32 %v6417, %v6429
    %v6431 = vpop.f32.mrf.mxu0
    %6432 = vdwg.mxu0
    %6433 = vmatpush.bf16.msra.mxu0 %v4135
    %6434 = vmatpush.bf16.msra.mxu0 %v4133
    %6435 = vmatpush.bf16.msra.mxu0 %v4131
    %6436 = vmatpush.bf16.msra.mxu0 %v4129
    %6437 = vmatpush.bf16.msra.mxu0 %v4127
    %6438 = vmatpush.bf16.msra.mxu0 %v4125
    %6439 = vmatpush.bf16.msra.mxu0 %v4123
    %6440 = vmatpush.bf16.msra.mxu0 %v4121
    %6441 = vmatmul.bf16.gmra.mxu0 %v605
    %v6442 = vpop.f32.mrf.mxu0
    %v6443 = vadd.f32 %v6430, %v6442
    %v6444 = vpop.f32.mrf.mxu0
    %6445 = vdwg.mxu0
    %6446 = vmatpush.bf16.msra.mxu0 %v4151
    %6447 = vmatpush.bf16.msra.mxu0 %v4149
    %6448 = vmatpush.bf16.msra.mxu0 %v4147
    %6449 = vmatpush.bf16.msra.mxu0 %v4145
    %6450 = vmatpush.bf16.msra.mxu0 %v4143
    %6451 = vmatpush.bf16.msra.mxu0 %v4141
    %6452 = vmatpush.bf16.msra.mxu0 %v4139
    %6453 = vmatpush.bf16.msra.mxu0 %v4137
    %6454 = vmatmul.bf16.gmra.mxu0 %v606
    %v6455 = vpop.f32.mrf.mxu0
    %v6456 = vadd.f32 %v6443, %v6455
    %v6457 = vpop.f32.mrf.mxu0
    %6458 = vdwg.mxu0
    %6459 = vmatpush.bf16.msra.mxu0 %v4167
    %6460 = vmatpush.bf16.msra.mxu0 %v4165
    %6461 = vmatpush.bf16.msra.mxu0 %v4163
    %6462 = vmatpush.bf16.msra.mxu0 %v4161
    %6463 = vmatpush.bf16.msra.mxu0 %v4159
    %6464 = vmatpush.bf16.msra.mxu0 %v4157
    %6465 = vmatpush.bf16.msra.mxu0 %v4155
    %6466 = vmatpush.bf16.msra.mxu0 %v4153
    %6467 = vmatmul.bf16.gmra.mxu0 %v607
    %v6468 = vpop.f32.mrf.mxu0
    %v6469 = vadd.f32 %v6456, %v6468
    %v6470 = vpop.f32.mrf.mxu0
    %6471 = vdwg.mxu0
    %6472 = vmatpush.bf16.msra.mxu0 %v4183
    %6473 = vmatpush.bf16.msra.mxu0 %v4181
    %6474 = vmatpush.bf16.msra.mxu0 %v4179
    %6475 = vmatpush.bf16.msra.mxu0 %v4177
    %6476 = vmatpush.bf16.msra.mxu0 %v4175
    %6477 = vmatpush.bf16.msra.mxu0 %v4173
    %6478 = vmatpush.bf16.msra.mxu0 %v4171
    %6479 = vmatpush.bf16.msra.mxu0 %v4169
    %6480 = vmatmul.bf16.gmra.mxu0 %v608
    %v6481 = vpop.f32.mrf.mxu0
    %v6482 = vadd.f32 %v6469, %v6481
    %v6483 = vpop.f32.mrf.mxu0
    %6484 = vdwg.mxu0
    %6485 = vmatpush.bf16.msra.mxu0 %v4199
    %6486 = vmatpush.bf16.msra.mxu0 %v4197
    %6487 = vmatpush.bf16.msra.mxu0 %v4195
    %6488 = vmatpush.bf16.msra.mxu0 %v4193
    %6489 = vmatpush.bf16.msra.mxu0 %v4191
    %6490 = vmatpush.bf16.msra.mxu0 %v4189
    %6491 = vmatpush.bf16.msra.mxu0 %v4187
    %6492 = vmatpush.bf16.msra.mxu0 %v4185
    %6493 = vmatmul.bf16.gmra.mxu0 %v609
    %v6494 = vpop.f32.mrf.mxu0
    %v6495 = vadd.f32 %v6482, %v6494
    %v6496 = vpop.f32.mrf.mxu0
    %6497 = vdwg.mxu0
    %6498 = vmatpush.bf16.msra.mxu0 %v4215
    %6499 = vmatpush.bf16.msra.mxu0 %v4213
    %6500 = vmatpush.bf16.msra.mxu0 %v4211
    %6501 = vmatpush.bf16.msra.mxu0 %v4209
    %6502 = vmatpush.bf16.msra.mxu0 %v4207
    %6503 = vmatpush.bf16.msra.mxu0 %v4205
    %6504 = vmatpush.bf16.msra.mxu0 %v4203
    %6505 = vmatpush.bf16.msra.mxu0 %v4201
    %6506 = vmatmul.bf16.gmra.mxu0 %v610
    %v6507 = vpop.f32.mrf.mxu0
    %v6508 = vadd.f32 %v6495, %v6507
    %v6509 = vpop.f32.mrf.mxu0
    %6510 = vdwg.mxu0
    %6511 = vmatpush.bf16.msra.mxu0 %v4231
    %6512 = vmatpush.bf16.msra.mxu0 %v4229
    %6513 = vmatpush.bf16.msra.mxu0 %v4227
    %6514 = vmatpush.bf16.msra.mxu0 %v4225
    %6515 = vmatpush.bf16.msra.mxu0 %v4223
    %6516 = vmatpush.bf16.msra.mxu0 %v4221
    %6517 = vmatpush.bf16.msra.mxu0 %v4219
    %6518 = vmatpush.bf16.msra.mxu0 %v4217
    %6519 = vmatmul.bf16.gmra.mxu0 %v611
    %v6520 = vpop.f32.mrf.mxu0
    %v6521 = vadd.f32 %v6508, %v6520
    %v6522 = vpop.f32.mrf.mxu0
    %6523 = vdwg.mxu0
    %6524 = vmatpush.bf16.msra.mxu0 %v4247
    %6525 = vmatpush.bf16.msra.mxu0 %v4245
    %6526 = vmatpush.bf16.msra.mxu0 %v4243
    %6527 = vmatpush.bf16.msra.mxu0 %v4241
    %6528 = vmatpush.bf16.msra.mxu0 %v4239
    %6529 = vmatpush.bf16.msra.mxu0 %v4237
    %6530 = vmatpush.bf16.msra.mxu0 %v4235
    %6531 = vmatpush.bf16.msra.mxu0 %v4233
    %6532 = vmatmul.bf16.gmra.mxu0 %v612
    %v6533 = vpop.f32.mrf.mxu0
    %v6534 = vadd.f32 %v6521, %v6533
    %v6535 = vpop.f32.mrf.mxu0
    %6536 = vdwg.mxu0
    %6537 = vmatpush.bf16.msra.mxu0 %v4263
    %6538 = vmatpush.bf16.msra.mxu0 %v4261
    %6539 = vmatpush.bf16.msra.mxu0 %v4259
    %6540 = vmatpush.bf16.msra.mxu0 %v4257
    %6541 = vmatpush.bf16.msra.mxu0 %v4255
    %6542 = vmatpush.bf16.msra.mxu0 %v4253
    %6543 = vmatpush.bf16.msra.mxu0 %v4251
    %6544 = vmatpush.bf16.msra.mxu0 %v4249
    %6545 = vmatmul.bf16.gmra.mxu0 %v613
    %v6546 = vpop.f32.mrf.mxu0
    %v6547 = vadd.f32 %v6534, %v6546
    %v6548 = vpop.f32.mrf.mxu0
    %6549 = vdwg.mxu0
    %6550 = vmatpush.bf16.msra.mxu0 %v4279
    %6551 = vmatpush.bf16.msra.mxu0 %v4277
    %6552 = vmatpush.bf16.msra.mxu0 %v4275
    %6553 = vmatpush.bf16.msra.mxu0 %v4273
    %6554 = vmatpush.bf16.msra.mxu0 %v4271
    %6555 = vmatpush.bf16.msra.mxu0 %v4269
    %6556 = vmatpush.bf16.msra.mxu0 %v4267
    %6557 = vmatpush.bf16.msra.mxu0 %v4265
    %6558 = vmatmul.bf16.gmra.mxu0 %v614
    %v6559 = vpop.f32.mrf.mxu0
    %v6560 = vadd.f32 %v6547, %v6559
    %v6561 = vpop.f32.mrf.mxu0
    %6562 = vdwg.mxu0
    %6563 = vmatpush.bf16.msra.mxu0 %v4295
    %6564 = vmatpush.bf16.msra.mxu0 %v4293
    %6565 = vmatpush.bf16.msra.mxu0 %v4291
    %6566 = vmatpush.bf16.msra.mxu0 %v4289
    %6567 = vmatpush.bf16.msra.mxu0 %v4287
    %6568 = vmatpush.bf16.msra.mxu0 %v4285
    %6569 = vmatpush.bf16.msra.mxu0 %v4283
    %6570 = vmatpush.bf16.msra.mxu0 %v4281
    %6571 = vmatmul.bf16.gmra.mxu0 %v615
    %v6572 = vpop.f32.mrf.mxu0
    %v6573 = vadd.f32 %v6560, %v6572
    %v6574 = vpop.f32.mrf.mxu0
    %6575 = vdwg.mxu0
    %6576 = vmatpush.bf16.msra.mxu0 %v4311
    %6577 = vmatpush.bf16.msra.mxu0 %v4309
    %6578 = vmatpush.bf16.msra.mxu0 %v4307
    %6579 = vmatpush.bf16.msra.mxu0 %v4305
    %6580 = vmatpush.bf16.msra.mxu0 %v4303
    %6581 = vmatpush.bf16.msra.mxu0 %v4301
    %6582 = vmatpush.bf16.msra.mxu0 %v4299
    %6583 = vmatpush.bf16.msra.mxu0 %v4297
    %6584 = vmatmul.bf16.gmra.mxu0 %v616
    %v6585 = vpop.f32.mrf.mxu0
    %v6586 = vadd.f32 %v6573, %v6585
    %v6587 = vpop.f32.mrf.mxu0
    %6588 = vdwg.mxu0
    %6589 = vmatpush.bf16.msra.mxu0 %v4327
    %6590 = vmatpush.bf16.msra.mxu0 %v4325
    %6591 = vmatpush.bf16.msra.mxu0 %v4323
    %6592 = vmatpush.bf16.msra.mxu0 %v4321
    %6593 = vmatpush.bf16.msra.mxu0 %v4319
    %6594 = vmatpush.bf16.msra.mxu0 %v4317
    %6595 = vmatpush.bf16.msra.mxu0 %v4315
    %6596 = vmatpush.bf16.msra.mxu0 %v4313
    %6597 = vmatmul.bf16.gmra.mxu0 %v617
    %v6598 = vpop.f32.mrf.mxu0
    %v6599 = vadd.f32 %v6586, %v6598
    %v6600 = vpop.f32.mrf.mxu0
    %6601 = vdwg.mxu0
    %6602 = vmatpush.bf16.msra.mxu0 %v4343
    %6603 = vmatpush.bf16.msra.mxu0 %v4341
    %6604 = vmatpush.bf16.msra.mxu0 %v4339
    %6605 = vmatpush.bf16.msra.mxu0 %v4337
    %6606 = vmatpush.bf16.msra.mxu0 %v4335
    %6607 = vmatpush.bf16.msra.mxu0 %v4333
    %6608 = vmatpush.bf16.msra.mxu0 %v4331
    %6609 = vmatpush.bf16.msra.mxu0 %v4329
    %6610 = vmatmul.bf16.gmra.mxu0 %v618
    %v6611 = vpop.f32.mrf.mxu0
    %v6612 = vadd.f32 %v6599, %v6611
    %v6613 = vpop.f32.mrf.mxu0
    %6614 = vdwg.mxu0
    %6615 = vmatpush.bf16.msra.mxu0 %v4359
    %6616 = vmatpush.bf16.msra.mxu0 %v4357
    %6617 = vmatpush.bf16.msra.mxu0 %v4355
    %6618 = vmatpush.bf16.msra.mxu0 %v4353
    %6619 = vmatpush.bf16.msra.mxu0 %v4351
    %6620 = vmatpush.bf16.msra.mxu0 %v4349
    %6621 = vmatpush.bf16.msra.mxu0 %v4347
    %6622 = vmatpush.bf16.msra.mxu0 %v4345
    %6623 = vmatmul.bf16.gmra.mxu0 %v619
    %v6624 = vpop.f32.mrf.mxu0
    %v6625 = vadd.f32 %v6612, %v6624
    %v6626 = vpop.f32.mrf.mxu0
    %6627 = vdwg.mxu0
    %6628 = vmatpush.bf16.msra.mxu0 %v4375
    %6629 = vmatpush.bf16.msra.mxu0 %v4373
    %6630 = vmatpush.bf16.msra.mxu0 %v4371
    %6631 = vmatpush.bf16.msra.mxu0 %v4369
    %6632 = vmatpush.bf16.msra.mxu0 %v4367
    %6633 = vmatpush.bf16.msra.mxu0 %v4365
    %6634 = vmatpush.bf16.msra.mxu0 %v4363
    %6635 = vmatpush.bf16.msra.mxu0 %v4361
    %6636 = vmatmul.bf16.gmra.mxu0 %v620
    %v6637 = vpop.f32.mrf.mxu0
    %v6638 = vadd.f32 %v6625, %v6637
    %v6639 = vpop.f32.mrf.mxu0
    %6640 = vdwg.mxu0
    %6641 = vmatpush.bf16.msra.mxu0 %v4391
    %6642 = vmatpush.bf16.msra.mxu0 %v4389
    %6643 = vmatpush.bf16.msra.mxu0 %v4387
    %6644 = vmatpush.bf16.msra.mxu0 %v4385
    %6645 = vmatpush.bf16.msra.mxu0 %v4383
    %6646 = vmatpush.bf16.msra.mxu0 %v4381
    %6647 = vmatpush.bf16.msra.mxu0 %v4379
    %6648 = vmatpush.bf16.msra.mxu0 %v4377
    %6649 = vmatmul.bf16.gmra.mxu0 %v621
    %v6650 = vpop.f32.mrf.mxu0
    %v6651 = vadd.f32 %v6638, %v6650
    %v6652 = vpop.f32.mrf.mxu0
    %6653 = vdwg.mxu0
    %6654 = vmatpush.bf16.msra.mxu0 %v4407
    %6655 = vmatpush.bf16.msra.mxu0 %v4405
    %6656 = vmatpush.bf16.msra.mxu0 %v4403
    %6657 = vmatpush.bf16.msra.mxu0 %v4401
    %6658 = vmatpush.bf16.msra.mxu0 %v4399
    %6659 = vmatpush.bf16.msra.mxu0 %v4397
    %6660 = vmatpush.bf16.msra.mxu0 %v4395
    %6661 = vmatpush.bf16.msra.mxu0 %v4393
    %6662 = vmatmul.bf16.gmra.mxu0 %v622
    %v6663 = vpop.f32.mrf.mxu0
    %v6664 = vadd.f32 %v6651, %v6663
    %v6665 = vpop.f32.mrf.mxu0
    %6666 = vdwg.mxu0
    %6667 = vmatpush.bf16.msra.mxu0 %v4423
    %6668 = vmatpush.bf16.msra.mxu0 %v4421
    %6669 = vmatpush.bf16.msra.mxu0 %v4419
    %6670 = vmatpush.bf16.msra.mxu0 %v4417
    %6671 = vmatpush.bf16.msra.mxu0 %v4415
    %6672 = vmatpush.bf16.msra.mxu0 %v4413
    %6673 = vmatpush.bf16.msra.mxu0 %v4411
    %6674 = vmatpush.bf16.msra.mxu0 %v4409
    %6675 = vmatmul.bf16.gmra.mxu0 %v623
    %v6676 = vpop.f32.mrf.mxu0
    %v6677 = vadd.f32 %v6664, %v6676
    %v6678 = vpop.f32.mrf.mxu0
    %6679 = vdwg.mxu0
    %6680 = vmatpush.bf16.msra.mxu0 %v4439
    %6681 = vmatpush.bf16.msra.mxu0 %v4437
    %6682 = vmatpush.bf16.msra.mxu0 %v4435
    %6683 = vmatpush.bf16.msra.mxu0 %v4433
    %6684 = vmatpush.bf16.msra.mxu0 %v4431
    %6685 = vmatpush.bf16.msra.mxu0 %v4429
    %6686 = vmatpush.bf16.msra.mxu0 %v4427
    %6687 = vmatpush.bf16.msra.mxu0 %v4425
    %6688 = vmatmul.bf16.gmra.mxu0 %v624
    %v6689 = vpop.f32.mrf.mxu0
    %v6690 = vadd.f32 %v6677, %v6689
    %v6691 = vpop.f32.mrf.mxu0
    %6692 = vdwg.mxu0
    %6693 = vmatpush.bf16.msra.mxu0 %v4455
    %6694 = vmatpush.bf16.msra.mxu0 %v4453
    %6695 = vmatpush.bf16.msra.mxu0 %v4451
    %6696 = vmatpush.bf16.msra.mxu0 %v4449
    %6697 = vmatpush.bf16.msra.mxu0 %v4447
    %6698 = vmatpush.bf16.msra.mxu0 %v4445
    %6699 = vmatpush.bf16.msra.mxu0 %v4443
    %6700 = vmatpush.bf16.msra.mxu0 %v4441
    %6701 = vmatmul.bf16.gmra.mxu0 %v625
    %v6702 = vpop.f32.mrf.mxu0
    %v6703 = vadd.f32 %v6690, %v6702
    %v6704 = vpop.f32.mrf.mxu0
    %6705 = vdwg.mxu0
    %6706 = vmatpush.bf16.msra.mxu0 %v4471
    %6707 = vmatpush.bf16.msra.mxu0 %v4469
    %6708 = vmatpush.bf16.msra.mxu0 %v4467
    %6709 = vmatpush.bf16.msra.mxu0 %v4465
    %6710 = vmatpush.bf16.msra.mxu0 %v4463
    %6711 = vmatpush.bf16.msra.mxu0 %v4461
    %6712 = vmatpush.bf16.msra.mxu0 %v4459
    %6713 = vmatpush.bf16.msra.mxu0 %v4457
    %6714 = vmatmul.bf16.gmra.mxu0 %v626
    %v6715 = vpop.f32.mrf.mxu0
    %v6716 = vadd.f32 %v6703, %v6715
    %v6717 = vpop.f32.mrf.mxu0
    %6718 = vdwg.mxu0
    %6719 = vmatpush.bf16.msra.mxu0 %v4487
    %6720 = vmatpush.bf16.msra.mxu0 %v4485
    %6721 = vmatpush.bf16.msra.mxu0 %v4483
    %6722 = vmatpush.bf16.msra.mxu0 %v4481
    %6723 = vmatpush.bf16.msra.mxu0 %v4479
    %6724 = vmatpush.bf16.msra.mxu0 %v4477
    %6725 = vmatpush.bf16.msra.mxu0 %v4475
    %6726 = vmatpush.bf16.msra.mxu0 %v4473
    %6727 = vmatmul.bf16.gmra.mxu0 %v627
    %v6728 = vpop.f32.mrf.mxu0
    %v6729 = vadd.f32 %v6716, %v6728
    %v6730 = vpop.f32.mrf.mxu0
    %6731 = vdwg.mxu0
    %6732 = vmatpush.bf16.msra.mxu0 %v4503
    %6733 = vmatpush.bf16.msra.mxu0 %v4501
    %6734 = vmatpush.bf16.msra.mxu0 %v4499
    %6735 = vmatpush.bf16.msra.mxu0 %v4497
    %6736 = vmatpush.bf16.msra.mxu0 %v4495
    %6737 = vmatpush.bf16.msra.mxu0 %v4493
    %6738 = vmatpush.bf16.msra.mxu0 %v4491
    %6739 = vmatpush.bf16.msra.mxu0 %v4489
    %6740 = vmatmul.bf16.gmra.mxu0 %v628
    %v6741 = vpop.f32.mrf.mxu0
    %v6742 = vadd.f32 %v6729, %v6741
    %v6743 = vpop.f32.mrf.mxu0
    %6744 = vdwg.mxu0
    %6745 = vmatpush.bf16.msra.mxu0 %v4519
    %6746 = vmatpush.bf16.msra.mxu0 %v4517
    %6747 = vmatpush.bf16.msra.mxu0 %v4515
    %6748 = vmatpush.bf16.msra.mxu0 %v4513
    %6749 = vmatpush.bf16.msra.mxu0 %v4511
    %6750 = vmatpush.bf16.msra.mxu0 %v4509
    %6751 = vmatpush.bf16.msra.mxu0 %v4507
    %6752 = vmatpush.bf16.msra.mxu0 %v4505
    %6753 = vmatmul.bf16.gmra.mxu0 %v629
    %v6754 = vpop.f32.mrf.mxu0
    %v6755 = vadd.f32 %v6742, %v6754
    %v6756 = vpop.f32.mrf.mxu0
    %6757 = vdwg.mxu0
    %6758 = vmatpush.bf16.msra.mxu0 %v4535
    %6759 = vmatpush.bf16.msra.mxu0 %v4533
    %6760 = vmatpush.bf16.msra.mxu0 %v4531
    %6761 = vmatpush.bf16.msra.mxu0 %v4529
    %6762 = vmatpush.bf16.msra.mxu0 %v4527
    %6763 = vmatpush.bf16.msra.mxu0 %v4525
    %6764 = vmatpush.bf16.msra.mxu0 %v4523
    %6765 = vmatpush.bf16.msra.mxu0 %v4521
    %6766 = vmatmul.bf16.gmra.mxu0 %v630
    %v6767 = vpop.f32.mrf.mxu0
    %v6768 = vadd.f32 %v6755, %v6767
    %v6769 = vpop.f32.mrf.mxu0
    %6770 = vdwg.mxu0
    %6771 = vmatpush.bf16.msra.mxu0 %v4551
    %6772 = vmatpush.bf16.msra.mxu0 %v4549
    %6773 = vmatpush.bf16.msra.mxu0 %v4547
    %6774 = vmatpush.bf16.msra.mxu0 %v4545
    %6775 = vmatpush.bf16.msra.mxu0 %v4543
    %6776 = vmatpush.bf16.msra.mxu0 %v4541
    %6777 = vmatpush.bf16.msra.mxu0 %v4539
    %6778 = vmatpush.bf16.msra.mxu0 %v4537
    %6779 = vmatmul.bf16.gmra.mxu0 %v631
    %v6780 = vpop.f32.mrf.mxu0
    %v6781 = vadd.f32 %v6768, %v6780
    %v6782 = vpop.f32.mrf.mxu0
    %6783 = vdwg.mxu0
    %6784 = vmatpush.bf16.msra.mxu0 %v4567
    %6785 = vmatpush.bf16.msra.mxu0 %v4565
    %6786 = vmatpush.bf16.msra.mxu0 %v4563
    %6787 = vmatpush.bf16.msra.mxu0 %v4561
    %6788 = vmatpush.bf16.msra.mxu0 %v4559
    %6789 = vmatpush.bf16.msra.mxu0 %v4557
    %6790 = vmatpush.bf16.msra.mxu0 %v4555
    %6791 = vmatpush.bf16.msra.mxu0 %v4553
    %6792 = vmatmul.bf16.gmra.mxu0 %v632
    %v6793 = vpop.f32.mrf.mxu0
    %v6794 = vadd.f32 %v6781, %v6793
    %v6795 = vpop.f32.mrf.mxu0
    %6796 = vdwg.mxu0
    %6797 = vmatpush.bf16.msra.mxu0 %v4583
    %6798 = vmatpush.bf16.msra.mxu0 %v4581
    %6799 = vmatpush.bf16.msra.mxu0 %v4579
    %6800 = vmatpush.bf16.msra.mxu0 %v4577
    %6801 = vmatpush.bf16.msra.mxu0 %v4575
    %6802 = vmatpush.bf16.msra.mxu0 %v4573
    %6803 = vmatpush.bf16.msra.mxu0 %v4571
    %6804 = vmatpush.bf16.msra.mxu0 %v4569
    %6805 = vmatmul.bf16.gmra.mxu0 %v633
    %v6806 = vpop.f32.mrf.mxu0
    %v6807 = vadd.f32 %v6794, %v6806
    %v6808 = vpop.f32.mrf.mxu0
    %6809 = vdwg.mxu0
    %6810 = vmatpush.bf16.msra.mxu0 %v4599
    %6811 = vmatpush.bf16.msra.mxu0 %v4597
    %6812 = vmatpush.bf16.msra.mxu0 %v4595
    %6813 = vmatpush.bf16.msra.mxu0 %v4593
    %6814 = vmatpush.bf16.msra.mxu0 %v4591
    %6815 = vmatpush.bf16.msra.mxu0 %v4589
    %6816 = vmatpush.bf16.msra.mxu0 %v4587
    %6817 = vmatpush.bf16.msra.mxu0 %v4585
    %6818 = vmatmul.bf16.gmra.mxu0 %v634
    %v6819 = vpop.f32.mrf.mxu0
    %v6820 = vadd.f32 %v6807, %v6819
    %v6821 = vpop.f32.mrf.mxu0
    %6822 = vdwg.mxu0
    %6823 = vmatpush.bf16.msra.mxu0 %v4615
    %6824 = vmatpush.bf16.msra.mxu0 %v4613
    %6825 = vmatpush.bf16.msra.mxu0 %v4611
    %6826 = vmatpush.bf16.msra.mxu0 %v4609
    %6827 = vmatpush.bf16.msra.mxu0 %v4607
    %6828 = vmatpush.bf16.msra.mxu0 %v4605
    %6829 = vmatpush.bf16.msra.mxu0 %v4603
    %6830 = vmatpush.bf16.msra.mxu0 %v4601
    %6831 = vmatmul.bf16.gmra.mxu0 %v635
    %v6832 = vpop.f32.mrf.mxu0
    %v6833 = vadd.f32 %v6820, %v6832
    %v6834 = vpop.f32.mrf.mxu0
    %6835 = vdwg.mxu0
    %6836 = vmatpush.bf16.msra.mxu0 %v4631
    %6837 = vmatpush.bf16.msra.mxu0 %v4629
    %6838 = vmatpush.bf16.msra.mxu0 %v4627
    %6839 = vmatpush.bf16.msra.mxu0 %v4625
    %6840 = vmatpush.bf16.msra.mxu0 %v4623
    %6841 = vmatpush.bf16.msra.mxu0 %v4621
    %6842 = vmatpush.bf16.msra.mxu0 %v4619
    %6843 = vmatpush.bf16.msra.mxu0 %v4617
    %6844 = vmatmul.bf16.gmra.mxu0 %v636
    %v6845 = vpop.f32.mrf.mxu0
    %v6846 = vadd.f32 %v6833, %v6845
    %v6847 = vpop.f32.mrf.mxu0
    %6848 = vdwg.mxu0
    %6849 = vmatpush.bf16.msra.mxu0 %v4647
    %6850 = vmatpush.bf16.msra.mxu0 %v4645
    %6851 = vmatpush.bf16.msra.mxu0 %v4643
    %6852 = vmatpush.bf16.msra.mxu0 %v4641
    %6853 = vmatpush.bf16.msra.mxu0 %v4639
    %6854 = vmatpush.bf16.msra.mxu0 %v4637
    %6855 = vmatpush.bf16.msra.mxu0 %v4635
    %6856 = vmatpush.bf16.msra.mxu0 %v4633
    %6857 = vmatmul.bf16.gmra.mxu0 %v637
    %v6858 = vpop.f32.mrf.mxu0
    %v6859 = vadd.f32 %v6846, %v6858
    %v6860 = vpop.f32.mrf.mxu0
    %6861 = vdwg.mxu0
    %6862 = vmatpush.bf16.msra.mxu0 %v4663
    %6863 = vmatpush.bf16.msra.mxu0 %v4661
    %6864 = vmatpush.bf16.msra.mxu0 %v4659
    %6865 = vmatpush.bf16.msra.mxu0 %v4657
    %6866 = vmatpush.bf16.msra.mxu0 %v4655
    %6867 = vmatpush.bf16.msra.mxu0 %v4653
    %6868 = vmatpush.bf16.msra.mxu0 %v4651
    %6869 = vmatpush.bf16.msra.mxu0 %v4649
    %6870 = vmatmul.bf16.gmra.mxu0 %v638
    %v6871 = vpop.f32.mrf.mxu0
    %v6872 = vadd.f32 %v6859, %v6871
    %v6873 = vpop.f32.mrf.mxu0
    %6874 = vdwg.mxu0
    %6875 = vmatpush.bf16.msra.mxu0 %v4679
    %6876 = vmatpush.bf16.msra.mxu0 %v4677
    %6877 = vmatpush.bf16.msra.mxu0 %v4675
    %6878 = vmatpush.bf16.msra.mxu0 %v4673
    %6879 = vmatpush.bf16.msra.mxu0 %v4671
    %6880 = vmatpush.bf16.msra.mxu0 %v4669
    %6881 = vmatpush.bf16.msra.mxu0 %v4667
    %6882 = vmatpush.bf16.msra.mxu0 %v4665
    %6883 = vmatmul.bf16.gmra.mxu0 %v639
    %v6884 = vpop.f32.mrf.mxu0
    %v6885 = vadd.f32 %v6872, %v6884
    %v6886 = vpop.f32.mrf.mxu0
    %6887 = vdwg.mxu0
    %6888 = vmatpush.bf16.msra.mxu0 %v4695
    %6889 = vmatpush.bf16.msra.mxu0 %v4693
    %6890 = vmatpush.bf16.msra.mxu0 %v4691
    %6891 = vmatpush.bf16.msra.mxu0 %v4689
    %6892 = vmatpush.bf16.msra.mxu0 %v4687
    %6893 = vmatpush.bf16.msra.mxu0 %v4685
    %6894 = vmatpush.bf16.msra.mxu0 %v4683
    %6895 = vmatpush.bf16.msra.mxu0 %v4681
    %6896 = vmatmul.bf16.gmra.mxu0 %v640
    %v6897 = vpop.f32.mrf.mxu0
    %v6898 = vadd.f32 %v6885, %v6897
    %v6899 = vpop.f32.mrf.mxu0
    %6900 = vdwg.mxu0
    %6901 = vmatpush.bf16.msra.mxu0 %v4711
    %6902 = vmatpush.bf16.msra.mxu0 %v4709
    %6903 = vmatpush.bf16.msra.mxu0 %v4707
    %6904 = vmatpush.bf16.msra.mxu0 %v4705
    %6905 = vmatpush.bf16.msra.mxu0 %v4703
    %6906 = vmatpush.bf16.msra.mxu0 %v4701
    %6907 = vmatpush.bf16.msra.mxu0 %v4699
    %6908 = vmatpush.bf16.msra.mxu0 %v4697
    %6909 = vmatmul.bf16.gmra.mxu0 %v641
    %v6910 = vpop.f32.mrf.mxu0
    %v6911 = vadd.f32 %v6898, %v6910
    %v6912 = vpop.f32.mrf.mxu0
    %6913 = vdwg.mxu0
    %6914 = vmatpush.bf16.msra.mxu0 %v4727
    %6915 = vmatpush.bf16.msra.mxu0 %v4725
    %6916 = vmatpush.bf16.msra.mxu0 %v4723
    %6917 = vmatpush.bf16.msra.mxu0 %v4721
    %6918 = vmatpush.bf16.msra.mxu0 %v4719
    %6919 = vmatpush.bf16.msra.mxu0 %v4717
    %6920 = vmatpush.bf16.msra.mxu0 %v4715
    %6921 = vmatpush.bf16.msra.mxu0 %v4713
    %6922 = vmatmul.bf16.gmra.mxu0 %v642
    %v6923 = vpop.f32.mrf.mxu0
    %v6924 = vadd.f32 %v6911, %v6923
    %v6925 = vpop.f32.mrf.mxu0
    %6926 = vdwg.mxu0
    %6927 = vmatpush.bf16.msra.mxu0 %v4743
    %6928 = vmatpush.bf16.msra.mxu0 %v4741
    %6929 = vmatpush.bf16.msra.mxu0 %v4739
    %6930 = vmatpush.bf16.msra.mxu0 %v4737
    %6931 = vmatpush.bf16.msra.mxu0 %v4735
    %6932 = vmatpush.bf16.msra.mxu0 %v4733
    %6933 = vmatpush.bf16.msra.mxu0 %v4731
    %6934 = vmatpush.bf16.msra.mxu0 %v4729
    %6935 = vmatmul.bf16.gmra.mxu0 %v643
    %v6936 = vpop.f32.mrf.mxu0
    %v6937 = vadd.f32 %v6924, %v6936
    %v6938 = vpop.f32.mrf.mxu0
    %6939 = vdwg.mxu0
    %6940 = vmatpush.bf16.msra.mxu0 %v4759
    %6941 = vmatpush.bf16.msra.mxu0 %v4757
    %6942 = vmatpush.bf16.msra.mxu0 %v4755
    %6943 = vmatpush.bf16.msra.mxu0 %v4753
    %6944 = vmatpush.bf16.msra.mxu0 %v4751
    %6945 = vmatpush.bf16.msra.mxu0 %v4749
    %6946 = vmatpush.bf16.msra.mxu0 %v4747
    %6947 = vmatpush.bf16.msra.mxu0 %v4745
    %6948 = vmatmul.bf16.gmra.mxu0 %v644
    %v6949 = vpop.f32.mrf.mxu0
    %v6950 = vadd.f32 %v6937, %v6949
    %v6951 = vpop.f32.mrf.mxu0
    %6952 = vdwg.mxu0
    %6953 = vmatpush.bf16.msra.mxu0 %v4775
    %6954 = vmatpush.bf16.msra.mxu0 %v4773
    %6955 = vmatpush.bf16.msra.mxu0 %v4771
    %6956 = vmatpush.bf16.msra.mxu0 %v4769
    %6957 = vmatpush.bf16.msra.mxu0 %v4767
    %6958 = vmatpush.bf16.msra.mxu0 %v4765
    %6959 = vmatpush.bf16.msra.mxu0 %v4763
    %6960 = vmatpush.bf16.msra.mxu0 %v4761
    %6961 = vmatmul.bf16.gmra.mxu0 %v645
    %v6962 = vpop.f32.mrf.mxu0
    %v6963 = vadd.f32 %v6950, %v6962
    %v6964 = vpop.f32.mrf.mxu0
    %6965 = vdwg.mxu0
    %6966 = vmatpush.bf16.msra.mxu0 %v4791
    %6967 = vmatpush.bf16.msra.mxu0 %v4789
    %6968 = vmatpush.bf16.msra.mxu0 %v4787
    %6969 = vmatpush.bf16.msra.mxu0 %v4785
    %6970 = vmatpush.bf16.msra.mxu0 %v4783
    %6971 = vmatpush.bf16.msra.mxu0 %v4781
    %6972 = vmatpush.bf16.msra.mxu0 %v4779
    %6973 = vmatpush.bf16.msra.mxu0 %v4777
    %6974 = vmatmul.bf16.gmra.mxu0 %v646
    %v6975 = vpop.f32.mrf.mxu0
    %v6976 = vadd.f32 %v6963, %v6975
    %v6977 = vpop.f32.mrf.mxu0
    %6978 = vdwg.mxu0
    %6979 = vmatpush.bf16.msra.mxu0 %v4807
    %6980 = vmatpush.bf16.msra.mxu0 %v4805
    %6981 = vmatpush.bf16.msra.mxu0 %v4803
    %6982 = vmatpush.bf16.msra.mxu0 %v4801
    %6983 = vmatpush.bf16.msra.mxu0 %v4799
    %6984 = vmatpush.bf16.msra.mxu0 %v4797
    %6985 = vmatpush.bf16.msra.mxu0 %v4795
    %6986 = vmatpush.bf16.msra.mxu0 %v4793
    %6987 = vmatmul.bf16.gmra.mxu0 %v647
    %v6988 = vpop.f32.mrf.mxu0
    %v6989 = vadd.f32 %v6976, %v6988
    %v6990 = vpop.f32.mrf.mxu0
    %6991 = vdwg.mxu0
    %v6992 = vld [vmem:[#allocation8] sm:$0xff]
    %v6993 = vld [vmem:[#allocation8 + $0x8] sm:$0xff]
    %v6994 = vld [vmem:[#allocation8 + $0x10] sm:$0xff]
    %v6995 = vld [vmem:[#allocation8 + $0x18] sm:$0xff]
    %v6996 = vld [vmem:[#allocation8 + $0x20] sm:$0xff]
    %v6997 = vld [vmem:[#allocation8 + $0x28] sm:$0xff]
    %v6998 = vld [vmem:[#allocation8 + $0x30] sm:$0xff]
    %v6999 = vld [vmem:[#allocation8 + $0x38] sm:$0xff]
    %v7000 = vld [vmem:[#allocation8 + $0x40] sm:$0xff]
    %v7001 = vld [vmem:[#allocation8 + $0x48] sm:$0xff]
    %v7002 = vld [vmem:[#allocation8 + $0x50] sm:$0xff]
    %v7003 = vld [vmem:[#allocation8 + $0x58] sm:$0xff]
    %v7004 = vld [vmem:[#allocation8 + $0x60] sm:$0xff]
    %v7005 = vld [vmem:[#allocation8 + $0x68] sm:$0xff]
    %v7006 = vld [vmem:[#allocation8 + $0x70] sm:$0xff]
    %v7007 = vld [vmem:[#allocation8 + $0x78] sm:$0xff]
    %v7008 = vld [vmem:[#allocation8 + $0x80] sm:$0xff]
    %v7009 = vld [vmem:[#allocation8 + $0x88] sm:$0xff]
    %v7010 = vld [vmem:[#allocation8 + $0x90] sm:$0xff]
    %v7011 = vld [vmem:[#allocation8 + $0x98] sm:$0xff]
    %v7012 = vld [vmem:[#allocation8 + $0xa0] sm:$0xff]
    %v7013 = vld [vmem:[#allocation8 + $0xa8] sm:$0xff]
    %v7014 = vld [vmem:[#allocation8 + $0xb0] sm:$0xff]
    %v7015 = vld [vmem:[#allocation8 + $0xb8] sm:$0xff]
    %v7016 = vld [vmem:[#allocation8 + $0xc0] sm:$0xff]
    %v7017 = vld [vmem:[#allocation8 + $0xc8] sm:$0xff]
    %v7018 = vld [vmem:[#allocation8 + $0xd0] sm:$0xff]
    %v7019 = vld [vmem:[#allocation8 + $0xd8] sm:$0xff]
    %v7020 = vld [vmem:[#allocation8 + $0xe0] sm:$0xff]
    %v7021 = vld [vmem:[#allocation8 + $0xe8] sm:$0xff]
    %v7022 = vld [vmem:[#allocation8 + $0xf0] sm:$0xff]
    %v7023 = vld [vmem:[#allocation8 + $0xf8] sm:$0xff]
    %v7024 = vld [vmem:[#allocation10] sm:$0x1]
    %v7026 = vperm.slane %v7024, 0
    %7028 = vmatpush.msra.mxu0 %v7007
    %7029 = vmatpush.msra.mxu0 %v7006
    %7030 = vmatpush.msra.mxu0 %v7005
    %7031 = vmatpush.msra.mxu0 %v7004
    %7032 = vmatpush.msra.mxu0 %v7003
    %7033 = vmatpush.msra.mxu0 %v7002
    %7034 = vmatpush.msra.mxu0 %v7001
    %7035 = vmatpush.msra.mxu0 %v7000
    %7036 = vmatpush.msra.mxu0 %v6999
    %7037 = vmatpush.msra.mxu0 %v6998
    %7038 = vmatpush.msra.mxu0 %v6997
    %7039 = vmatpush.msra.mxu0 %v6996
    %7040 = vmatpush.msra.mxu0 %v6995
    %7041 = vmatpush.msra.mxu0 %v6994
    %7042 = vmatpush.msra.mxu0 %v6993
    %7043 = vmatpush.msra.mxu0 %v6992
    %7044 = vmatmul.f32.gmra.mxu0 %v6313
    %v7045 = vpop.f32.mrf.mxu0
    %v7046 = vadd.f32 %v7026, %v7045
    %7047 = vdwg.mxu0
    %7048 = vmatpush.msra.mxu0 %v7023
    %7049 = vmatpush.msra.mxu0 %v7022
    %7050 = vmatpush.msra.mxu0 %v7021
    %7051 = vmatpush.msra.mxu0 %v7020
    %7052 = vmatpush.msra.mxu0 %v7019
    %7053 = vmatpush.msra.mxu0 %v7018
    %7054 = vmatpush.msra.mxu0 %v7017
    %7055 = vmatpush.msra.mxu0 %v7016
    %7056 = vmatpush.msra.mxu0 %v7015
    %7057 = vmatpush.msra.mxu0 %v7014
    %7058 = vmatpush.msra.mxu0 %v7013
    %7059 = vmatpush.msra.mxu0 %v7012
    %7060 = vmatpush.msra.mxu0 %v7011
    %7061 = vmatpush.msra.mxu0 %v7010
    %7062 = vmatpush.msra.mxu0 %v7009
    %7063 = vmatpush.msra.mxu0 %v7008
    %7064 = vmatmul.f32.gmra.mxu0 %v6989
    %v7065 = vpop.f32.mrf.mxu0
    %v7066 = vadd.f32 %v7046, %v7065
    %7067 = vdwg.mxu0
    %7068 = vst [vmem:[#allocation11] sm:$0x3] %v7066
    // Predicated region
    $region46: #{actor_forward.1} parent=1 // pred_check
      _
    $region47: #{actor_forward.1} parent=1 // pred_check_branch
      %7070 = sbr.rel (0) target = $region49
    $region48: #{actor_forward.1} parent=1 // pred_region
      %7072 = vsyncadd [#allocation4], 0
      %s7074 = sshll.u32 [#allocation11], 4
      %s7075 = int_to_ptr.vmem [resolvable:$true] %s7074
      %s7076 = sshll.u32 %s6, 4
      %s7077 = int_to_ptr.hbm [resolvable:$true] %s7076
      %7079 = dma.vmem_to_hbm [thread:$0]  %s7075, 32, %s7077, [#allocation4]
    $region49: #{actor_forward.1} parent=1 // pred_fallthru
      _
    // Predicated region
    $region50: #{actor_forward.1} parent=1 // pred_check
      _
    $region51: #{actor_forward.1} parent=1 // pred_check_branch
      %7081 = sbr.rel (0) target = $region53
    $region52: #{actor_forward.1} parent=1 // pred_region
      %7083 = dma.done [#allocation4], 32
    $region53: #{actor_forward.1} parent=1 // pred_fallthru
      _
    %7084 = vsyncpa [#allocation3], 1
    %7085 = vsyncpa [#allocation6], 1
    %7086 = vsyncpa [#allocation9], 1
    %7087 = vsyncpa [#allocation4], 1

</llo_original>
